<compile_context>
chip_gen: v6e
topology: v6e:2x2x1
jax: 0.10.0
libtpu: 0.0.40
codegen_flags: <defaults>
</compile_context>

<pallas_src>
import functools

import jax
import jax.numpy as jnp
from jax import lax
from jax.experimental import pallas as pl
from jax.experimental.pallas import tpu as pltpu


def _basic_block_kernel(xpad_ref, w1_ref, s1_ref, b1_ref, w2_ref, s2_ref, b2_ref,
                        out_ref, h1pad_ref, *, H, W, Cin, Cout):
    """One image per grid step.

    xpad_ref : (1, H+2, W+2, Cin)   zero-padded input image
    w1_ref   : (9, Cin, Cout)       conv1 weights, taps flattened
    s1/b1    : (1, Cout)            folded BN1 scale / bias
    w2_ref   : (9, Cout, Cout)      conv2 weights
    s2/b2    : (1, Cout)            folded BN2 scale / bias
    out_ref  : (1, H, W, Cout)
    h1pad_ref: (H+2, W+2, Cout)     VMEM scratch for the padded intermediate
    """
    xp = xpad_ref[0]                                   # (H+2, W+2, Cin), f32

    # ---- conv1 (3x3, pad=1, stride=1) as 9 tap matmuls on the MXU ----
    acc1 = jnp.zeros((H * W, Cout), jnp.float32)
    for k in range(9):
        dy, dx = divmod(k, 3)
        patch = xp[dy:dy + H, dx:dx + W, :].reshape(H * W, Cin)
        acc1 = acc1 + jnp.dot(patch, w1_ref[k],
                              preferred_element_type=jnp.float32)

    # ---- bn1 (folded) + relu ----
    h1 = jnp.maximum(acc1 * s1_ref[...] + b1_ref[...], 0.0)   # (H*W, Cout)

    # Stage the intermediate in a zero-padded VMEM scratch so conv2 can read
    # its 9 shifted windows without round-tripping to HBM.
    h1pad_ref[...] = jnp.zeros_like(h1pad_ref)
    h1pad_ref[1:H + 1, 1:W + 1, :] = h1.reshape(H, W, Cout)
    h1p = h1pad_ref[...]                                       # (H+2, W+2, Cout)

    # ---- conv2 (3x3, pad=1, stride=1) ----
    acc2 = jnp.zeros((H * W, Cout), jnp.float32)
    for k in range(9):
        dy, dx = divmod(k, 3)
        patch = h1p[dy:dy + H, dx:dx + W, :].reshape(H * W, Cout)
        acc2 = acc2 + jnp.dot(patch, w2_ref[k],
                              preferred_element_type=jnp.float32)

    # ---- bn2 (folded) + residual add + relu ----
    out = acc2 * s2_ref[...] + b2_ref[...]
    identity = xp[1:H + 1, 1:W + 1, :].reshape(H * W, Cin)     # Cin == Cout
    out = jnp.maximum(out + identity, 0.0)
    out_ref[0] = out.reshape(H, W, Cout).astype(out_ref.dtype)


def basic_block_forward(x, params, *, eps=1e-5):
    """Pallas implementation of BasicBlock.forward (stride=1, downsample=None).

    x      : (N, H, W, C) float32, NHWC
    params : dict with conv1_w/conv2_w (3,3,Cin,Cout HWIO) and BN tensors
    returns: (N, H, W, C) float32
    """
    N, H, W, Cin = x.shape
    w1 = params["conv1_w"]
    w2 = params["conv2_w"]
    Cout = w1.shape[-1]
    assert w1.shape == (3, 3, Cin, Cout)
    assert w2.shape == (3, 3, Cout, Cout)
    assert Cin == Cout, "downsample=None requires inplanes == planes"
    assert W % 8 == 0, "keep W a multiple of 8 (sublane) for clean reshapes"

    # Fold eval-mode BatchNorm into per-channel scale/bias (done once, host side,
    # instead of re-deriving grid-invariant values inside every kernel step).
    s1 = params["bn1_gamma"] * lax.rsqrt(params["bn1_var"] + eps)
    b1 = params["bn1_beta"] - params["bn1_mean"] * s1
    s2 = params["bn2_gamma"] * lax.rsqrt(params["bn2_var"] + eps)
    b2 = params["bn2_beta"] - params["bn2_mean"] * s2

    xpad = jnp.pad(x, ((0, 0), (1, 1), (1, 1), (0, 0)))
    w1r = w1.reshape(9, Cin, Cout)
    w2r = w2.reshape(9, Cout, Cout)
    s1 = s1.reshape(1, Cout)
    b1 = b1.reshape(1, Cout)
    s2 = s2.reshape(1, Cout)
    b2 = b2.reshape(1, Cout)

    kernel = functools.partial(_basic_block_kernel, H=H, W=W, Cin=Cin, Cout=Cout)

    return pl.pallas_call(
        kernel,
        out_shape=jax.ShapeDtypeStruct((N, H, W, Cout), x.dtype),
        grid_spec=pltpu.PrefetchScalarGridSpec(
            num_scalar_prefetch=0,
            grid=(N,),  # one image per step; any N works (no divisibility assert)
            in_specs=[
                pl.BlockSpec((1, H + 2, W + 2, Cin), lambda n: (n, 0, 0, 0)),
                # weights / BN params are grid-invariant -> DMA'd once, kept resident
                pl.BlockSpec((9, Cin, Cout), lambda n: (0, 0, 0)),
                pl.BlockSpec((1, Cout), lambda n: (0, 0)),
                pl.BlockSpec((1, Cout), lambda n: (0, 0)),
                pl.BlockSpec((9, Cout, Cout), lambda n: (0, 0, 0)),
                pl.BlockSpec((1, Cout), lambda n: (0, 0)),
                pl.BlockSpec((1, Cout), lambda n: (0, 0)),
            ],
            out_specs=pl.BlockSpec((1, H, W, Cout), lambda n: (n, 0, 0, 0)),
            scratch_shapes=[pltpu.VMEM((H + 2, W + 2, Cout), jnp.float32)],
        ),
        compiler_params=pltpu.CompilerParams(
            # batch axis is independent -> shardable across TensorCores (v7x megacore)
            dimension_semantics=("parallel",),
        ),
    )(xpad, w1r, s1, b1, w2r, s2, b2)


def _bn_ref(y, gamma, beta, mean, var, eps):
    return (y - mean) * gamma * lax.rsqrt(var + eps) + beta


def basic_block_reference(x, p, *, eps=1e-5):
    """Pure-JAX reference of BasicBlock.forward (stride=1, downsample=None)."""
    dn = ("NHWC", "HWIO", "NHWC")
    out = lax.conv_general_dilated(x, p["conv1_w"], (1, 1), ((1, 1), (1, 1)),
                                   dimension_numbers=dn,
                                   precision=lax.Precision.HIGHEST)
    out = jnp.maximum(_bn_ref(out, p["bn1_gamma"], p["bn1_beta"],
                              p["bn1_mean"], p["bn1_var"], eps), 0.0)
    out = lax.conv_general_dilated(out, p["conv2_w"], (1, 1), ((1, 1), (1, 1)),
                                   dimension_numbers=dn,
                                   precision=lax.Precision.HIGHEST)
    out = _bn_ref(out, p["bn2_gamma"], p["bn2_beta"],
                  p["bn2_mean"], p["bn2_var"], eps)
    return jnp.maximum(out + x, 0.0)


if __name__ == "__main__":
    # Small BasicBlock config: inplanes = planes = 128 (channels sit exactly on
    # the 128-lane axis -> lane-dense loads/stores), 8x8 spatial, batch 2
    # (grid of 2 parallel steps -> both v7x TensorCores busy).
    batch, H, W, C = 2, 8, 8, 128

    key = jax.random.PRNGKey(0)
    (kx, kw1, kw2,
     kg1, kb1, km1, kv1,
     kg2, kb2, km2, kv2) = jax.random.split(key, 11)

    params = {
        "conv1_w": jax.random.normal(kw1, (3, 3, C, C), jnp.float32) * 0.05,
        "conv2_w": jax.random.normal(kw2, (3, 3, C, C), jnp.float32) * 0.05,
        "bn1_gamma": 1.0 + 0.1 * jax.random.normal(kg1, (C,), jnp.float32),
        "bn1_beta": 0.1 * jax.random.normal(kb1, (C,), jnp.float32),
        "bn1_mean": 0.1 * jax.random.normal(km1, (C,), jnp.float32),
        "bn1_var": jax.random.uniform(kv1, (C,), jnp.float32, 0.5, 1.5),
        "bn2_gamma": 1.0 + 0.1 * jax.random.normal(kg2, (C,), jnp.float32),
        "bn2_beta": 0.1 * jax.random.normal(kb2, (C,), jnp.float32),
        "bn2_mean": 0.1 * jax.random.normal(km2, (C,), jnp.float32),
        "bn2_var": jax.random.uniform(kv2, (C,), jnp.float32, 0.5, 1.5),
    }
    x = jax.random.normal(kx, (batch, H, W, C), jnp.float32)

    out = basic_block_forward(x, params)
    out = jax.block_until_ready(out)

    ref = basic_block_reference(x, params)
    assert out.shape == (batch, H, W, C)
    assert jnp.allclose(out, ref, atol=1e-2, rtol=1e-2), (
        "mismatch vs reference: max abs diff = "
        f"{float(jnp.max(jnp.abs(out - ref)))}")

    print("KERNEL_OK")
</pallas_src>

<mosaic_0001>
module attributes {stable_mosaic.version = 11 : i64} {
  func.func @_basic_block_kernel(%arg0: i32, %arg1: memref<1x10x10x128xf32, #tpu.memory_space<vmem>>, %arg2: memref<9x128x128xf32, #tpu.memory_space<vmem>>, %arg3: memref<1x128xf32, #tpu.memory_space<vmem>>, %arg4: memref<1x128xf32, #tpu.memory_space<vmem>>, %arg5: memref<9x128x128xf32, #tpu.memory_space<vmem>>, %arg6: memref<1x128xf32, #tpu.memory_space<vmem>>, %arg7: memref<1x128xf32, #tpu.memory_space<vmem>>, %arg8: memref<1x8x8x128xf32, #tpu.memory_space<vmem>>, %arg9: memref<10x10x128xf32, #tpu.memory_space<vmem>>) attributes {dimension_semantics = [#tpu.dimension_semantics<parallel>], iteration_bounds = array<i64: 2>, scalar_prefetch = 0 : i64, scratch_operands = 1 : i64, tpu.core_type = #tpu.core_type<tc>, window_params = [{transform_indices = @transform_0, window_bounds = array<i64: 1, 10, 10, 128>}, {pipeline_mode = #tpu.pipeline_mode<synchronous>, transform_indices = @transform_1, window_bounds = array<i64: 9, 128, 128>}, {pipeline_mode = #tpu.pipeline_mode<synchronous>, transform_indices = @transform_2, window_bounds = array<i64: 1, 128>}, {pipeline_mode = #tpu.pipeline_mode<synchronous>, transform_indices = @transform_3, window_bounds = array<i64: 1, 128>}, {pipeline_mode = #tpu.pipeline_mode<synchronous>, transform_indices = @transform_4, window_bounds = array<i64: 9, 128, 128>}, {pipeline_mode = #tpu.pipeline_mode<synchronous>, transform_indices = @transform_5, window_bounds = array<i64: 1, 128>}, {pipeline_mode = #tpu.pipeline_mode<synchronous>, transform_indices = @transform_6, window_bounds = array<i64: 1, 128>}, {transform_indices = @transform_7, window_bounds = array<i64: 1, 8, 8, 128>}]} {
    %c0 = arith.constant 0 : index
    %c0_0 = arith.constant 0 : index
    %c0_1 = arith.constant 0 : index
    %c0_2 = arith.constant 0 : index
    %0 = vector.load %arg1[%c0, %c0_0, %c0_1, %c0_2] : memref<1x10x10x128xf32, #tpu.memory_space<vmem>>, vector<1x10x10x128xf32>
    %1 = vector.shape_cast %0 : vector<1x10x10x128xf32> to vector<10x10x128xf32>
    %cst = arith.constant 0.000000e+00 : f32
    %2 = vector.broadcast %cst : f32 to vector<64x128xf32>
    %3 = vector.extract_strided_slice %1 {offsets = [0, 0, 0], sizes = [8, 8, 128], strides = [1, 1, 1]} : vector<10x10x128xf32> to vector<8x8x128xf32>
    %4 = vector.shape_cast %3 : vector<8x8x128xf32> to vector<64x128xf32>
    %c0_3 = arith.constant 0 : index
    %c0_4 = arith.constant 0 : index
    %c0_5 = arith.constant 0 : index
    %5 = vector.load %arg2[%c0_3, %c0_4, %c0_5] : memref<9x128x128xf32, #tpu.memory_space<vmem>>, vector<1x128x128xf32>
    %6 = vector.shape_cast %5 : vector<1x128x128xf32> to vector<128x128xf32>
    %cst_6 = arith.constant dense<0.000000e+00> : vector<64x128xf32>
    %7 = tpu.matmul %4, %6, %cst_6 {dimension_numbers = #tpu.dot_dimension_numbers<[1], [0], [0], [1], [0, 0, 1, 1], [], []>} : vector<64x128xf32>, vector<128x128xf32>, vector<64x128xf32> -> vector<64x128xf32>
    %8 = arith.addf %2, %7 : vector<64x128xf32>
    %9 = vector.extract_strided_slice %1 {offsets = [0, 1, 0], sizes = [8, 8, 128], strides = [1, 1, 1]} : vector<10x10x128xf32> to vector<8x8x128xf32>
    %10 = vector.shape_cast %9 : vector<8x8x128xf32> to vector<64x128xf32>
    %c1 = arith.constant 1 : index
    %c0_7 = arith.constant 0 : index
    %c0_8 = arith.constant 0 : index
    %11 = vector.load %arg2[%c1, %c0_7, %c0_8] : memref<9x128x128xf32, #tpu.memory_space<vmem>>, vector<1x128x128xf32>
    %12 = vector.shape_cast %11 : vector<1x128x128xf32> to vector<128x128xf32>
    %cst_9 = arith.constant dense<0.000000e+00> : vector<64x128xf32>
    %13 = tpu.matmul %10, %12, %cst_9 {dimension_numbers = #tpu.dot_dimension_numbers<[1], [0], [0], [1], [0, 0, 1, 1], [], []>} : vector<64x128xf32>, vector<128x128xf32>, vector<64x128xf32> -> vector<64x128xf32>
    %14 = arith.addf %8, %13 : vector<64x128xf32>
    %15 = vector.extract_strided_slice %1 {offsets = [0, 2, 0], sizes = [8, 8, 128], strides = [1, 1, 1]} : vector<10x10x128xf32> to vector<8x8x128xf32>
    %16 = vector.shape_cast %15 : vector<8x8x128xf32> to vector<64x128xf32>
    %c2 = arith.constant 2 : index
    %c0_10 = arith.constant 0 : index
    %c0_11 = arith.constant 0 : index
    %17 = vector.load %arg2[%c2, %c0_10, %c0_11] : memref<9x128x128xf32, #tpu.memory_space<vmem>>, vector<1x128x128xf32>
    %18 = vector.shape_cast %17 : vector<1x128x128xf32> to vector<128x128xf32>
    %cst_12 = arith.constant dense<0.000000e+00> : vector<64x128xf32>
    %19 = tpu.matmul %16, %18, %cst_12 {dimension_numbers = #tpu.dot_dimension_numbers<[1], [0], [0], [1], [0, 0, 1, 1], [], []>} : vector<64x128xf32>, vector<128x128xf32>, vector<64x128xf32> -> vector<64x128xf32>
    %20 = arith.addf %14, %19 : vector<64x128xf32>
    %21 = vector.extract_strided_slice %1 {offsets = [1, 0, 0], sizes = [8, 8, 128], strides = [1, 1, 1]} : vector<10x10x128xf32> to vector<8x8x128xf32>
    %22 = vector.shape_cast %21 : vector<8x8x128xf32> to vector<64x128xf32>
    %c3 = arith.constant 3 : index
    %c0_13 = arith.constant 0 : index
    %c0_14 = arith.constant 0 : index
    %23 = vector.load %arg2[%c3, %c0_13, %c0_14] : memref<9x128x128xf32, #tpu.memory_space<vmem>>, vector<1x128x128xf32>
    %24 = vector.shape_cast %23 : vector<1x128x128xf32> to vector<128x128xf32>
    %cst_15 = arith.constant dense<0.000000e+00> : vector<64x128xf32>
    %25 = tpu.matmul %22, %24, %cst_15 {dimension_numbers = #tpu.dot_dimension_numbers<[1], [0], [0], [1], [0, 0, 1, 1], [], []>} : vector<64x128xf32>, vector<128x128xf32>, vector<64x128xf32> -> vector<64x128xf32>
    %26 = arith.addf %20, %25 : vector<64x128xf32>
    %27 = vector.extract_strided_slice %1 {offsets = [1, 1, 0], sizes = [8, 8, 128], strides = [1, 1, 1]} : vector<10x10x128xf32> to vector<8x8x128xf32>
    %28 = vector.shape_cast %27 : vector<8x8x128xf32> to vector<64x128xf32>
    %c4 = arith.constant 4 : index
    %c0_16 = arith.constant 0 : index
    %c0_17 = arith.constant 0 : index
    %29 = vector.load %arg2[%c4, %c0_16, %c0_17] : memref<9x128x128xf32, #tpu.memory_space<vmem>>, vector<1x128x128xf32>
    %30 = vector.shape_cast %29 : vector<1x128x128xf32> to vector<128x128xf32>
    %cst_18 = arith.constant dense<0.000000e+00> : vector<64x128xf32>
    %31 = tpu.matmul %28, %30, %cst_18 {dimension_numbers = #tpu.dot_dimension_numbers<[1], [0], [0], [1], [0, 0, 1, 1], [], []>} : vector<64x128xf32>, vector<128x128xf32>, vector<64x128xf32> -> vector<64x128xf32>
    %32 = arith.addf %26, %31 : vector<64x128xf32>
    %33 = vector.extract_strided_slice %1 {offsets = [1, 2, 0], sizes = [8, 8, 128], strides = [1, 1, 1]} : vector<10x10x128xf32> to vector<8x8x128xf32>
    %34 = vector.shape_cast %33 : vector<8x8x128xf32> to vector<64x128xf32>
    %c5 = arith.constant 5 : index
    %c0_19 = arith.constant 0 : index
    %c0_20 = arith.constant 0 : index
    %35 = vector.load %arg2[%c5, %c0_19, %c0_20] : memref<9x128x128xf32, #tpu.memory_space<vmem>>, vector<1x128x128xf32>
    %36 = vector.shape_cast %35 : vector<1x128x128xf32> to vector<128x128xf32>
    %cst_21 = arith.constant dense<0.000000e+00> : vector<64x128xf32>
    %37 = tpu.matmul %34, %36, %cst_21 {dimension_numbers = #tpu.dot_dimension_numbers<[1], [0], [0], [1], [0, 0, 1, 1], [], []>} : vector<64x128xf32>, vector<128x128xf32>, vector<64x128xf32> -> vector<64x128xf32>
    %38 = arith.addf %32, %37 : vector<64x128xf32>
    %39 = vector.extract_strided_slice %1 {offsets = [2, 0, 0], sizes = [8, 8, 128], strides = [1, 1, 1]} : vector<10x10x128xf32> to vector<8x8x128xf32>
    %40 = vector.shape_cast %39 : vector<8x8x128xf32> to vector<64x128xf32>
    %c6 = arith.constant 6 : index
    %c0_22 = arith.constant 0 : index
    %c0_23 = arith.constant 0 : index
    %41 = vector.load %arg2[%c6, %c0_22, %c0_23] : memref<9x128x128xf32, #tpu.memory_space<vmem>>, vector<1x128x128xf32>
    %42 = vector.shape_cast %41 : vector<1x128x128xf32> to vector<128x128xf32>
    %cst_24 = arith.constant dense<0.000000e+00> : vector<64x128xf32>
    %43 = tpu.matmul %40, %42, %cst_24 {dimension_numbers = #tpu.dot_dimension_numbers<[1], [0], [0], [1], [0, 0, 1, 1], [], []>} : vector<64x128xf32>, vector<128x128xf32>, vector<64x128xf32> -> vector<64x128xf32>
    %44 = arith.addf %38, %43 : vector<64x128xf32>
    %45 = vector.extract_strided_slice %1 {offsets = [2, 1, 0], sizes = [8, 8, 128], strides = [1, 1, 1]} : vector<10x10x128xf32> to vector<8x8x128xf32>
    %46 = vector.shape_cast %45 : vector<8x8x128xf32> to vector<64x128xf32>
    %c7 = arith.constant 7 : index
    %c0_25 = arith.constant 0 : index
    %c0_26 = arith.constant 0 : index
    %47 = vector.load %arg2[%c7, %c0_25, %c0_26] : memref<9x128x128xf32, #tpu.memory_space<vmem>>, vector<1x128x128xf32>
    %48 = vector.shape_cast %47 : vector<1x128x128xf32> to vector<128x128xf32>
    %cst_27 = arith.constant dense<0.000000e+00> : vector<64x128xf32>
    %49 = tpu.matmul %46, %48, %cst_27 {dimension_numbers = #tpu.dot_dimension_numbers<[1], [0], [0], [1], [0, 0, 1, 1], [], []>} : vector<64x128xf32>, vector<128x128xf32>, vector<64x128xf32> -> vector<64x128xf32>
    %50 = arith.addf %44, %49 : vector<64x128xf32>
    %51 = vector.extract_strided_slice %1 {offsets = [2, 2, 0], sizes = [8, 8, 128], strides = [1, 1, 1]} : vector<10x10x128xf32> to vector<8x8x128xf32>
    %52 = vector.shape_cast %51 : vector<8x8x128xf32> to vector<64x128xf32>
    %c8 = arith.constant 8 : index
    %c0_28 = arith.constant 0 : index
    %c0_29 = arith.constant 0 : index
    %53 = vector.load %arg2[%c8, %c0_28, %c0_29] : memref<9x128x128xf32, #tpu.memory_space<vmem>>, vector<1x128x128xf32>
    %54 = vector.shape_cast %53 : vector<1x128x128xf32> to vector<128x128xf32>
    %cst_30 = arith.constant dense<0.000000e+00> : vector<64x128xf32>
    %55 = tpu.matmul %52, %54, %cst_30 {dimension_numbers = #tpu.dot_dimension_numbers<[1], [0], [0], [1], [0, 0, 1, 1], [], []>} : vector<64x128xf32>, vector<128x128xf32>, vector<64x128xf32> -> vector<64x128xf32>
    %56 = arith.addf %50, %55 : vector<64x128xf32>
    %c0_31 = arith.constant 0 : index
    %c0_32 = arith.constant 0 : index
    %57 = vector.load %arg3[%c0_31, %c0_32] : memref<1x128xf32, #tpu.memory_space<vmem>>, vector<1x128xf32>
    %58 = vector.broadcast %57 : vector<1x128xf32> to vector<64x128xf32>
    %59 = arith.mulf %56, %58 : vector<64x128xf32>
    %c0_33 = arith.constant 0 : index
    %c0_34 = arith.constant 0 : index
    %60 = vector.load %arg4[%c0_33, %c0_34] : memref<1x128xf32, #tpu.memory_space<vmem>>, vector<1x128xf32>
    %61 = vector.broadcast %60 : vector<1x128xf32> to vector<64x128xf32>
    %62 = arith.addf %59, %61 : vector<64x128xf32>
    %cst_35 = arith.constant 0.000000e+00 : f32
    %63 = vector.broadcast %cst_35 : f32 to vector<64x128xf32>
    %64 = arith.maximumf %62, %63 : vector<64x128xf32>
    %cst_36 = arith.constant 0.000000e+00 : f32
    %65 = vector.broadcast %cst_36 : f32 to vector<10x10x128xf32>
    %c0_37 = arith.constant 0 : index
    %c0_38 = arith.constant 0 : index
    %c0_39 = arith.constant 0 : index
    %66 = vector.load %arg9[%c0_37, %c0_38, %c0_39] : memref<10x10x128xf32, #tpu.memory_space<vmem>>, vector<10x10x128xf32>
    tpu.vector_store %arg9[%c0_37, %c0_38, %c0_39], %65 {strides = array<i32>} : memref<10x10x128xf32, #tpu.memory_space<vmem>>, vector<10x10x128xf32>,
    %67 = vector.shape_cast %64 : vector<64x128xf32> to vector<8x8x128xf32>
    %c1_40 = arith.constant 1 : index
    %c1_41 = arith.constant 1 : index
    %c0_42 = arith.constant 0 : index
    %68 = vector.load %arg9[%c1_40, %c1_41, %c0_42] : memref<10x10x128xf32, #tpu.memory_space<vmem>>, vector<8x8x128xf32>
    tpu.vector_store %arg9[%c1_40, %c1_41, %c0_42], %67 {strides = array<i32>} : memref<10x10x128xf32, #tpu.memory_space<vmem>>, vector<8x8x128xf32>,
    %c0_43 = arith.constant 0 : index
    %c0_44 = arith.constant 0 : index
    %c0_45 = arith.constant 0 : index
    %69 = vector.load %arg9[%c0_43, %c0_44, %c0_45] : memref<10x10x128xf32, #tpu.memory_space<vmem>>, vector<10x10x128xf32>
    %cst_46 = arith.constant 0.000000e+00 : f32
    %70 = vector.broadcast %cst_46 : f32 to vector<64x128xf32>
    %71 = vector.extract_strided_slice %69 {offsets = [0, 0, 0], sizes = [8, 8, 128], strides = [1, 1, 1]} : vector<10x10x128xf32> to vector<8x8x128xf32>
    %72 = vector.shape_cast %71 : vector<8x8x128xf32> to vector<64x128xf32>
    %c0_47 = arith.constant 0 : index
    %c0_48 = arith.constant 0 : index
    %c0_49 = arith.constant 0 : index
    %73 = vector.load %arg5[%c0_47, %c0_48, %c0_49] : memref<9x128x128xf32, #tpu.memory_space<vmem>>, vector<1x128x128xf32>
    %74 = vector.shape_cast %73 : vector<1x128x128xf32> to vector<128x128xf32>
    %cst_50 = arith.constant dense<0.000000e+00> : vector<64x128xf32>
    %75 = tpu.matmul %72, %74, %cst_50 {dimension_numbers = #tpu.dot_dimension_numbers<[1], [0], [0], [1], [0, 0, 1, 1], [], []>} : vector<64x128xf32>, vector<128x128xf32>, vector<64x128xf32> -> vector<64x128xf32>
    %76 = arith.addf %70, %75 : vector<64x128xf32>
    %77 = vector.extract_strided_slice %69 {offsets = [0, 1, 0], sizes = [8, 8, 128], strides = [1, 1, 1]} : vector<10x10x128xf32> to vector<8x8x128xf32>
    %78 = vector.shape_cast %77 : vector<8x8x128xf32> to vector<64x128xf32>
    %c1_51 = arith.constant 1 : index
    %c0_52 = arith.constant 0 : index
    %c0_53 = arith.constant 0 : index
    %79 = vector.load %arg5[%c1_51, %c0_52, %c0_53] : memref<9x128x128xf32, #tpu.memory_space<vmem>>, vector<1x128x128xf32>
    %80 = vector.shape_cast %79 : vector<1x128x128xf32> to vector<128x128xf32>
    %cst_54 = arith.constant dense<0.000000e+00> : vector<64x128xf32>
    %81 = tpu.matmul %78, %80, %cst_54 {dimension_numbers = #tpu.dot_dimension_numbers<[1], [0], [0], [1], [0, 0, 1, 1], [], []>} : vector<64x128xf32>, vector<128x128xf32>, vector<64x128xf32> -> vector<64x128xf32>
    %82 = arith.addf %76, %81 : vector<64x128xf32>
    %83 = vector.extract_strided_slice %69 {offsets = [0, 2, 0], sizes = [8, 8, 128], strides = [1, 1, 1]} : vector<10x10x128xf32> to vector<8x8x128xf32>
    %84 = vector.shape_cast %83 : vector<8x8x128xf32> to vector<64x128xf32>
    %c2_55 = arith.constant 2 : index
    %c0_56 = arith.constant 0 : index
    %c0_57 = arith.constant 0 : index
    %85 = vector.load %arg5[%c2_55, %c0_56, %c0_57] : memref<9x128x128xf32, #tpu.memory_space<vmem>>, vector<1x128x128xf32>
    %86 = vector.shape_cast %85 : vector<1x128x128xf32> to vector<128x128xf32>
    %cst_58 = arith.constant dense<0.000000e+00> : vector<64x128xf32>
    %87 = tpu.matmul %84, %86, %cst_58 {dimension_numbers = #tpu.dot_dimension_numbers<[1], [0], [0], [1], [0, 0, 1, 1], [], []>} : vector<64x128xf32>, vector<128x128xf32>, vector<64x128xf32> -> vector<64x128xf32>
    %88 = arith.addf %82, %87 : vector<64x128xf32>
    %89 = vector.extract_strided_slice %69 {offsets = [1, 0, 0], sizes = [8, 8, 128], strides = [1, 1, 1]} : vector<10x10x128xf32> to vector<8x8x128xf32>
    %90 = vector.shape_cast %89 : vector<8x8x128xf32> to vector<64x128xf32>
    %c3_59 = arith.constant 3 : index
    %c0_60 = arith.constant 0 : index
    %c0_61 = arith.constant 0 : index
    %91 = vector.load %arg5[%c3_59, %c0_60, %c0_61] : memref<9x128x128xf32, #tpu.memory_space<vmem>>, vector<1x128x128xf32>
    %92 = vector.shape_cast %91 : vector<1x128x128xf32> to vector<128x128xf32>
    %cst_62 = arith.constant dense<0.000000e+00> : vector<64x128xf32>
    %93 = tpu.matmul %90, %92, %cst_62 {dimension_numbers = #tpu.dot_dimension_numbers<[1], [0], [0], [1], [0, 0, 1, 1], [], []>} : vector<64x128xf32>, vector<128x128xf32>, vector<64x128xf32> -> vector<64x128xf32>
    %94 = arith.addf %88, %93 : vector<64x128xf32>
    %95 = vector.extract_strided_slice %69 {offsets = [1, 1, 0], sizes = [8, 8, 128], strides = [1, 1, 1]} : vector<10x10x128xf32> to vector<8x8x128xf32>
    %96 = vector.shape_cast %95 : vector<8x8x128xf32> to vector<64x128xf32>
    %c4_63 = arith.constant 4 : index
    %c0_64 = arith.constant 0 : index
    %c0_65 = arith.constant 0 : index
    %97 = vector.load %arg5[%c4_63, %c0_64, %c0_65] : memref<9x128x128xf32, #tpu.memory_space<vmem>>, vector<1x128x128xf32>
    %98 = vector.shape_cast %97 : vector<1x128x128xf32> to vector<128x128xf32>
    %cst_66 = arith.constant dense<0.000000e+00> : vector<64x128xf32>
    %99 = tpu.matmul %96, %98, %cst_66 {dimension_numbers = #tpu.dot_dimension_numbers<[1], [0], [0], [1], [0, 0, 1, 1], [], []>} : vector<64x128xf32>, vector<128x128xf32>, vector<64x128xf32> -> vector<64x128xf32>
    %100 = arith.addf %94, %99 : vector<64x128xf32>
    %101 = vector.extract_strided_slice %69 {offsets = [1, 2, 0], sizes = [8, 8, 128], strides = [1, 1, 1]} : vector<10x10x128xf32> to vector<8x8x128xf32>
    %102 = vector.shape_cast %101 : vector<8x8x128xf32> to vector<64x128xf32>
    %c5_67 = arith.constant 5 : index
    %c0_68 = arith.constant 0 : index
    %c0_69 = arith.constant 0 : index
    %103 = vector.load %arg5[%c5_67, %c0_68, %c0_69] : memref<9x128x128xf32, #tpu.memory_space<vmem>>, vector<1x128x128xf32>
    %104 = vector.shape_cast %103 : vector<1x128x128xf32> to vector<128x128xf32>
    %cst_70 = arith.constant dense<0.000000e+00> : vector<64x128xf32>
    %105 = tpu.matmul %102, %104, %cst_70 {dimension_numbers = #tpu.dot_dimension_numbers<[1], [0], [0], [1], [0, 0, 1, 1], [], []>} : vector<64x128xf32>, vector<128x128xf32>, vector<64x128xf32> -> vector<64x128xf32>
    %106 = arith.addf %100, %105 : vector<64x128xf32>
    %107 = vector.extract_strided_slice %69 {offsets = [2, 0, 0], sizes = [8, 8, 128], strides = [1, 1, 1]} : vector<10x10x128xf32> to vector<8x8x128xf32>
    %108 = vector.shape_cast %107 : vector<8x8x128xf32> to vector<64x128xf32>
    %c6_71 = arith.constant 6 : index
    %c0_72 = arith.constant 0 : index
    %c0_73 = arith.constant 0 : index
    %109 = vector.load %arg5[%c6_71, %c0_72, %c0_73] : memref<9x128x128xf32, #tpu.memory_space<vmem>>, vector<1x128x128xf32>
    %110 = vector.shape_cast %109 : vector<1x128x128xf32> to vector<128x128xf32>
    %cst_74 = arith.constant dense<0.000000e+00> : vector<64x128xf32>
    %111 = tpu.matmul %108, %110, %cst_74 {dimension_numbers = #tpu.dot_dimension_numbers<[1], [0], [0], [1], [0, 0, 1, 1], [], []>} : vector<64x128xf32>, vector<128x128xf32>, vector<64x128xf32> -> vector<64x128xf32>
    %112 = arith.addf %106, %111 : vector<64x128xf32>
    %113 = vector.extract_strided_slice %69 {offsets = [2, 1, 0], sizes = [8, 8, 128], strides = [1, 1, 1]} : vector<10x10x128xf32> to vector<8x8x128xf32>
    %114 = vector.shape_cast %113 : vector<8x8x128xf32> to vector<64x128xf32>
    %c7_75 = arith.constant 7 : index
    %c0_76 = arith.constant 0 : index
    %c0_77 = arith.constant 0 : index
    %115 = vector.load %arg5[%c7_75, %c0_76, %c0_77] : memref<9x128x128xf32, #tpu.memory_space<vmem>>, vector<1x128x128xf32>
    %116 = vector.shape_cast %115 : vector<1x128x128xf32> to vector<128x128xf32>
    %cst_78 = arith.constant dense<0.000000e+00> : vector<64x128xf32>
    %117 = tpu.matmul %114, %116, %cst_78 {dimension_numbers = #tpu.dot_dimension_numbers<[1], [0], [0], [1], [0, 0, 1, 1], [], []>} : vector<64x128xf32>, vector<128x128xf32>, vector<64x128xf32> -> vector<64x128xf32>
    %118 = arith.addf %112, %117 : vector<64x128xf32>
    %119 = vector.extract_strided_slice %69 {offsets = [2, 2, 0], sizes = [8, 8, 128], strides = [1, 1, 1]} : vector<10x10x128xf32> to vector<8x8x128xf32>
    %120 = vector.shape_cast %119 : vector<8x8x128xf32> to vector<64x128xf32>
    %c8_79 = arith.constant 8 : index
    %c0_80 = arith.constant 0 : index
    %c0_81 = arith.constant 0 : index
    %121 = vector.load %arg5[%c8_79, %c0_80, %c0_81] : memref<9x128x128xf32, #tpu.memory_space<vmem>>, vector<1x128x128xf32>
    %122 = vector.shape_cast %121 : vector<1x128x128xf32> to vector<128x128xf32>
    %cst_82 = arith.constant dense<0.000000e+00> : vector<64x128xf32>
    %123 = tpu.matmul %120, %122, %cst_82 {dimension_numbers = #tpu.dot_dimension_numbers<[1], [0], [0], [1], [0, 0, 1, 1], [], []>} : vector<64x128xf32>, vector<128x128xf32>, vector<64x128xf32> -> vector<64x128xf32>
    %124 = arith.addf %118, %123 : vector<64x128xf32>
    %c0_83 = arith.constant 0 : index
    %c0_84 = arith.constant 0 : index
    %125 = vector.load %arg6[%c0_83, %c0_84] : memref<1x128xf32, #tpu.memory_space<vmem>>, vector<1x128xf32>
    %126 = vector.broadcast %125 : vector<1x128xf32> to vector<64x128xf32>
    %127 = arith.mulf %124, %126 : vector<64x128xf32>
    %c0_85 = arith.constant 0 : index
    %c0_86 = arith.constant 0 : index
    %128 = vector.load %arg7[%c0_85, %c0_86] : memref<1x128xf32, #tpu.memory_space<vmem>>, vector<1x128xf32>
    %129 = vector.broadcast %128 : vector<1x128xf32> to vector<64x128xf32>
    %130 = arith.addf %127, %129 : vector<64x128xf32>
    %131 = vector.extract_strided_slice %1 {offsets = [1, 1, 0], sizes = [8, 8, 128], strides = [1, 1, 1]} : vector<10x10x128xf32> to vector<8x8x128xf32>
    %132 = vector.shape_cast %131 : vector<8x8x128xf32> to vector<64x128xf32>
    %133 = arith.addf %130, %132 : vector<64x128xf32>
    %cst_87 = arith.constant 0.000000e+00 : f32
    %134 = vector.broadcast %cst_87 : f32 to vector<64x128xf32>
    %135 = arith.maximumf %133, %134 : vector<64x128xf32>
    %136 = vector.shape_cast %135 : vector<64x128xf32> to vector<8x8x128xf32>
    %c0_88 = arith.constant 0 : index
    %c0_89 = arith.constant 0 : index
    %c0_90 = arith.constant 0 : index
    %c0_91 = arith.constant 0 : index
    %137 = vector.load %arg8[%c0_88, %c0_89, %c0_90, %c0_91] : memref<1x8x8x128xf32, #tpu.memory_space<vmem>>, vector<1x8x8x128xf32>
    %138 = vector.shape_cast %137 : vector<1x8x8x128xf32> to vector<8x8x128xf32>
    %139 = vector.shape_cast %136 : vector<8x8x128xf32> to vector<1x8x8x128xf32>
    tpu.vector_store %arg8[%c0_88, %c0_89, %c0_90, %c0_91], %139 {strides = array<i32>} : memref<1x8x8x128xf32, #tpu.memory_space<vmem>>, vector<1x8x8x128xf32>,
    return
  }
  func.func @transform_0(%arg0: i32) -> (i32, i32, i32, i32) {
    %c0_i32 = arith.constant 0 : i32
    %c0_i32_0 = arith.constant 0 : i32
    %c0_i32_1 = arith.constant 0 : i32
    %c0_i32_2 = arith.constant 0 : i32
    return %arg0, %c0_i32, %c0_i32_0, %c0_i32_1 : i32, i32, i32, i32
  }
  func.func @transform_1(%arg0: i32) -> (i32, i32, i32) {
    %c0_i32 = arith.constant 0 : i32
    %c0_i32_0 = arith.constant 0 : i32
    %c0_i32_1 = arith.constant 0 : i32
    %c0_i32_2 = arith.constant 0 : i32
    return %c0_i32, %c0_i32_0, %c0_i32_1 : i32, i32, i32
  }
  func.func @transform_2(%arg0: i32) -> (i32, i32) {
    %c0_i32 = arith.constant 0 : i32
    %c0_i32_0 = arith.constant 0 : i32
    %c0_i32_1 = arith.constant 0 : i32
    return %c0_i32, %c0_i32_0 : i32, i32
  }
  func.func @transform_3(%arg0: i32) -> (i32, i32) {
    %c0_i32 = arith.constant 0 : i32
    %c0_i32_0 = arith.constant 0 : i32
    %c0_i32_1 = arith.constant 0 : i32
    return %c0_i32, %c0_i32_0 : i32, i32
  }
  func.func @transform_4(%arg0: i32) -> (i32, i32, i32) {
    %c0_i32 = arith.constant 0 : i32
    %c0_i32_0 = arith.constant 0 : i32
    %c0_i32_1 = arith.constant 0 : i32
    %c0_i32_2 = arith.constant 0 : i32
    return %c0_i32, %c0_i32_0, %c0_i32_1 : i32, i32, i32
  }
  func.func @transform_5(%arg0: i32) -> (i32, i32) {
    %c0_i32 = arith.constant 0 : i32
    %c0_i32_0 = arith.constant 0 : i32
    %c0_i32_1 = arith.constant 0 : i32
    return %c0_i32, %c0_i32_0 : i32, i32
  }
  func.func @transform_6(%arg0: i32) -> (i32, i32) {
    %c0_i32 = arith.constant 0 : i32
    %c0_i32_0 = arith.constant 0 : i32
    %c0_i32_1 = arith.constant 0 : i32
    return %c0_i32, %c0_i32_0 : i32, i32
  }
  func.func @transform_7(%arg0: i32) -> (i32, i32, i32, i32) {
    %c0_i32 = arith.constant 0 : i32
    %c0_i32_0 = arith.constant 0 : i32
    %c0_i32_1 = arith.constant 0 : i32
    %c0_i32_2 = arith.constant 0 : i32
    return %arg0, %c0_i32, %c0_i32_0, %c0_i32_1 : i32, i32, i32, i32
  }
}

</mosaic_0001>

<llo_original>
// kernel: tpu_custom_call.1
$region0: #{tpu_custom_call.1}
  #allocation0 [shape = 'u32[]', space=smem, size = 0x4, offset = 0x4, fixed_abs, tag = 'smem constant byte address 0x4 - core index']
  #allocation1 [shape = 'u32[144,128]{1,0:T(1,128)}', space=vmem, size = 0x12000, scoped, tag = 'internal scratch']
  #allocation2 [shape = 'f32[10,10,128]{2,1,0:T(8,128)}', space=vmem, size = 0x14000, scoped, tag = 'scratch operand']
  %s0 = inlined_call_operand.vmem [shape: f32[2,10,10,128], index: 0, kind: input, shape index: {}]
  %s1 = inlined_call_operand.hbm [shape: f32[9,128,128], index: 1, kind: input, shape index: {}]
  %s2 = inlined_call_operand.vmem [shape: f32[1,128], index: 2, kind: input, shape index: {}]
  %s3 = inlined_call_operand.vmem [shape: f32[1,128], index: 3, kind: input, shape index: {}]
  %s4 = inlined_call_operand.hbm [shape: f32[9,128,128], index: 4, kind: input, shape index: {}]
  %s5 = inlined_call_operand.vmem [shape: f32[1,128], index: 5, kind: input, shape index: {}]
  %s6 = inlined_call_operand.vmem [shape: f32[1,128], index: 6, kind: input, shape index: {}]
  %s7 = inlined_call_operand.hbm [shape: f32[2,8,8,128], index: 7, kind: output, shape index: {}]
  %s8 = sld [smem:[#allocation0]]
  $region69: #{tpu_custom_call.1} parent=0
    _
  %s10 = ssub.s32 1, %s8
  %s11 = scalar_select 0, %s10, %s8
  $region1: #{tpu_custom_call.1} parent=0
    #allocation3 [shape = 'u8[589824]{0}', space=vmem, size = 0x90000, scoped, tag = 'input window, operand 1, single buffered']
    #allocation4 [shape = 's32[2]{0}', space=sflag, size = 0x8, scoped, tag = 'scoped memory for tpu_custom_call.1']
    #allocation5 [shape = 's32[2]{0}', space=sflag, size = 0x8, scoped, tag = 'scoped memory for tpu_custom_call.1']
    #allocation6 [shape = 'u8[589824]{0}', space=vmem, size = 0x90000, scoped, tag = 'input window, operand 4, single buffered']
    #allocation7 [shape = 's32[1]{0}', space=sflag, size = 0x4, scoped, tag = 'scoped memory for tpu_custom_call.1']
    #allocation8 [shape = 'u8[65536]{0}', space=vmem, size = 0x10000, scoped, tag = 'output window, operand 0']
    %12 = vsyncpa [#allocation4], 0
    %13 = vsyncpa [#allocation7], 0
    %14 = vsyncpa [#allocation5], 0
    %s15 = scalar_lea.sflag [#allocation5], 1
    %16 = vsyncpa %s15, 0
    loop: start=0, step=1, limit=4
    $region2: #{tpu_custom_call.1} parent=1 // loop_pre_header
      _
    $region3: #{tpu_custom_call.1} parent=1 // loop_header
      %s18 = sphi 0, %s22
      %p19 = scmp.ge.s32.totalorder %s18, 4
      %s28 = sphi 0, %s30
      %s31 = sphi 0, %s28
      %s32 = sphi 0, %s31
      %s48 = sphi 0, %s32
      %s52 = sphi 0, %s52
      %s54 = sphi 0, %s52
      %s55 = sphi 0, %s54
      %s69 = sphi 0, %s55
      %s73 = sphi 0, %s73
      %s75 = sphi 0, %s73
      %s76 = sphi 0, %s75
      %s90 = sphi 0, %s76
      %s94 = sphi 0, %s94
      %s96 = sphi 0, %s94
      %s97 = sphi 0, %s96
      %s111 = sphi 0, %s97
      %s115 = sphi 0, %s115
      %s117 = sphi 0, %s115
      %s118 = sphi 0, %s117
      %s132 = sphi 0, %s118
      %s136 = sphi 0, %s136
      %s138 = sphi 0, %s136
      %s139 = sphi 0, %s138
      %s153 = sphi 0, %s139
      %s157 = sphi 0, %s157
      %s159 = sphi 0, %s157
      %s160 = sphi 0, %s159
      %s174 = sphi 0, %s160
      %s180 = sphi 0, %s182
      %s183 = sphi 0, %s180
      %s184 = sphi 0, %s183
      %s200 = sphi 0, %s184
    $region4: #{tpu_custom_call.1} parent=1 // loop_header_branch
      %21 = sbr.rel (%p19) target = $region8
    $region5: #{tpu_custom_call.1} parent=1 // loop_body
      %s23 = ssub.s32 %s18, 1
      %s24 = ssub.s32 %s18, 2
      %s25 = sadd.s32 %s18, 1
      %s26 = ssub.s32 %s18, %s25
      %p27 = scmp.eq.s32.totalorder %s26, 0
      %s29 = sadd.s32 %s28, 1
      %s30 = scalar_select %p27, %s28, %s29
      %p33 = pneg %p27
      %p34 = scmp.eq.s32.totalorder %s18, 1
      %p35 = por %p33, %p34
      %p36 = scmp.ne.s32.totalorder %s28, %s31
      %p37 = scmp.eq.s32.totalorder %s18, 0
      %p38 = por %p36, %p37
      %p39 = scmp.ne.s32.totalorder %s28, %s31
      %p40 = scmp.eq.s32.totalorder %s23, 1
      %p41 = por %p39, %p40
      %p42 = scmp.ne.s32.totalorder %s31, %s32
      %p43 = scmp.eq.s32.totalorder %s23, 0
      %p44 = por %p42, %p43
      %p45 = scmp.ne.s32.totalorder %s31, %s32
      %p46 = scmp.eq.s32.totalorder %s24, 1
      %p47 = por %p45, %p46
      %p49 = scmp.ne.s32.totalorder %s32, %s48
      %p50 = scmp.eq.s32.totalorder %s24, 0
      %p51 = por %p49, %p50
      %s53 = sadd.s32 %s52, 1
      %p56 = scmp.eq.s32.totalorder %s18, 1
      %p57 = scmp.ne.s32.totalorder %s52, %s54
      %p58 = scmp.eq.s32.totalorder %s18, 0
      %p59 = por %p57, %p58
      %p60 = scmp.ne.s32.totalorder %s52, %s54
      %p61 = scmp.eq.s32.totalorder %s23, 1
      %p62 = por %p60, %p61
      %p63 = scmp.ne.s32.totalorder %s54, %s55
      %p64 = scmp.eq.s32.totalorder %s23, 0
      %p65 = por %p63, %p64
      %p66 = scmp.ne.s32.totalorder %s54, %s55
      %p67 = scmp.eq.s32.totalorder %s24, 1
      %p68 = por %p66, %p67
      %p70 = scmp.ne.s32.totalorder %s55, %s69
      %p71 = scmp.eq.s32.totalorder %s24, 0
      %p72 = por %p70, %p71
      %s74 = sadd.s32 %s73, 1
      %p77 = scmp.eq.s32.totalorder %s18, 1
      %p78 = scmp.ne.s32.totalorder %s73, %s75
      %p79 = scmp.eq.s32.totalorder %s18, 0
      %p80 = por %p78, %p79
      %p81 = scmp.ne.s32.totalorder %s73, %s75
      %p82 = scmp.eq.s32.totalorder %s23, 1
      %p83 = por %p81, %p82
      %p84 = scmp.ne.s32.totalorder %s75, %s76
      %p85 = scmp.eq.s32.totalorder %s23, 0
      %p86 = por %p84, %p85
      %p87 = scmp.ne.s32.totalorder %s75, %s76
      %p88 = scmp.eq.s32.totalorder %s24, 1
      %p89 = por %p87, %p88
      %p91 = scmp.ne.s32.totalorder %s76, %s90
      %p92 = scmp.eq.s32.totalorder %s24, 0
      %p93 = por %p91, %p92
      %s95 = sadd.s32 %s94, 1
      %p98 = scmp.eq.s32.totalorder %s18, 1
      %p99 = scmp.ne.s32.totalorder %s94, %s96
      %p100 = scmp.eq.s32.totalorder %s18, 0
      %p101 = por %p99, %p100
      %p102 = scmp.ne.s32.totalorder %s94, %s96
      %p103 = scmp.eq.s32.totalorder %s23, 1
      %p104 = por %p102, %p103
      %p105 = scmp.ne.s32.totalorder %s96, %s97
      %p106 = scmp.eq.s32.totalorder %s23, 0
      %p107 = por %p105, %p106
      %p108 = scmp.ne.s32.totalorder %s96, %s97
      %p109 = scmp.eq.s32.totalorder %s24, 1
      %p110 = por %p108, %p109
      %p112 = scmp.ne.s32.totalorder %s97, %s111
      %p113 = scmp.eq.s32.totalorder %s24, 0
      %p114 = por %p112, %p113
      %s116 = sadd.s32 %s115, 1
      %p119 = scmp.eq.s32.totalorder %s18, 1
      %p120 = scmp.ne.s32.totalorder %s115, %s117
      %p121 = scmp.eq.s32.totalorder %s18, 0
      %p122 = por %p120, %p121
      %p123 = scmp.ne.s32.totalorder %s115, %s117
      %p124 = scmp.eq.s32.totalorder %s23, 1
      %p125 = por %p123, %p124
      %p126 = scmp.ne.s32.totalorder %s117, %s118
      %p127 = scmp.eq.s32.totalorder %s23, 0
      %p128 = por %p126, %p127
      %p129 = scmp.ne.s32.totalorder %s117, %s118
      %p130 = scmp.eq.s32.totalorder %s24, 1
      %p131 = por %p129, %p130
      %p133 = scmp.ne.s32.totalorder %s118, %s132
      %p134 = scmp.eq.s32.totalorder %s24, 0
      %p135 = por %p133, %p134
      %s137 = sadd.s32 %s136, 1
      %p140 = scmp.eq.s32.totalorder %s18, 1
      %p141 = scmp.ne.s32.totalorder %s136, %s138
      %p142 = scmp.eq.s32.totalorder %s18, 0
      %p143 = por %p141, %p142
      %p144 = scmp.ne.s32.totalorder %s136, %s138
      %p145 = scmp.eq.s32.totalorder %s23, 1
      %p146 = por %p144, %p145
      %p147 = scmp.ne.s32.totalorder %s138, %s139
      %p148 = scmp.eq.s32.totalorder %s23, 0
      %p149 = por %p147, %p148
      %p150 = scmp.ne.s32.totalorder %s138, %s139
      %p151 = scmp.eq.s32.totalorder %s24, 1
      %p152 = por %p150, %p151
      %p154 = scmp.ne.s32.totalorder %s139, %s153
      %p155 = scmp.eq.s32.totalorder %s24, 0
      %p156 = por %p154, %p155
      %s158 = sadd.s32 %s157, 1
      %p161 = scmp.eq.s32.totalorder %s18, 1
      %p162 = scmp.ne.s32.totalorder %s157, %s159
      %p163 = scmp.eq.s32.totalorder %s18, 0
      %p164 = por %p162, %p163
      %p165 = scmp.ne.s32.totalorder %s157, %s159
      %p166 = scmp.eq.s32.totalorder %s23, 1
      %p167 = por %p165, %p166
      %p168 = scmp.ne.s32.totalorder %s159, %s160
      %p169 = scmp.eq.s32.totalorder %s23, 0
      %p170 = por %p168, %p169
      %p171 = scmp.ne.s32.totalorder %s159, %s160
      %p172 = scmp.eq.s32.totalorder %s24, 1
      %p173 = por %p171, %p172
      %p175 = scmp.ne.s32.totalorder %s160, %s174
      %p176 = scmp.eq.s32.totalorder %s24, 0
      %p177 = por %p175, %p176
      %s178 = ssub.s32 %s18, %s25
      %p179 = scmp.eq.s32.totalorder %s178, 0
      %s181 = sadd.s32 %s180, 1
      %s182 = scalar_select %p179, %s180, %s181
      %p185 = pneg %p179
      %p186 = scmp.eq.s32.totalorder %s18, 1
      %p187 = por %p185, %p186
      %p188 = scmp.ne.s32.totalorder %s180, %s183
      %p189 = scmp.eq.s32.totalorder %s18, 0
      %p190 = por %p188, %p189
      %p191 = scmp.ne.s32.totalorder %s180, %s183
      %p192 = scmp.eq.s32.totalorder %s23, 1
      %p193 = por %p191, %p192
      %p194 = scmp.ne.s32.totalorder %s183, %s184
      %p195 = scmp.eq.s32.totalorder %s23, 0
      %p196 = por %p194, %p195
      %p197 = scmp.ne.s32.totalorder %s183, %s184
      %p198 = scmp.eq.s32.totalorder %s24, 1
      %p199 = por %p197, %p198
      %p201 = scmp.ne.s32.totalorder %s184, %s200
      %p202 = scmp.eq.s32.totalorder %s24, 0
      %p203 = por %p201, %p202
      %p204 = scmp.le.s32.totalorder 1, %s18
      %p205 = scmp.lt.s32.totalorder %s18, 3
      %p206 = pnand %p204, %p205
      %p207 = pneg %p206
      // Predicated region
      $region9: #{tpu_custom_call.1} parent=5 // pred_check
        _
      $region10: #{tpu_custom_call.1} parent=5 // pred_check_branch
        %209 = sbr.rel (%p206) target = $region12
      $region11: #{tpu_custom_call.1} parent=5 // pred_region
        %s210 = ssub.s32 %s18, 1
        // Predicated region
        $region13: #{tpu_custom_call.1} parent=11 // pred_check
          %p211 = pneg %p65
        $region14: #{tpu_custom_call.1} parent=11 // pred_check_branch
          %213 = sbr.rel (%p211) target = $region16
        $region15: #{tpu_custom_call.1} parent=11 // pred_region
          %s215 = ssub.s32 18432, 18432
          %216 = vsyncadd [#allocation4], %s215
          %s217 = sshll.u32 [#allocation3], 4
          %s218 = int_to_ptr.vmem [resolvable:$true] %s217
          %223 = dma.hbm_to_vmem [thread:$0]  %s1, 18432, %s218, [#allocation4], 128, 128, 8
        $region16: #{tpu_custom_call.1} parent=11 // pred_fallthru
          _
        // Predicated region
        $region17: #{tpu_custom_call.1} parent=11 // pred_check
          %p224 = pneg %p86
        $region18: #{tpu_custom_call.1} parent=11 // pred_check_branch
          %226 = sbr.rel (%p224) target = $region20
        $region19: #{tpu_custom_call.1} parent=11 // pred_region
          _
        $region20: #{tpu_custom_call.1} parent=11 // pred_fallthru
          _
        // Predicated region
        $region21: #{tpu_custom_call.1} parent=11 // pred_check
          %p227 = pneg %p107
        $region22: #{tpu_custom_call.1} parent=11 // pred_check_branch
          %229 = sbr.rel (%p227) target = $region24
        $region23: #{tpu_custom_call.1} parent=11 // pred_region
          _
        $region24: #{tpu_custom_call.1} parent=11 // pred_fallthru
          _
        // Predicated region
        $region25: #{tpu_custom_call.1} parent=11 // pred_check
          %p230 = pneg %p128
        $region26: #{tpu_custom_call.1} parent=11 // pred_check_branch
          %232 = sbr.rel (%p230) target = $region28
        $region27: #{tpu_custom_call.1} parent=11 // pred_region
          %s234 = ssub.s32 18432, 18432
          %235 = vsyncadd [#allocation7], %s234
          %s236 = sshll.u32 [#allocation6], 4
          %s237 = int_to_ptr.vmem [resolvable:$true] %s236
          %242 = dma.hbm_to_vmem [thread:$0]  %s4, 18432, %s237, [#allocation7], 128, 128, 8
        $region28: #{tpu_custom_call.1} parent=11 // pred_fallthru
          _
        // Predicated region
        $region29: #{tpu_custom_call.1} parent=11 // pred_check
          %p243 = pneg %p149
        $region30: #{tpu_custom_call.1} parent=11 // pred_check_branch
          %245 = sbr.rel (%p243) target = $region32
        $region31: #{tpu_custom_call.1} parent=11 // pred_region
          _
        $region32: #{tpu_custom_call.1} parent=11 // pred_fallthru
          _
        // Predicated region
        $region33: #{tpu_custom_call.1} parent=11 // pred_check
          %p246 = pneg %p170
        $region34: #{tpu_custom_call.1} parent=11 // pred_check_branch
          %248 = sbr.rel (%p246) target = $region36
        $region35: #{tpu_custom_call.1} parent=11 // pred_region
          _
        $region36: #{tpu_custom_call.1} parent=11 // pred_fallthru
          _
      $region12: #{tpu_custom_call.1} parent=5 // pred_fallthru
        _
      %p249 = scmp.lt.s32.totalorder %s18, 2
      // Predicated region
      $region37: #{tpu_custom_call.1} parent=5 // pred_check
        %p250 = pneg %p249
      $region38: #{tpu_custom_call.1} parent=5 // pred_check_branch
        %252 = sbr.rel (%p250) target = $region40
      $region39: #{tpu_custom_call.1} parent=5 // pred_region
        // Predicated region
        $region41: #{tpu_custom_call.1} parent=39 // pred_check
          %p253 = pneg %p38
        $region42: #{tpu_custom_call.1} parent=39 // pred_check_branch
          %255 = sbr.rel (%p253) target = $region44
        $region43: #{tpu_custom_call.1} parent=39 // pred_region
          %p256 = scmp.lt.s32.totalorder %s18, 1
          %s257 = scalar_select %p256, %s18, 1
          %s258 = smul.addr %s257, 20
          %s259 = smul.addr %s258, 8
          %s260 = scalar_lea.vmem %s0, %s259
        $region44: #{tpu_custom_call.1} parent=39 // pred_fallthru
          _
      $region40: #{tpu_custom_call.1} parent=5 // pred_fallthru
        _
      %p261 = scmp.le.s32.totalorder 1, %s18
      %p262 = scmp.lt.s32.totalorder %s18, 3
      %p263 = pnand %p261, %p262
      %p264 = pneg %p263
      // Predicated region
      $region45: #{tpu_custom_call.1} parent=5 // pred_check
        _
      $region46: #{tpu_custom_call.1} parent=5 // pred_check_branch
        %266 = sbr.rel (%p263) target = $region48
      $region47: #{tpu_custom_call.1} parent=5 // pred_region
        %s267 = ssub.s32 %s18, 1
        // Predicated region
        $region49: #{tpu_custom_call.1} parent=47 // pred_check
          %p268 = pneg %p65
        $region50: #{tpu_custom_call.1} parent=47 // pred_check_branch
          %270 = sbr.rel (%p268) target = $region52
        $region51: #{tpu_custom_call.1} parent=47 // pred_region
          %271 = dma.done [#allocation4], 18432
        $region52: #{tpu_custom_call.1} parent=47 // pred_fallthru
          _
        // Predicated region
        $region53: #{tpu_custom_call.1} parent=47 // pred_check
          %p272 = pneg %p128
        $region54: #{tpu_custom_call.1} parent=47 // pred_check_branch
          %274 = sbr.rel (%p272) target = $region56
        $region55: #{tpu_custom_call.1} parent=47 // pred_region
          %275 = dma.done [#allocation7], 18432
        $region56: #{tpu_custom_call.1} parent=47 // pred_fallthru
          _
        %p276 = scmp.lt.s32.totalorder %s23, 1
        %s277 = scalar_select %p276, %s23, 1
        %s278 = smul.addr %s277, 20
        %s279 = smul.addr %s278, 8
        %s280 = scalar_lea.vmem %s0, %s279
        %p281 = pneg %p44
        %p282 = pneg %p41
        %p283 = pneg %p65
        %p284 = pneg %p62
        %p285 = pneg %p86
        %p286 = pneg %p83
        %p287 = pneg %p107
        %p288 = pneg %p104
        %p289 = pneg %p128
        %p290 = pneg %p125
        %p291 = pneg %p149
        %p292 = pneg %p146
        %p293 = pneg %p170
        %p294 = pneg %p167
        %p295 = pneg %p196
        %p296 = pneg %p193
        %s297 = sand.u32 %s183, 1
        %s298 = scalar_lea.sflag [#allocation5], %s297
        %s299 = sand.u32 %s183, 1
        %s300 = smul.addr %s299, 64
        %s301 = scalar_lea.vmem [#allocation8], %s300
        %p302 = scmp.lt.s32.totalorder %s23, 1
        %s303 = scalar_select %p302, %s23, 1
        %s304 = smul.addr %s303, 20
        %s305 = smul.addr %s304, 8
        %s306 = scalar_lea.vmem %s0, %s305
        %v307 = vld [vmem:[%s306] sm:$0xff]
        %v308 = vld [vmem:[%s306 + $0x8] sm:$0x3]
        %v309 = vld [vmem:[%s306 + $0x10] sm:$0xff]
        %v310 = vld [vmem:[%s306 + $0x18] sm:$0x3]
        %v311 = vld [vmem:[%s306 + $0x20] sm:$0xff]
        %v312 = vld [vmem:[%s306 + $0x28] sm:$0x3]
        %v313 = vld [vmem:[%s306 + $0x30] sm:$0xff]
        %v314 = vld [vmem:[%s306 + $0x38] sm:$0x3]
        %v315 = vld [vmem:[%s306 + $0x40] sm:$0xff]
        %v316 = vld [vmem:[%s306 + $0x48] sm:$0x3]
        %v317 = vld [vmem:[%s306 + $0x50] sm:$0xff]
        %v318 = vld [vmem:[%s306 + $0x58] sm:$0x3]
        %v319 = vld [vmem:[%s306 + $0x60] sm:$0xff]
        %v320 = vld [vmem:[%s306 + $0x68] sm:$0x3]
        %v321 = vld [vmem:[%s306 + $0x70] sm:$0xff]
        %v322 = vld [vmem:[%s306 + $0x78] sm:$0x3]
        %v323 = vld [vmem:[%s306 + $0x80] sm:$0xff]
        %v324 = vld [vmem:[%s306 + $0x88] sm:$0x3]
        %v325 = vld [vmem:[%s306 + $0x90] sm:$0xff]
        %v326 = vld [vmem:[%s306 + $0x98] sm:$0x3]
        %v327 = vld [vmem:[#allocation3] sm:$0xff]
        %v328 = vld [vmem:[#allocation3 + $0x8] sm:$0xff]
        %v329 = vld [vmem:[#allocation3 + $0x10] sm:$0xff]
        %v330 = vld [vmem:[#allocation3 + $0x18] sm:$0xff]
        %v331 = vld [vmem:[#allocation3 + $0x20] sm:$0xff]
        %v332 = vld [vmem:[#allocation3 + $0x28] sm:$0xff]
        %v333 = vld [vmem:[#allocation3 + $0x30] sm:$0xff]
        %v334 = vld [vmem:[#allocation3 + $0x38] sm:$0xff]
        %v335 = vld [vmem:[#allocation3 + $0x40] sm:$0xff]
        %v336 = vld [vmem:[#allocation3 + $0x48] sm:$0xff]
        %v337 = vld [vmem:[#allocation3 + $0x50] sm:$0xff]
        %v338 = vld [vmem:[#allocation3 + $0x58] sm:$0xff]
        %v339 = vld [vmem:[#allocation3 + $0x60] sm:$0xff]
        %v340 = vld [vmem:[#allocation3 + $0x68] sm:$0xff]
        %v341 = vld [vmem:[#allocation3 + $0x70] sm:$0xff]
        %v342 = vld [vmem:[#allocation3 + $0x78] sm:$0xff]
        %vm359 = vcmask 1046528
        %v360 = vrot.slane %v307, 1
        %v361 = vrot.slane %v308, 1
        %v362 = vsel %vm359, %v360, %v361
        %v363 = vrot.slane %v309, 1
        %v364 = vrot.slane %v310, 1
        %v365 = vsel %vm359, %v363, %v364
        %v366 = vrot.slane %v311, 1
        %v367 = vrot.slane %v312, 1
        %v368 = vsel %vm359, %v366, %v367
        %v369 = vrot.slane %v313, 1
        %v370 = vrot.slane %v314, 1
        %v371 = vsel %vm359, %v369, %v370
        %v372 = vrot.slane %v315, 1
        %v373 = vrot.slane %v316, 1
        %v374 = vsel %vm359, %v372, %v373
        %v375 = vrot.slane %v317, 1
        %v376 = vrot.slane %v318, 1
        %v377 = vsel %vm359, %v375, %v376
        %v378 = vrot.slane %v319, 1
        %v379 = vrot.slane %v320, 1
        %v380 = vsel %vm359, %v378, %v379
        %v381 = vrot.slane %v321, 1
        %v382 = vrot.slane %v322, 1
        %v383 = vsel %vm359, %v381, %v382
        %s392 = scalar_lea.vmem [#allocation3], 128
        %v393 = vld [vmem:[%s392] sm:$0xff]
        %v394 = vld [vmem:[%s392 + $0x8] sm:$0xff]
        %v395 = vld [vmem:[%s392 + $0x10] sm:$0xff]
        %v396 = vld [vmem:[%s392 + $0x18] sm:$0xff]
        %v397 = vld [vmem:[%s392 + $0x20] sm:$0xff]
        %v398 = vld [vmem:[%s392 + $0x28] sm:$0xff]
        %v399 = vld [vmem:[%s392 + $0x30] sm:$0xff]
        %v400 = vld [vmem:[%s392 + $0x38] sm:$0xff]
        %v401 = vld [vmem:[%s392 + $0x40] sm:$0xff]
        %v402 = vld [vmem:[%s392 + $0x48] sm:$0xff]
        %v403 = vld [vmem:[%s392 + $0x50] sm:$0xff]
        %v404 = vld [vmem:[%s392 + $0x58] sm:$0xff]
        %v405 = vld [vmem:[%s392 + $0x60] sm:$0xff]
        %v406 = vld [vmem:[%s392 + $0x68] sm:$0xff]
        %v407 = vld [vmem:[%s392 + $0x70] sm:$0xff]
        %v408 = vld [vmem:[%s392 + $0x78] sm:$0xff]
        %409 = vmatprep.subr.mxu0 0.0
        %410 = vmatpush1.msra.mxu0 %v408
        %411 = vmatprep.subr.mxu0 0.0
        %412 = vmatpush1.msra.mxu0 %v407
        %413 = vmatprep.subr.mxu0 0.0
        %414 = vmatpush1.msra.mxu0 %v406
        %415 = vmatprep.subr.mxu0 0.0
        %416 = vmatpush1.msra.mxu0 %v405
        %417 = vmatprep.subr.mxu0 0.0
        %418 = vmatpush1.msra.mxu0 %v404
        %419 = vmatprep.subr.mxu0 0.0
        %420 = vmatpush1.msra.mxu0 %v403
        %421 = vmatprep.subr.mxu0 0.0
        %422 = vmatpush1.msra.mxu0 %v402
        %423 = vmatprep.subr.mxu0 0.0
        %424 = vmatpush1.msra.mxu0 %v401
        %425 = vmatprep.subr.mxu0 0.0
        %426 = vmatpush1.msra.mxu0 %v400
        %427 = vmatprep.subr.mxu0 0.0
        %428 = vmatpush1.msra.mxu0 %v399
        %429 = vmatprep.subr.mxu0 0.0
        %430 = vmatpush1.msra.mxu0 %v398
        %431 = vmatprep.subr.mxu0 0.0
        %432 = vmatpush1.msra.mxu0 %v397
        %433 = vmatprep.subr.mxu0 0.0
        %434 = vmatpush1.msra.mxu0 %v396
        %435 = vmatprep.subr.mxu0 0.0
        %436 = vmatpush1.msra.mxu0 %v395
        %437 = vmatprep.subr.mxu0 0.0
        %438 = vmatpush1.msra.mxu0 %v394
        %439 = vmatprep.subr.mxu0 0.0
        %440 = vmatpush1.msra.mxu0 %v393
        %441 = vmatprep.subr.mxu0 0.0
        %442 = vmatpush2.msra.mxu0 0.0
        %443 = vmatprep.subr.mxu0 0.0
        %444 = vmatpush2.msra.mxu0 0.0
        %445 = vmatprep.subr.mxu0 0.0
        %446 = vmatpush2.msra.mxu0 0.0
        %447 = vmatprep.subr.mxu0 0.0
        %448 = vmatpush2.msra.mxu0 0.0
        %449 = vmatprep.subr.mxu0 0.0
        %450 = vmatpush2.msra.mxu0 0.0
        %451 = vmatprep.subr.mxu0 0.0
        %452 = vmatpush2.msra.mxu0 0.0
        %453 = vmatprep.subr.mxu0 0.0
        %454 = vmatpush2.msra.mxu0 0.0
        %455 = vmatprep.subr.mxu0 0.0
        %456 = vmatpush2.msra.mxu0 0.0
        %457 = vmatprep.subr.mxu0 0.0
        %458 = vmatpush2.msra.mxu0 0.0
        %459 = vmatprep.subr.mxu0 0.0
        %460 = vmatpush2.msra.mxu0 0.0
        %461 = vmatprep.subr.mxu0 0.0
        %462 = vmatpush2.msra.mxu0 0.0
        %463 = vmatprep.subr.mxu0 0.0
        %464 = vmatpush2.msra.mxu0 0.0
        %465 = vmatprep.subr.mxu0 0.0
        %466 = vmatpush2.msra.mxu0 0.0
        %467 = vmatprep.subr.mxu0 0.0
        %468 = vmatpush2.msra.mxu0 0.0
        %469 = vmatprep.subr.mxu0 0.0
        %470 = vmatpush2.msra.mxu0 0.0
        %471 = vmatprep.subr.mxu0 0.0
        %472 = vmatpush2.msra.mxu0 0.0
        %473 = vmatprep.mubr.f32.mxu0 0.0
        %474 = vmatmul.mubr.f32.gmra.mxu0 %v362
        %v475 = vpop.f32.mrf.mxu0
        %v476 = vadd.f32 0.0, %v475
        %v477 = vpop.f32.mrf.mxu0
        %478 = vmatprep.mubr.f32.mxu0 0.0
        %479 = vmatmul.mubr.f32.gmra.mxu0 %v365
        %v480 = vpop.f32.mrf.mxu0
        %v481 = vadd.f32 0.0, %v480
        %v482 = vpop.f32.mrf.mxu0
        %483 = vmatprep.mubr.f32.mxu0 0.0
        %484 = vmatmul.mubr.f32.gmra.mxu0 %v368
        %v485 = vpop.f32.mrf.mxu0
        %v486 = vadd.f32 0.0, %v485
        %v487 = vpop.f32.mrf.mxu0
        %488 = vmatprep.mubr.f32.mxu0 0.0
        %489 = vmatmul.mubr.f32.gmra.mxu0 %v371
        %v490 = vpop.f32.mrf.mxu0
        %v491 = vadd.f32 0.0, %v490
        %v492 = vpop.f32.mrf.mxu0
        %493 = vmatprep.mubr.f32.mxu0 0.0
        %494 = vmatmul.mubr.f32.gmra.mxu0 %v374
        %v495 = vpop.f32.mrf.mxu0
        %v496 = vadd.f32 0.0, %v495
        %v497 = vpop.f32.mrf.mxu0
        %498 = vmatprep.mubr.f32.mxu0 0.0
        %499 = vmatmul.mubr.f32.gmra.mxu0 %v377
        %v500 = vpop.f32.mrf.mxu0
        %v501 = vadd.f32 0.0, %v500
        %v502 = vpop.f32.mrf.mxu0
        %503 = vmatprep.mubr.f32.mxu0 0.0
        %504 = vmatmul.mubr.f32.gmra.mxu0 %v380
        %v505 = vpop.f32.mrf.mxu0
        %v506 = vadd.f32 0.0, %v505
        %v507 = vpop.f32.mrf.mxu0
        %508 = vmatprep.mubr.f32.mxu0 0.0
        %509 = vmatmul.mubr.f32.gmra.mxu0 %v383
        %v510 = vpop.f32.mrf.mxu0
        %v511 = vadd.f32 0.0, %v510
        %v512 = vpop.f32.mrf.mxu0
        %513 = vdwg.mxu0
        %514 = vmatprep.subr.mxu0 0.0
        %515 = vmatpush1.msra.mxu0 %v342
        %516 = vmatprep.subr.mxu0 0.0
        %517 = vmatpush1.msra.mxu0 %v341
        %518 = vmatprep.subr.mxu0 0.0
        %519 = vmatpush1.msra.mxu0 %v340
        %520 = vmatprep.subr.mxu0 0.0
        %521 = vmatpush1.msra.mxu0 %v339
        %522 = vmatprep.subr.mxu0 0.0
        %523 = vmatpush1.msra.mxu0 %v338
        %524 = vmatprep.subr.mxu0 0.0
        %525 = vmatpush1.msra.mxu0 %v337
        %526 = vmatprep.subr.mxu0 0.0
        %527 = vmatpush1.msra.mxu0 %v336
        %528 = vmatprep.subr.mxu0 0.0
        %529 = vmatpush1.msra.mxu0 %v335
        %530 = vmatprep.subr.mxu0 0.0
        %531 = vmatpush1.msra.mxu0 %v334
        %532 = vmatprep.subr.mxu0 0.0
        %533 = vmatpush1.msra.mxu0 %v333
        %534 = vmatprep.subr.mxu0 0.0
        %535 = vmatpush1.msra.mxu0 %v332
        %536 = vmatprep.subr.mxu0 0.0
        %537 = vmatpush1.msra.mxu0 %v331
        %538 = vmatprep.subr.mxu0 0.0
        %539 = vmatpush1.msra.mxu0 %v330
        %540 = vmatprep.subr.mxu0 0.0
        %541 = vmatpush1.msra.mxu0 %v329
        %542 = vmatprep.subr.mxu0 0.0
        %543 = vmatpush1.msra.mxu0 %v328
        %544 = vmatprep.subr.mxu0 0.0
        %545 = vmatpush1.msra.mxu0 %v327
        %546 = vmatprep.subr.mxu0 0.0
        %547 = vmatpush2.msra.mxu0 0.0
        %548 = vmatprep.subr.mxu0 0.0
        %549 = vmatpush2.msra.mxu0 0.0
        %550 = vmatprep.subr.mxu0 0.0
        %551 = vmatpush2.msra.mxu0 0.0
        %552 = vmatprep.subr.mxu0 0.0
        %553 = vmatpush2.msra.mxu0 0.0
        %554 = vmatprep.subr.mxu0 0.0
        %555 = vmatpush2.msra.mxu0 0.0
        %556 = vmatprep.subr.mxu0 0.0
        %557 = vmatpush2.msra.mxu0 0.0
        %558 = vmatprep.subr.mxu0 0.0
        %559 = vmatpush2.msra.mxu0 0.0
        %560 = vmatprep.subr.mxu0 0.0
        %561 = vmatpush2.msra.mxu0 0.0
        %562 = vmatprep.subr.mxu0 0.0
        %563 = vmatpush2.msra.mxu0 0.0
        %564 = vmatprep.subr.mxu0 0.0
        %565 = vmatpush2.msra.mxu0 0.0
        %566 = vmatprep.subr.mxu0 0.0
        %567 = vmatpush2.msra.mxu0 0.0
        %568 = vmatprep.subr.mxu0 0.0
        %569 = vmatpush2.msra.mxu0 0.0
        %570 = vmatprep.subr.mxu0 0.0
        %571 = vmatpush2.msra.mxu0 0.0
        %572 = vmatprep.subr.mxu0 0.0
        %573 = vmatpush2.msra.mxu0 0.0
        %574 = vmatprep.subr.mxu0 0.0
        %575 = vmatpush2.msra.mxu0 0.0
        %576 = vmatprep.subr.mxu0 0.0
        %577 = vmatpush2.msra.mxu0 0.0
        %578 = vmatprep.mubr.f32.mxu0 0.0
        %579 = vmatmul.mubr.f32.gmra.mxu0 %v307
        %v580 = vpop.f32.mrf.mxu0
        %v581 = vadd.f32 %v476, %v580
        %v582 = vpop.f32.mrf.mxu0
        %583 = vmatprep.mubr.f32.mxu0 0.0
        %584 = vmatmul.mubr.f32.gmra.mxu0 %v309
        %v585 = vpop.f32.mrf.mxu0
        %v586 = vadd.f32 %v481, %v585
        %v587 = vpop.f32.mrf.mxu0
        %588 = vmatprep.mubr.f32.mxu0 0.0
        %589 = vmatmul.mubr.f32.gmra.mxu0 %v311
        %v590 = vpop.f32.mrf.mxu0
        %v591 = vadd.f32 %v486, %v590
        %v592 = vpop.f32.mrf.mxu0
        %593 = vmatprep.mubr.f32.mxu0 0.0
        %594 = vmatmul.mubr.f32.gmra.mxu0 %v313
        %v595 = vpop.f32.mrf.mxu0
        %v596 = vadd.f32 %v491, %v595
        %v597 = vpop.f32.mrf.mxu0
        %598 = vmatprep.mubr.f32.mxu0 0.0
        %599 = vmatmul.mubr.f32.gmra.mxu0 %v315
        %v600 = vpop.f32.mrf.mxu0
        %v601 = vadd.f32 %v496, %v600
        %v602 = vpop.f32.mrf.mxu0
        %603 = vmatprep.mubr.f32.mxu0 0.0
        %604 = vmatmul.mubr.f32.gmra.mxu0 %v317
        %v605 = vpop.f32.mrf.mxu0
        %v606 = vadd.f32 %v501, %v605
        %v607 = vpop.f32.mrf.mxu0
        %608 = vmatprep.mubr.f32.mxu0 0.0
        %609 = vmatmul.mubr.f32.gmra.mxu0 %v319
        %v610 = vpop.f32.mrf.mxu0
        %v611 = vadd.f32 %v506, %v610
        %v612 = vpop.f32.mrf.mxu0
        %613 = vmatprep.mubr.f32.mxu0 0.0
        %614 = vmatmul.mubr.f32.gmra.mxu0 %v321
        %v615 = vpop.f32.mrf.mxu0
        %v616 = vadd.f32 %v511, %v615
        %v617 = vpop.f32.mrf.mxu0
        %618 = vdwg.mxu0
        %vm619 = vcmask 1045504
        %v620 = vrot.slane %v307, 2
        %v621 = vrot.slane %v308, 2
        %v622 = vsel %vm619, %v620, %v621
        %v623 = vrot.slane %v309, 2
        %v624 = vrot.slane %v310, 2
        %v625 = vsel %vm619, %v623, %v624
        %v626 = vrot.slane %v311, 2
        %v627 = vrot.slane %v312, 2
        %v628 = vsel %vm619, %v626, %v627
        %v629 = vrot.slane %v313, 2
        %v630 = vrot.slane %v314, 2
        %v631 = vsel %vm619, %v629, %v630
        %v632 = vrot.slane %v315, 2
        %v633 = vrot.slane %v316, 2
        %v634 = vsel %vm619, %v632, %v633
        %v635 = vrot.slane %v317, 2
        %v636 = vrot.slane %v318, 2
        %v637 = vsel %vm619, %v635, %v636
        %v638 = vrot.slane %v319, 2
        %v639 = vrot.slane %v320, 2
        %v640 = vsel %vm619, %v638, %v639
        %v641 = vrot.slane %v321, 2
        %v642 = vrot.slane %v322, 2
        %v643 = vsel %vm619, %v641, %v642
        %s652 = scalar_lea.vmem [#allocation3], 256
        %v653 = vld [vmem:[%s652] sm:$0xff]
        %v654 = vld [vmem:[%s652 + $0x8] sm:$0xff]
        %v655 = vld [vmem:[%s652 + $0x10] sm:$0xff]
        %v656 = vld [vmem:[%s652 + $0x18] sm:$0xff]
        %v657 = vld [vmem:[%s652 + $0x20] sm:$0xff]
        %v658 = vld [vmem:[%s652 + $0x28] sm:$0xff]
        %v659 = vld [vmem:[%s652 + $0x30] sm:$0xff]
        %v660 = vld [vmem:[%s652 + $0x38] sm:$0xff]
        %v661 = vld [vmem:[%s652 + $0x40] sm:$0xff]
        %v662 = vld [vmem:[%s652 + $0x48] sm:$0xff]
        %v663 = vld [vmem:[%s652 + $0x50] sm:$0xff]
        %v664 = vld [vmem:[%s652 + $0x58] sm:$0xff]
        %v665 = vld [vmem:[%s652 + $0x60] sm:$0xff]
        %v666 = vld [vmem:[%s652 + $0x68] sm:$0xff]
        %v667 = vld [vmem:[%s652 + $0x70] sm:$0xff]
        %v668 = vld [vmem:[%s652 + $0x78] sm:$0xff]
        %669 = vmatprep.subr.mxu0 0.0
        %670 = vmatpush1.msra.mxu0 %v668
        %671 = vmatprep.subr.mxu0 0.0
        %672 = vmatpush1.msra.mxu0 %v667
        %673 = vmatprep.subr.mxu0 0.0
        %674 = vmatpush1.msra.mxu0 %v666
        %675 = vmatprep.subr.mxu0 0.0
        %676 = vmatpush1.msra.mxu0 %v665
        %677 = vmatprep.subr.mxu0 0.0
        %678 = vmatpush1.msra.mxu0 %v664
        %679 = vmatprep.subr.mxu0 0.0
        %680 = vmatpush1.msra.mxu0 %v663
        %681 = vmatprep.subr.mxu0 0.0
        %682 = vmatpush1.msra.mxu0 %v662
        %683 = vmatprep.subr.mxu0 0.0
        %684 = vmatpush1.msra.mxu0 %v661
        %685 = vmatprep.subr.mxu0 0.0
        %686 = vmatpush1.msra.mxu0 %v660
        %687 = vmatprep.subr.mxu0 0.0
        %688 = vmatpush1.msra.mxu0 %v659
        %689 = vmatprep.subr.mxu0 0.0
        %690 = vmatpush1.msra.mxu0 %v658
        %691 = vmatprep.subr.mxu0 0.0
        %692 = vmatpush1.msra.mxu0 %v657
        %693 = vmatprep.subr.mxu0 0.0
        %694 = vmatpush1.msra.mxu0 %v656
        %695 = vmatprep.subr.mxu0 0.0
        %696 = vmatpush1.msra.mxu0 %v655
        %697 = vmatprep.subr.mxu0 0.0
        %698 = vmatpush1.msra.mxu0 %v654
        %699 = vmatprep.subr.mxu0 0.0
        %700 = vmatpush1.msra.mxu0 %v653
        %701 = vmatprep.subr.mxu0 0.0
        %702 = vmatpush2.msra.mxu0 0.0
        %703 = vmatprep.subr.mxu0 0.0
        %704 = vmatpush2.msra.mxu0 0.0
        %705 = vmatprep.subr.mxu0 0.0
        %706 = vmatpush2.msra.mxu0 0.0
        %707 = vmatprep.subr.mxu0 0.0
        %708 = vmatpush2.msra.mxu0 0.0
        %709 = vmatprep.subr.mxu0 0.0
        %710 = vmatpush2.msra.mxu0 0.0
        %711 = vmatprep.subr.mxu0 0.0
        %712 = vmatpush2.msra.mxu0 0.0
        %713 = vmatprep.subr.mxu0 0.0
        %714 = vmatpush2.msra.mxu0 0.0
        %715 = vmatprep.subr.mxu0 0.0
        %716 = vmatpush2.msra.mxu0 0.0
        %717 = vmatprep.subr.mxu0 0.0
        %718 = vmatpush2.msra.mxu0 0.0
        %719 = vmatprep.subr.mxu0 0.0
        %720 = vmatpush2.msra.mxu0 0.0
        %721 = vmatprep.subr.mxu0 0.0
        %722 = vmatpush2.msra.mxu0 0.0
        %723 = vmatprep.subr.mxu0 0.0
        %724 = vmatpush2.msra.mxu0 0.0
        %725 = vmatprep.subr.mxu0 0.0
        %726 = vmatpush2.msra.mxu0 0.0
        %727 = vmatprep.subr.mxu0 0.0
        %728 = vmatpush2.msra.mxu0 0.0
        %729 = vmatprep.subr.mxu0 0.0
        %730 = vmatpush2.msra.mxu0 0.0
        %731 = vmatprep.subr.mxu0 0.0
        %732 = vmatpush2.msra.mxu0 0.0
        %733 = vmatprep.mubr.f32.mxu0 0.0
        %734 = vmatmul.mubr.f32.gmra.mxu0 %v622
        %v735 = vpop.f32.mrf.mxu0
        %v736 = vadd.f32 0.0, %v735
        %v737 = vpop.f32.mrf.mxu0
        %738 = vmatprep.mubr.f32.mxu0 0.0
        %739 = vmatmul.mubr.f32.gmra.mxu0 %v625
        %v740 = vpop.f32.mrf.mxu0
        %v741 = vadd.f32 0.0, %v740
        %v742 = vpop.f32.mrf.mxu0
        %743 = vmatprep.mubr.f32.mxu0 0.0
        %744 = vmatmul.mubr.f32.gmra.mxu0 %v628
        %v745 = vpop.f32.mrf.mxu0
        %v746 = vadd.f32 0.0, %v745
        %v747 = vpop.f32.mrf.mxu0
        %748 = vmatprep.mubr.f32.mxu0 0.0
        %749 = vmatmul.mubr.f32.gmra.mxu0 %v631
        %v750 = vpop.f32.mrf.mxu0
        %v751 = vadd.f32 0.0, %v750
        %v752 = vpop.f32.mrf.mxu0
        %753 = vmatprep.mubr.f32.mxu0 0.0
        %754 = vmatmul.mubr.f32.gmra.mxu0 %v634
        %v755 = vpop.f32.mrf.mxu0
        %v756 = vadd.f32 0.0, %v755
        %v757 = vpop.f32.mrf.mxu0
        %758 = vmatprep.mubr.f32.mxu0 0.0
        %759 = vmatmul.mubr.f32.gmra.mxu0 %v637
        %v760 = vpop.f32.mrf.mxu0
        %v761 = vadd.f32 0.0, %v760
        %v762 = vpop.f32.mrf.mxu0
        %763 = vmatprep.mubr.f32.mxu0 0.0
        %764 = vmatmul.mubr.f32.gmra.mxu0 %v640
        %v765 = vpop.f32.mrf.mxu0
        %v766 = vadd.f32 0.0, %v765
        %v767 = vpop.f32.mrf.mxu0
        %768 = vmatprep.mubr.f32.mxu0 0.0
        %769 = vmatmul.mubr.f32.gmra.mxu0 %v643
        %v770 = vpop.f32.mrf.mxu0
        %v771 = vadd.f32 0.0, %v770
        %v772 = vpop.f32.mrf.mxu0
        %773 = vdwg.mxu0
        %v774 = vadd.f32 %v581, %v736
        %v775 = vadd.f32 %v586, %v741
        %v776 = vadd.f32 %v591, %v746
        %v777 = vadd.f32 %v596, %v751
        %v778 = vadd.f32 %v601, %v756
        %v779 = vadd.f32 %v606, %v761
        %v780 = vadd.f32 %v611, %v766
        %v781 = vadd.f32 %v616, %v771
        %s782 = scalar_lea.vmem [#allocation3], 384
        %v783 = vld [vmem:[%s782] sm:$0xff]
        %v784 = vld [vmem:[%s782 + $0x8] sm:$0xff]
        %v785 = vld [vmem:[%s782 + $0x10] sm:$0xff]
        %v786 = vld [vmem:[%s782 + $0x18] sm:$0xff]
        %v787 = vld [vmem:[%s782 + $0x20] sm:$0xff]
        %v788 = vld [vmem:[%s782 + $0x28] sm:$0xff]
        %v789 = vld [vmem:[%s782 + $0x30] sm:$0xff]
        %v790 = vld [vmem:[%s782 + $0x38] sm:$0xff]
        %v791 = vld [vmem:[%s782 + $0x40] sm:$0xff]
        %v792 = vld [vmem:[%s782 + $0x48] sm:$0xff]
        %v793 = vld [vmem:[%s782 + $0x50] sm:$0xff]
        %v794 = vld [vmem:[%s782 + $0x58] sm:$0xff]
        %v795 = vld [vmem:[%s782 + $0x60] sm:$0xff]
        %v796 = vld [vmem:[%s782 + $0x68] sm:$0xff]
        %v797 = vld [vmem:[%s782 + $0x70] sm:$0xff]
        %v798 = vld [vmem:[%s782 + $0x78] sm:$0xff]
        %799 = vmatprep.subr.mxu0 0.0
        %800 = vmatpush1.msra.mxu0 %v798
        %801 = vmatprep.subr.mxu0 0.0
        %802 = vmatpush1.msra.mxu0 %v797
        %803 = vmatprep.subr.mxu0 0.0
        %804 = vmatpush1.msra.mxu0 %v796
        %805 = vmatprep.subr.mxu0 0.0
        %806 = vmatpush1.msra.mxu0 %v795
        %807 = vmatprep.subr.mxu0 0.0
        %808 = vmatpush1.msra.mxu0 %v794
        %809 = vmatprep.subr.mxu0 0.0
        %810 = vmatpush1.msra.mxu0 %v793
        %811 = vmatprep.subr.mxu0 0.0
        %812 = vmatpush1.msra.mxu0 %v792
        %813 = vmatprep.subr.mxu0 0.0
        %814 = vmatpush1.msra.mxu0 %v791
        %815 = vmatprep.subr.mxu0 0.0
        %816 = vmatpush1.msra.mxu0 %v790
        %817 = vmatprep.subr.mxu0 0.0
        %818 = vmatpush1.msra.mxu0 %v789
        %819 = vmatprep.subr.mxu0 0.0
        %820 = vmatpush1.msra.mxu0 %v788
        %821 = vmatprep.subr.mxu0 0.0
        %822 = vmatpush1.msra.mxu0 %v787
        %823 = vmatprep.subr.mxu0 0.0
        %824 = vmatpush1.msra.mxu0 %v786
        %825 = vmatprep.subr.mxu0 0.0
        %826 = vmatpush1.msra.mxu0 %v785
        %827 = vmatprep.subr.mxu0 0.0
        %828 = vmatpush1.msra.mxu0 %v784
        %829 = vmatprep.subr.mxu0 0.0
        %830 = vmatpush1.msra.mxu0 %v783
        %831 = vmatprep.subr.mxu0 0.0
        %832 = vmatpush2.msra.mxu0 0.0
        %833 = vmatprep.subr.mxu0 0.0
        %834 = vmatpush2.msra.mxu0 0.0
        %835 = vmatprep.subr.mxu0 0.0
        %836 = vmatpush2.msra.mxu0 0.0
        %837 = vmatprep.subr.mxu0 0.0
        %838 = vmatpush2.msra.mxu0 0.0
        %839 = vmatprep.subr.mxu0 0.0
        %840 = vmatpush2.msra.mxu0 0.0
        %841 = vmatprep.subr.mxu0 0.0
        %842 = vmatpush2.msra.mxu0 0.0
        %843 = vmatprep.subr.mxu0 0.0
        %844 = vmatpush2.msra.mxu0 0.0
        %845 = vmatprep.subr.mxu0 0.0
        %846 = vmatpush2.msra.mxu0 0.0
        %847 = vmatprep.subr.mxu0 0.0
        %848 = vmatpush2.msra.mxu0 0.0
        %849 = vmatprep.subr.mxu0 0.0
        %850 = vmatpush2.msra.mxu0 0.0
        %851 = vmatprep.subr.mxu0 0.0
        %852 = vmatpush2.msra.mxu0 0.0
        %853 = vmatprep.subr.mxu0 0.0
        %854 = vmatpush2.msra.mxu0 0.0
        %855 = vmatprep.subr.mxu0 0.0
        %856 = vmatpush2.msra.mxu0 0.0
        %857 = vmatprep.subr.mxu0 0.0
        %858 = vmatpush2.msra.mxu0 0.0
        %859 = vmatprep.subr.mxu0 0.0
        %860 = vmatpush2.msra.mxu0 0.0
        %861 = vmatprep.subr.mxu0 0.0
        %862 = vmatpush2.msra.mxu0 0.0
        %863 = vmatprep.mubr.f32.mxu0 0.0
        %864 = vmatmul.mubr.f32.gmra.mxu0 %v309
        %v865 = vpop.f32.mrf.mxu0
        %v866 = vadd.f32 0.0, %v865
        %v867 = vpop.f32.mrf.mxu0
        %868 = vmatprep.mubr.f32.mxu0 0.0
        %869 = vmatmul.mubr.f32.gmra.mxu0 %v311
        %v870 = vpop.f32.mrf.mxu0
        %v871 = vadd.f32 0.0, %v870
        %v872 = vpop.f32.mrf.mxu0
        %873 = vmatprep.mubr.f32.mxu0 0.0
        %874 = vmatmul.mubr.f32.gmra.mxu0 %v313
        %v875 = vpop.f32.mrf.mxu0
        %v876 = vadd.f32 0.0, %v875
        %v877 = vpop.f32.mrf.mxu0
        %878 = vmatprep.mubr.f32.mxu0 0.0
        %879 = vmatmul.mubr.f32.gmra.mxu0 %v315
        %v880 = vpop.f32.mrf.mxu0
        %v881 = vadd.f32 0.0, %v880
        %v882 = vpop.f32.mrf.mxu0
        %883 = vmatprep.mubr.f32.mxu0 0.0
        %884 = vmatmul.mubr.f32.gmra.mxu0 %v317
        %v885 = vpop.f32.mrf.mxu0
        %v886 = vadd.f32 0.0, %v885
        %v887 = vpop.f32.mrf.mxu0
        %888 = vmatprep.mubr.f32.mxu0 0.0
        %889 = vmatmul.mubr.f32.gmra.mxu0 %v319
        %v890 = vpop.f32.mrf.mxu0
        %v891 = vadd.f32 0.0, %v890
        %v892 = vpop.f32.mrf.mxu0
        %893 = vmatprep.mubr.f32.mxu0 0.0
        %894 = vmatmul.mubr.f32.gmra.mxu0 %v321
        %v895 = vpop.f32.mrf.mxu0
        %v896 = vadd.f32 0.0, %v895
        %v897 = vpop.f32.mrf.mxu0
        %898 = vmatprep.mubr.f32.mxu0 0.0
        %899 = vmatmul.mubr.f32.gmra.mxu0 %v323
        %v900 = vpop.f32.mrf.mxu0
        %v901 = vadd.f32 0.0, %v900
        %v902 = vpop.f32.mrf.mxu0
        %903 = vdwg.mxu0
        %v904 = vadd.f32 %v774, %v866
        %v905 = vadd.f32 %v775, %v871
        %v906 = vadd.f32 %v776, %v876
        %v907 = vadd.f32 %v777, %v881
        %v908 = vadd.f32 %v778, %v886
        %v909 = vadd.f32 %v779, %v891
        %v910 = vadd.f32 %v780, %v896
        %v911 = vadd.f32 %v781, %v901
        %v914 = vrot.slane %v323, 1
        %v915 = vrot.slane %v324, 1
        %v916 = vsel %vm359, %v914, %v915
        %s918 = scalar_lea.vmem [#allocation3], 512
        %v919 = vld [vmem:[%s918] sm:$0xff]
        %v920 = vld [vmem:[%s918 + $0x8] sm:$0xff]
        %v921 = vld [vmem:[%s918 + $0x10] sm:$0xff]
        %v922 = vld [vmem:[%s918 + $0x18] sm:$0xff]
        %v923 = vld [vmem:[%s918 + $0x20] sm:$0xff]
        %v924 = vld [vmem:[%s918 + $0x28] sm:$0xff]
        %v925 = vld [vmem:[%s918 + $0x30] sm:$0xff]
        %v926 = vld [vmem:[%s918 + $0x38] sm:$0xff]
        %v927 = vld [vmem:[%s918 + $0x40] sm:$0xff]
        %v928 = vld [vmem:[%s918 + $0x48] sm:$0xff]
        %v929 = vld [vmem:[%s918 + $0x50] sm:$0xff]
        %v930 = vld [vmem:[%s918 + $0x58] sm:$0xff]
        %v931 = vld [vmem:[%s918 + $0x60] sm:$0xff]
        %v932 = vld [vmem:[%s918 + $0x68] sm:$0xff]
        %v933 = vld [vmem:[%s918 + $0x70] sm:$0xff]
        %v934 = vld [vmem:[%s918 + $0x78] sm:$0xff]
        %935 = vmatprep.subr.mxu0 0.0
        %936 = vmatpush1.msra.mxu0 %v934
        %937 = vmatprep.subr.mxu0 0.0
        %938 = vmatpush1.msra.mxu0 %v933
        %939 = vmatprep.subr.mxu0 0.0
        %940 = vmatpush1.msra.mxu0 %v932
        %941 = vmatprep.subr.mxu0 0.0
        %942 = vmatpush1.msra.mxu0 %v931
        %943 = vmatprep.subr.mxu0 0.0
        %944 = vmatpush1.msra.mxu0 %v930
        %945 = vmatprep.subr.mxu0 0.0
        %946 = vmatpush1.msra.mxu0 %v929
        %947 = vmatprep.subr.mxu0 0.0
        %948 = vmatpush1.msra.mxu0 %v928
        %949 = vmatprep.subr.mxu0 0.0
        %950 = vmatpush1.msra.mxu0 %v927
        %951 = vmatprep.subr.mxu0 0.0
        %952 = vmatpush1.msra.mxu0 %v926
        %953 = vmatprep.subr.mxu0 0.0
        %954 = vmatpush1.msra.mxu0 %v925
        %955 = vmatprep.subr.mxu0 0.0
        %956 = vmatpush1.msra.mxu0 %v924
        %957 = vmatprep.subr.mxu0 0.0
        %958 = vmatpush1.msra.mxu0 %v923
        %959 = vmatprep.subr.mxu0 0.0
        %960 = vmatpush1.msra.mxu0 %v922
        %961 = vmatprep.subr.mxu0 0.0
        %962 = vmatpush1.msra.mxu0 %v921
        %963 = vmatprep.subr.mxu0 0.0
        %964 = vmatpush1.msra.mxu0 %v920
        %965 = vmatprep.subr.mxu0 0.0
        %966 = vmatpush1.msra.mxu0 %v919
        %967 = vmatprep.subr.mxu0 0.0
        %968 = vmatpush2.msra.mxu0 0.0
        %969 = vmatprep.subr.mxu0 0.0
        %970 = vmatpush2.msra.mxu0 0.0
        %971 = vmatprep.subr.mxu0 0.0
        %972 = vmatpush2.msra.mxu0 0.0
        %973 = vmatprep.subr.mxu0 0.0
        %974 = vmatpush2.msra.mxu0 0.0
        %975 = vmatprep.subr.mxu0 0.0
        %976 = vmatpush2.msra.mxu0 0.0
        %977 = vmatprep.subr.mxu0 0.0
        %978 = vmatpush2.msra.mxu0 0.0
        %979 = vmatprep.subr.mxu0 0.0
        %980 = vmatpush2.msra.mxu0 0.0
        %981 = vmatprep.subr.mxu0 0.0
        %982 = vmatpush2.msra.mxu0 0.0
        %983 = vmatprep.subr.mxu0 0.0
        %984 = vmatpush2.msra.mxu0 0.0
        %985 = vmatprep.subr.mxu0 0.0
        %986 = vmatpush2.msra.mxu0 0.0
        %987 = vmatprep.subr.mxu0 0.0
        %988 = vmatpush2.msra.mxu0 0.0
        %989 = vmatprep.subr.mxu0 0.0
        %990 = vmatpush2.msra.mxu0 0.0
        %991 = vmatprep.subr.mxu0 0.0
        %992 = vmatpush2.msra.mxu0 0.0
        %993 = vmatprep.subr.mxu0 0.0
        %994 = vmatpush2.msra.mxu0 0.0
        %995 = vmatprep.subr.mxu0 0.0
        %996 = vmatpush2.msra.mxu0 0.0
        %997 = vmatprep.subr.mxu0 0.0
        %998 = vmatpush2.msra.mxu0 0.0
        %999 = vmatprep.mubr.f32.mxu0 0.0
        %1000 = vmatmul.mubr.f32.gmra.mxu0 %v365
        %v1001 = vpop.f32.mrf.mxu0
        %v1002 = vadd.f32 0.0, %v1001
        %v1003 = vpop.f32.mrf.mxu0
        %1004 = vmatprep.mubr.f32.mxu0 0.0
        %1005 = vmatmul.mubr.f32.gmra.mxu0 %v368
        %v1006 = vpop.f32.mrf.mxu0
        %v1007 = vadd.f32 0.0, %v1006
        %v1008 = vpop.f32.mrf.mxu0
        %1009 = vmatprep.mubr.f32.mxu0 0.0
        %1010 = vmatmul.mubr.f32.gmra.mxu0 %v371
        %v1011 = vpop.f32.mrf.mxu0
        %v1012 = vadd.f32 0.0, %v1011
        %v1013 = vpop.f32.mrf.mxu0
        %1014 = vmatprep.mubr.f32.mxu0 0.0
        %1015 = vmatmul.mubr.f32.gmra.mxu0 %v374
        %v1016 = vpop.f32.mrf.mxu0
        %v1017 = vadd.f32 0.0, %v1016
        %v1018 = vpop.f32.mrf.mxu0
        %1019 = vmatprep.mubr.f32.mxu0 0.0
        %1020 = vmatmul.mubr.f32.gmra.mxu0 %v377
        %v1021 = vpop.f32.mrf.mxu0
        %v1022 = vadd.f32 0.0, %v1021
        %v1023 = vpop.f32.mrf.mxu0
        %1024 = vmatprep.mubr.f32.mxu0 0.0
        %1025 = vmatmul.mubr.f32.gmra.mxu0 %v380
        %v1026 = vpop.f32.mrf.mxu0
        %v1027 = vadd.f32 0.0, %v1026
        %v1028 = vpop.f32.mrf.mxu0
        %1029 = vmatprep.mubr.f32.mxu0 0.0
        %1030 = vmatmul.mubr.f32.gmra.mxu0 %v383
        %v1031 = vpop.f32.mrf.mxu0
        %v1032 = vadd.f32 0.0, %v1031
        %v1033 = vpop.f32.mrf.mxu0
        %1034 = vmatprep.mubr.f32.mxu0 0.0
        %1035 = vmatmul.mubr.f32.gmra.mxu0 %v916
        %v1036 = vpop.f32.mrf.mxu0
        %v1037 = vadd.f32 0.0, %v1036
        %v1038 = vpop.f32.mrf.mxu0
        %1039 = vdwg.mxu0
        %v1040 = vadd.f32 %v904, %v1002
        %v1041 = vadd.f32 %v905, %v1007
        %v1042 = vadd.f32 %v906, %v1012
        %v1043 = vadd.f32 %v907, %v1017
        %v1044 = vadd.f32 %v908, %v1022
        %v1045 = vadd.f32 %v909, %v1027
        %v1046 = vadd.f32 %v910, %v1032
        %v1047 = vadd.f32 %v911, %v1037
        %v1048 = vrot.slane %v323, 2
        %v1049 = vrot.slane %v324, 2
        %v1050 = vsel %vm619, %v1048, %v1049
        %s1052 = scalar_lea.vmem [#allocation3], 640
        %v1053 = vld [vmem:[%s1052] sm:$0xff]
        %v1054 = vld [vmem:[%s1052 + $0x8] sm:$0xff]
        %v1055 = vld [vmem:[%s1052 + $0x10] sm:$0xff]
        %v1056 = vld [vmem:[%s1052 + $0x18] sm:$0xff]
        %v1057 = vld [vmem:[%s1052 + $0x20] sm:$0xff]
        %v1058 = vld [vmem:[%s1052 + $0x28] sm:$0xff]
        %v1059 = vld [vmem:[%s1052 + $0x30] sm:$0xff]
        %v1060 = vld [vmem:[%s1052 + $0x38] sm:$0xff]
        %v1061 = vld [vmem:[%s1052 + $0x40] sm:$0xff]
        %v1062 = vld [vmem:[%s1052 + $0x48] sm:$0xff]
        %v1063 = vld [vmem:[%s1052 + $0x50] sm:$0xff]
        %v1064 = vld [vmem:[%s1052 + $0x58] sm:$0xff]
        %v1065 = vld [vmem:[%s1052 + $0x60] sm:$0xff]
        %v1066 = vld [vmem:[%s1052 + $0x68] sm:$0xff]
        %v1067 = vld [vmem:[%s1052 + $0x70] sm:$0xff]
        %v1068 = vld [vmem:[%s1052 + $0x78] sm:$0xff]
        %1069 = vmatprep.subr.mxu0 0.0
        %1070 = vmatpush1.msra.mxu0 %v1068
        %1071 = vmatprep.subr.mxu0 0.0
        %1072 = vmatpush1.msra.mxu0 %v1067
        %1073 = vmatprep.subr.mxu0 0.0
        %1074 = vmatpush1.msra.mxu0 %v1066
        %1075 = vmatprep.subr.mxu0 0.0
        %1076 = vmatpush1.msra.mxu0 %v1065
        %1077 = vmatprep.subr.mxu0 0.0
        %1078 = vmatpush1.msra.mxu0 %v1064
        %1079 = vmatprep.subr.mxu0 0.0
        %1080 = vmatpush1.msra.mxu0 %v1063
        %1081 = vmatprep.subr.mxu0 0.0
        %1082 = vmatpush1.msra.mxu0 %v1062
        %1083 = vmatprep.subr.mxu0 0.0
        %1084 = vmatpush1.msra.mxu0 %v1061
        %1085 = vmatprep.subr.mxu0 0.0
        %1086 = vmatpush1.msra.mxu0 %v1060
        %1087 = vmatprep.subr.mxu0 0.0
        %1088 = vmatpush1.msra.mxu0 %v1059
        %1089 = vmatprep.subr.mxu0 0.0
        %1090 = vmatpush1.msra.mxu0 %v1058
        %1091 = vmatprep.subr.mxu0 0.0
        %1092 = vmatpush1.msra.mxu0 %v1057
        %1093 = vmatprep.subr.mxu0 0.0
        %1094 = vmatpush1.msra.mxu0 %v1056
        %1095 = vmatprep.subr.mxu0 0.0
        %1096 = vmatpush1.msra.mxu0 %v1055
        %1097 = vmatprep.subr.mxu0 0.0
        %1098 = vmatpush1.msra.mxu0 %v1054
        %1099 = vmatprep.subr.mxu0 0.0
        %1100 = vmatpush1.msra.mxu0 %v1053
        %1101 = vmatprep.subr.mxu0 0.0
        %1102 = vmatpush2.msra.mxu0 0.0
        %1103 = vmatprep.subr.mxu0 0.0
        %1104 = vmatpush2.msra.mxu0 0.0
        %1105 = vmatprep.subr.mxu0 0.0
        %1106 = vmatpush2.msra.mxu0 0.0
        %1107 = vmatprep.subr.mxu0 0.0
        %1108 = vmatpush2.msra.mxu0 0.0
        %1109 = vmatprep.subr.mxu0 0.0
        %1110 = vmatpush2.msra.mxu0 0.0
        %1111 = vmatprep.subr.mxu0 0.0
        %1112 = vmatpush2.msra.mxu0 0.0
        %1113 = vmatprep.subr.mxu0 0.0
        %1114 = vmatpush2.msra.mxu0 0.0
        %1115 = vmatprep.subr.mxu0 0.0
        %1116 = vmatpush2.msra.mxu0 0.0
        %1117 = vmatprep.subr.mxu0 0.0
        %1118 = vmatpush2.msra.mxu0 0.0
        %1119 = vmatprep.subr.mxu0 0.0
        %1120 = vmatpush2.msra.mxu0 0.0
        %1121 = vmatprep.subr.mxu0 0.0
        %1122 = vmatpush2.msra.mxu0 0.0
        %1123 = vmatprep.subr.mxu0 0.0
        %1124 = vmatpush2.msra.mxu0 0.0
        %1125 = vmatprep.subr.mxu0 0.0
        %1126 = vmatpush2.msra.mxu0 0.0
        %1127 = vmatprep.subr.mxu0 0.0
        %1128 = vmatpush2.msra.mxu0 0.0
        %1129 = vmatprep.subr.mxu0 0.0
        %1130 = vmatpush2.msra.mxu0 0.0
        %1131 = vmatprep.subr.mxu0 0.0
        %1132 = vmatpush2.msra.mxu0 0.0
        %1133 = vmatprep.mubr.f32.mxu0 0.0
        %1134 = vmatmul.mubr.f32.gmra.mxu0 %v625
        %v1135 = vpop.f32.mrf.mxu0
        %v1136 = vadd.f32 0.0, %v1135
        %v1137 = vpop.f32.mrf.mxu0
        %1138 = vmatprep.mubr.f32.mxu0 0.0
        %1139 = vmatmul.mubr.f32.gmra.mxu0 %v628
        %v1140 = vpop.f32.mrf.mxu0
        %v1141 = vadd.f32 0.0, %v1140
        %v1142 = vpop.f32.mrf.mxu0
        %1143 = vmatprep.mubr.f32.mxu0 0.0
        %1144 = vmatmul.mubr.f32.gmra.mxu0 %v631
        %v1145 = vpop.f32.mrf.mxu0
        %v1146 = vadd.f32 0.0, %v1145
        %v1147 = vpop.f32.mrf.mxu0
        %1148 = vmatprep.mubr.f32.mxu0 0.0
        %1149 = vmatmul.mubr.f32.gmra.mxu0 %v634
        %v1150 = vpop.f32.mrf.mxu0
        %v1151 = vadd.f32 0.0, %v1150
        %v1152 = vpop.f32.mrf.mxu0
        %1153 = vmatprep.mubr.f32.mxu0 0.0
        %1154 = vmatmul.mubr.f32.gmra.mxu0 %v637
        %v1155 = vpop.f32.mrf.mxu0
        %v1156 = vadd.f32 0.0, %v1155
        %v1157 = vpop.f32.mrf.mxu0
        %1158 = vmatprep.mubr.f32.mxu0 0.0
        %1159 = vmatmul.mubr.f32.gmra.mxu0 %v640
        %v1160 = vpop.f32.mrf.mxu0
        %v1161 = vadd.f32 0.0, %v1160
        %v1162 = vpop.f32.mrf.mxu0
        %1163 = vmatprep.mubr.f32.mxu0 0.0
        %1164 = vmatmul.mubr.f32.gmra.mxu0 %v643
        %v1165 = vpop.f32.mrf.mxu0
        %v1166 = vadd.f32 0.0, %v1165
        %v1167 = vpop.f32.mrf.mxu0
        %1168 = vmatprep.mubr.f32.mxu0 0.0
        %1169 = vmatmul.mubr.f32.gmra.mxu0 %v1050
        %v1170 = vpop.f32.mrf.mxu0
        %v1171 = vadd.f32 0.0, %v1170
        %v1172 = vpop.f32.mrf.mxu0
        %1173 = vdwg.mxu0
        %v1174 = vadd.f32 %v1040, %v1136
        %v1175 = vadd.f32 %v1041, %v1141
        %v1176 = vadd.f32 %v1042, %v1146
        %v1177 = vadd.f32 %v1043, %v1151
        %v1178 = vadd.f32 %v1044, %v1156
        %v1179 = vadd.f32 %v1045, %v1161
        %v1180 = vadd.f32 %v1046, %v1166
        %v1181 = vadd.f32 %v1047, %v1171
        %s1182 = scalar_lea.vmem [#allocation3], 768
        %v1183 = vld [vmem:[%s1182] sm:$0xff]
        %v1184 = vld [vmem:[%s1182 + $0x8] sm:$0xff]
        %v1185 = vld [vmem:[%s1182 + $0x10] sm:$0xff]
        %v1186 = vld [vmem:[%s1182 + $0x18] sm:$0xff]
        %v1187 = vld [vmem:[%s1182 + $0x20] sm:$0xff]
        %v1188 = vld [vmem:[%s1182 + $0x28] sm:$0xff]
        %v1189 = vld [vmem:[%s1182 + $0x30] sm:$0xff]
        %v1190 = vld [vmem:[%s1182 + $0x38] sm:$0xff]
        %v1191 = vld [vmem:[%s1182 + $0x40] sm:$0xff]
        %v1192 = vld [vmem:[%s1182 + $0x48] sm:$0xff]
        %v1193 = vld [vmem:[%s1182 + $0x50] sm:$0xff]
        %v1194 = vld [vmem:[%s1182 + $0x58] sm:$0xff]
        %v1195 = vld [vmem:[%s1182 + $0x60] sm:$0xff]
        %v1196 = vld [vmem:[%s1182 + $0x68] sm:$0xff]
        %v1197 = vld [vmem:[%s1182 + $0x70] sm:$0xff]
        %v1198 = vld [vmem:[%s1182 + $0x78] sm:$0xff]
        %1199 = vmatprep.subr.mxu0 0.0
        %1200 = vmatpush1.msra.mxu0 %v1198
        %1201 = vmatprep.subr.mxu0 0.0
        %1202 = vmatpush1.msra.mxu0 %v1197
        %1203 = vmatprep.subr.mxu0 0.0
        %1204 = vmatpush1.msra.mxu0 %v1196
        %1205 = vmatprep.subr.mxu0 0.0
        %1206 = vmatpush1.msra.mxu0 %v1195
        %1207 = vmatprep.subr.mxu0 0.0
        %1208 = vmatpush1.msra.mxu0 %v1194
        %1209 = vmatprep.subr.mxu0 0.0
        %1210 = vmatpush1.msra.mxu0 %v1193
        %1211 = vmatprep.subr.mxu0 0.0
        %1212 = vmatpush1.msra.mxu0 %v1192
        %1213 = vmatprep.subr.mxu0 0.0
        %1214 = vmatpush1.msra.mxu0 %v1191
        %1215 = vmatprep.subr.mxu0 0.0
        %1216 = vmatpush1.msra.mxu0 %v1190
        %1217 = vmatprep.subr.mxu0 0.0
        %1218 = vmatpush1.msra.mxu0 %v1189
        %1219 = vmatprep.subr.mxu0 0.0
        %1220 = vmatpush1.msra.mxu0 %v1188
        %1221 = vmatprep.subr.mxu0 0.0
        %1222 = vmatpush1.msra.mxu0 %v1187
        %1223 = vmatprep.subr.mxu0 0.0
        %1224 = vmatpush1.msra.mxu0 %v1186
        %1225 = vmatprep.subr.mxu0 0.0
        %1226 = vmatpush1.msra.mxu0 %v1185
        %1227 = vmatprep.subr.mxu0 0.0
        %1228 = vmatpush1.msra.mxu0 %v1184
        %1229 = vmatprep.subr.mxu0 0.0
        %1230 = vmatpush1.msra.mxu0 %v1183
        %1231 = vmatprep.subr.mxu0 0.0
        %1232 = vmatpush2.msra.mxu0 0.0
        %1233 = vmatprep.subr.mxu0 0.0
        %1234 = vmatpush2.msra.mxu0 0.0
        %1235 = vmatprep.subr.mxu0 0.0
        %1236 = vmatpush2.msra.mxu0 0.0
        %1237 = vmatprep.subr.mxu0 0.0
        %1238 = vmatpush2.msra.mxu0 0.0
        %1239 = vmatprep.subr.mxu0 0.0
        %1240 = vmatpush2.msra.mxu0 0.0
        %1241 = vmatprep.subr.mxu0 0.0
        %1242 = vmatpush2.msra.mxu0 0.0
        %1243 = vmatprep.subr.mxu0 0.0
        %1244 = vmatpush2.msra.mxu0 0.0
        %1245 = vmatprep.subr.mxu0 0.0
        %1246 = vmatpush2.msra.mxu0 0.0
        %1247 = vmatprep.subr.mxu0 0.0
        %1248 = vmatpush2.msra.mxu0 0.0
        %1249 = vmatprep.subr.mxu0 0.0
        %1250 = vmatpush2.msra.mxu0 0.0
        %1251 = vmatprep.subr.mxu0 0.0
        %1252 = vmatpush2.msra.mxu0 0.0
        %1253 = vmatprep.subr.mxu0 0.0
        %1254 = vmatpush2.msra.mxu0 0.0
        %1255 = vmatprep.subr.mxu0 0.0
        %1256 = vmatpush2.msra.mxu0 0.0
        %1257 = vmatprep.subr.mxu0 0.0
        %1258 = vmatpush2.msra.mxu0 0.0
        %1259 = vmatprep.subr.mxu0 0.0
        %1260 = vmatpush2.msra.mxu0 0.0
        %1261 = vmatprep.subr.mxu0 0.0
        %1262 = vmatpush2.msra.mxu0 0.0
        %1263 = vmatprep.mubr.f32.mxu0 0.0
        %1264 = vmatmul.mubr.f32.gmra.mxu0 %v311
        %v1265 = vpop.f32.mrf.mxu0
        %v1266 = vadd.f32 0.0, %v1265
        %v1267 = vpop.f32.mrf.mxu0
        %1268 = vmatprep.mubr.f32.mxu0 0.0
        %1269 = vmatmul.mubr.f32.gmra.mxu0 %v313
        %v1270 = vpop.f32.mrf.mxu0
        %v1271 = vadd.f32 0.0, %v1270
        %v1272 = vpop.f32.mrf.mxu0
        %1273 = vmatprep.mubr.f32.mxu0 0.0
        %1274 = vmatmul.mubr.f32.gmra.mxu0 %v315
        %v1275 = vpop.f32.mrf.mxu0
        %v1276 = vadd.f32 0.0, %v1275
        %v1277 = vpop.f32.mrf.mxu0
        %1278 = vmatprep.mubr.f32.mxu0 0.0
        %1279 = vmatmul.mubr.f32.gmra.mxu0 %v317
        %v1280 = vpop.f32.mrf.mxu0
        %v1281 = vadd.f32 0.0, %v1280
        %v1282 = vpop.f32.mrf.mxu0
        %1283 = vmatprep.mubr.f32.mxu0 0.0
        %1284 = vmatmul.mubr.f32.gmra.mxu0 %v319
        %v1285 = vpop.f32.mrf.mxu0
        %v1286 = vadd.f32 0.0, %v1285
        %v1287 = vpop.f32.mrf.mxu0
        %1288 = vmatprep.mubr.f32.mxu0 0.0
        %1289 = vmatmul.mubr.f32.gmra.mxu0 %v321
        %v1290 = vpop.f32.mrf.mxu0
        %v1291 = vadd.f32 0.0, %v1290
        %v1292 = vpop.f32.mrf.mxu0
        %1293 = vmatprep.mubr.f32.mxu0 0.0
        %1294 = vmatmul.mubr.f32.gmra.mxu0 %v323
        %v1295 = vpop.f32.mrf.mxu0
        %v1296 = vadd.f32 0.0, %v1295
        %v1297 = vpop.f32.mrf.mxu0
        %1298 = vmatprep.mubr.f32.mxu0 0.0
        %1299 = vmatmul.mubr.f32.gmra.mxu0 %v325
        %v1300 = vpop.f32.mrf.mxu0
        %v1301 = vadd.f32 0.0, %v1300
        %v1302 = vpop.f32.mrf.mxu0
        %1303 = vdwg.mxu0
        %v1304 = vadd.f32 %v1174, %v1266
        %v1305 = vadd.f32 %v1175, %v1271
        %v1306 = vadd.f32 %v1176, %v1276
        %v1307 = vadd.f32 %v1177, %v1281
        %v1308 = vadd.f32 %v1178, %v1286
        %v1309 = vadd.f32 %v1179, %v1291
        %v1310 = vadd.f32 %v1180, %v1296
        %v1311 = vadd.f32 %v1181, %v1301
        %v1314 = vrot.slane %v325, 1
        %v1315 = vrot.slane %v326, 1
        %v1316 = vsel %vm359, %v1314, %v1315
        %s1318 = scalar_lea.vmem [#allocation3], 896
        %v1319 = vld [vmem:[%s1318] sm:$0xff]
        %v1320 = vld [vmem:[%s1318 + $0x8] sm:$0xff]
        %v1321 = vld [vmem:[%s1318 + $0x10] sm:$0xff]
        %v1322 = vld [vmem:[%s1318 + $0x18] sm:$0xff]
        %v1323 = vld [vmem:[%s1318 + $0x20] sm:$0xff]
        %v1324 = vld [vmem:[%s1318 + $0x28] sm:$0xff]
        %v1325 = vld [vmem:[%s1318 + $0x30] sm:$0xff]
        %v1326 = vld [vmem:[%s1318 + $0x38] sm:$0xff]
        %v1327 = vld [vmem:[%s1318 + $0x40] sm:$0xff]
        %v1328 = vld [vmem:[%s1318 + $0x48] sm:$0xff]
        %v1329 = vld [vmem:[%s1318 + $0x50] sm:$0xff]
        %v1330 = vld [vmem:[%s1318 + $0x58] sm:$0xff]
        %v1331 = vld [vmem:[%s1318 + $0x60] sm:$0xff]
        %v1332 = vld [vmem:[%s1318 + $0x68] sm:$0xff]
        %v1333 = vld [vmem:[%s1318 + $0x70] sm:$0xff]
        %v1334 = vld [vmem:[%s1318 + $0x78] sm:$0xff]
        %1335 = vmatprep.subr.mxu0 0.0
        %1336 = vmatpush1.msra.mxu0 %v1334
        %1337 = vmatprep.subr.mxu0 0.0
        %1338 = vmatpush1.msra.mxu0 %v1333
        %1339 = vmatprep.subr.mxu0 0.0
        %1340 = vmatpush1.msra.mxu0 %v1332
        %1341 = vmatprep.subr.mxu0 0.0
        %1342 = vmatpush1.msra.mxu0 %v1331
        %1343 = vmatprep.subr.mxu0 0.0
        %1344 = vmatpush1.msra.mxu0 %v1330
        %1345 = vmatprep.subr.mxu0 0.0
        %1346 = vmatpush1.msra.mxu0 %v1329
        %1347 = vmatprep.subr.mxu0 0.0
        %1348 = vmatpush1.msra.mxu0 %v1328
        %1349 = vmatprep.subr.mxu0 0.0
        %1350 = vmatpush1.msra.mxu0 %v1327
        %1351 = vmatprep.subr.mxu0 0.0
        %1352 = vmatpush1.msra.mxu0 %v1326
        %1353 = vmatprep.subr.mxu0 0.0
        %1354 = vmatpush1.msra.mxu0 %v1325
        %1355 = vmatprep.subr.mxu0 0.0
        %1356 = vmatpush1.msra.mxu0 %v1324
        %1357 = vmatprep.subr.mxu0 0.0
        %1358 = vmatpush1.msra.mxu0 %v1323
        %1359 = vmatprep.subr.mxu0 0.0
        %1360 = vmatpush1.msra.mxu0 %v1322
        %1361 = vmatprep.subr.mxu0 0.0
        %1362 = vmatpush1.msra.mxu0 %v1321
        %1363 = vmatprep.subr.mxu0 0.0
        %1364 = vmatpush1.msra.mxu0 %v1320
        %1365 = vmatprep.subr.mxu0 0.0
        %1366 = vmatpush1.msra.mxu0 %v1319
        %1367 = vmatprep.subr.mxu0 0.0
        %1368 = vmatpush2.msra.mxu0 0.0
        %1369 = vmatprep.subr.mxu0 0.0
        %1370 = vmatpush2.msra.mxu0 0.0
        %1371 = vmatprep.subr.mxu0 0.0
        %1372 = vmatpush2.msra.mxu0 0.0
        %1373 = vmatprep.subr.mxu0 0.0
        %1374 = vmatpush2.msra.mxu0 0.0
        %1375 = vmatprep.subr.mxu0 0.0
        %1376 = vmatpush2.msra.mxu0 0.0
        %1377 = vmatprep.subr.mxu0 0.0
        %1378 = vmatpush2.msra.mxu0 0.0
        %1379 = vmatprep.subr.mxu0 0.0
        %1380 = vmatpush2.msra.mxu0 0.0
        %1381 = vmatprep.subr.mxu0 0.0
        %1382 = vmatpush2.msra.mxu0 0.0
        %1383 = vmatprep.subr.mxu0 0.0
        %1384 = vmatpush2.msra.mxu0 0.0
        %1385 = vmatprep.subr.mxu0 0.0
        %1386 = vmatpush2.msra.mxu0 0.0
        %1387 = vmatprep.subr.mxu0 0.0
        %1388 = vmatpush2.msra.mxu0 0.0
        %1389 = vmatprep.subr.mxu0 0.0
        %1390 = vmatpush2.msra.mxu0 0.0
        %1391 = vmatprep.subr.mxu0 0.0
        %1392 = vmatpush2.msra.mxu0 0.0
        %1393 = vmatprep.subr.mxu0 0.0
        %1394 = vmatpush2.msra.mxu0 0.0
        %1395 = vmatprep.subr.mxu0 0.0
        %1396 = vmatpush2.msra.mxu0 0.0
        %1397 = vmatprep.subr.mxu0 0.0
        %1398 = vmatpush2.msra.mxu0 0.0
        %1399 = vmatprep.mubr.f32.mxu0 0.0
        %1400 = vmatmul.mubr.f32.gmra.mxu0 %v368
        %v1401 = vpop.f32.mrf.mxu0
        %v1402 = vadd.f32 0.0, %v1401
        %v1403 = vpop.f32.mrf.mxu0
        %1404 = vmatprep.mubr.f32.mxu0 0.0
        %1405 = vmatmul.mubr.f32.gmra.mxu0 %v371
        %v1406 = vpop.f32.mrf.mxu0
        %v1407 = vadd.f32 0.0, %v1406
        %v1408 = vpop.f32.mrf.mxu0
        %1409 = vmatprep.mubr.f32.mxu0 0.0
        %1410 = vmatmul.mubr.f32.gmra.mxu0 %v374
        %v1411 = vpop.f32.mrf.mxu0
        %v1412 = vadd.f32 0.0, %v1411
        %v1413 = vpop.f32.mrf.mxu0
        %1414 = vmatprep.mubr.f32.mxu0 0.0
        %1415 = vmatmul.mubr.f32.gmra.mxu0 %v377
        %v1416 = vpop.f32.mrf.mxu0
        %v1417 = vadd.f32 0.0, %v1416
        %v1418 = vpop.f32.mrf.mxu0
        %1419 = vmatprep.mubr.f32.mxu0 0.0
        %1420 = vmatmul.mubr.f32.gmra.mxu0 %v380
        %v1421 = vpop.f32.mrf.mxu0
        %v1422 = vadd.f32 0.0, %v1421
        %v1423 = vpop.f32.mrf.mxu0
        %1424 = vmatprep.mubr.f32.mxu0 0.0
        %1425 = vmatmul.mubr.f32.gmra.mxu0 %v383
        %v1426 = vpop.f32.mrf.mxu0
        %v1427 = vadd.f32 0.0, %v1426
        %v1428 = vpop.f32.mrf.mxu0
        %1429 = vmatprep.mubr.f32.mxu0 0.0
        %1430 = vmatmul.mubr.f32.gmra.mxu0 %v916
        %v1431 = vpop.f32.mrf.mxu0
        %v1432 = vadd.f32 0.0, %v1431
        %v1433 = vpop.f32.mrf.mxu0
        %1434 = vmatprep.mubr.f32.mxu0 0.0
        %1435 = vmatmul.mubr.f32.gmra.mxu0 %v1316
        %v1436 = vpop.f32.mrf.mxu0
        %v1437 = vadd.f32 0.0, %v1436
        %v1438 = vpop.f32.mrf.mxu0
        %1439 = vdwg.mxu0
        %v1440 = vadd.f32 %v1304, %v1402
        %v1441 = vadd.f32 %v1305, %v1407
        %v1442 = vadd.f32 %v1306, %v1412
        %v1443 = vadd.f32 %v1307, %v1417
        %v1444 = vadd.f32 %v1308, %v1422
        %v1445 = vadd.f32 %v1309, %v1427
        %v1446 = vadd.f32 %v1310, %v1432
        %v1447 = vadd.f32 %v1311, %v1437
        %v1448 = vrot.slane %v325, 2
        %v1449 = vrot.slane %v326, 2
        %v1450 = vsel %vm619, %v1448, %v1449
        %s1452 = scalar_lea.vmem [#allocation3], 1024
        %v1453 = vld [vmem:[%s1452] sm:$0xff]
        %v1454 = vld [vmem:[%s1452 + $0x8] sm:$0xff]
        %v1455 = vld [vmem:[%s1452 + $0x10] sm:$0xff]
        %v1456 = vld [vmem:[%s1452 + $0x18] sm:$0xff]
        %v1457 = vld [vmem:[%s1452 + $0x20] sm:$0xff]
        %v1458 = vld [vmem:[%s1452 + $0x28] sm:$0xff]
        %v1459 = vld [vmem:[%s1452 + $0x30] sm:$0xff]
        %v1460 = vld [vmem:[%s1452 + $0x38] sm:$0xff]
        %v1461 = vld [vmem:[%s1452 + $0x40] sm:$0xff]
        %v1462 = vld [vmem:[%s1452 + $0x48] sm:$0xff]
        %v1463 = vld [vmem:[%s1452 + $0x50] sm:$0xff]
        %v1464 = vld [vmem:[%s1452 + $0x58] sm:$0xff]
        %v1465 = vld [vmem:[%s1452 + $0x60] sm:$0xff]
        %v1466 = vld [vmem:[%s1452 + $0x68] sm:$0xff]
        %v1467 = vld [vmem:[%s1452 + $0x70] sm:$0xff]
        %v1468 = vld [vmem:[%s1452 + $0x78] sm:$0xff]
        %1469 = vmatprep.subr.mxu0 0.0
        %1470 = vmatpush1.msra.mxu0 %v1468
        %1471 = vmatprep.subr.mxu0 0.0
        %1472 = vmatpush1.msra.mxu0 %v1467
        %1473 = vmatprep.subr.mxu0 0.0
        %1474 = vmatpush1.msra.mxu0 %v1466
        %1475 = vmatprep.subr.mxu0 0.0
        %1476 = vmatpush1.msra.mxu0 %v1465
        %1477 = vmatprep.subr.mxu0 0.0
        %1478 = vmatpush1.msra.mxu0 %v1464
        %1479 = vmatprep.subr.mxu0 0.0
        %1480 = vmatpush1.msra.mxu0 %v1463
        %1481 = vmatprep.subr.mxu0 0.0
        %1482 = vmatpush1.msra.mxu0 %v1462
        %1483 = vmatprep.subr.mxu0 0.0
        %1484 = vmatpush1.msra.mxu0 %v1461
        %1485 = vmatprep.subr.mxu0 0.0
        %1486 = vmatpush1.msra.mxu0 %v1460
        %1487 = vmatprep.subr.mxu0 0.0
        %1488 = vmatpush1.msra.mxu0 %v1459
        %1489 = vmatprep.subr.mxu0 0.0
        %1490 = vmatpush1.msra.mxu0 %v1458
        %1491 = vmatprep.subr.mxu0 0.0
        %1492 = vmatpush1.msra.mxu0 %v1457
        %1493 = vmatprep.subr.mxu0 0.0
        %1494 = vmatpush1.msra.mxu0 %v1456
        %1495 = vmatprep.subr.mxu0 0.0
        %1496 = vmatpush1.msra.mxu0 %v1455
        %1497 = vmatprep.subr.mxu0 0.0
        %1498 = vmatpush1.msra.mxu0 %v1454
        %1499 = vmatprep.subr.mxu0 0.0
        %1500 = vmatpush1.msra.mxu0 %v1453
        %1501 = vmatprep.subr.mxu0 0.0
        %1502 = vmatpush2.msra.mxu0 0.0
        %1503 = vmatprep.subr.mxu0 0.0
        %1504 = vmatpush2.msra.mxu0 0.0
        %1505 = vmatprep.subr.mxu0 0.0
        %1506 = vmatpush2.msra.mxu0 0.0
        %1507 = vmatprep.subr.mxu0 0.0
        %1508 = vmatpush2.msra.mxu0 0.0
        %1509 = vmatprep.subr.mxu0 0.0
        %1510 = vmatpush2.msra.mxu0 0.0
        %1511 = vmatprep.subr.mxu0 0.0
        %1512 = vmatpush2.msra.mxu0 0.0
        %1513 = vmatprep.subr.mxu0 0.0
        %1514 = vmatpush2.msra.mxu0 0.0
        %1515 = vmatprep.subr.mxu0 0.0
        %1516 = vmatpush2.msra.mxu0 0.0
        %1517 = vmatprep.subr.mxu0 0.0
        %1518 = vmatpush2.msra.mxu0 0.0
        %1519 = vmatprep.subr.mxu0 0.0
        %1520 = vmatpush2.msra.mxu0 0.0
        %1521 = vmatprep.subr.mxu0 0.0
        %1522 = vmatpush2.msra.mxu0 0.0
        %1523 = vmatprep.subr.mxu0 0.0
        %1524 = vmatpush2.msra.mxu0 0.0
        %1525 = vmatprep.subr.mxu0 0.0
        %1526 = vmatpush2.msra.mxu0 0.0
        %1527 = vmatprep.subr.mxu0 0.0
        %1528 = vmatpush2.msra.mxu0 0.0
        %1529 = vmatprep.subr.mxu0 0.0
        %1530 = vmatpush2.msra.mxu0 0.0
        %1531 = vmatprep.subr.mxu0 0.0
        %1532 = vmatpush2.msra.mxu0 0.0
        %1533 = vmatprep.mubr.f32.mxu0 0.0
        %1534 = vmatmul.mubr.f32.gmra.mxu0 %v628
        %v1535 = vpop.f32.mrf.mxu0
        %v1536 = vadd.f32 0.0, %v1535
        %v1537 = vpop.f32.mrf.mxu0
        %1538 = vmatprep.mubr.f32.mxu0 0.0
        %1539 = vmatmul.mubr.f32.gmra.mxu0 %v631
        %v1540 = vpop.f32.mrf.mxu0
        %v1541 = vadd.f32 0.0, %v1540
        %v1542 = vpop.f32.mrf.mxu0
        %1543 = vmatprep.mubr.f32.mxu0 0.0
        %1544 = vmatmul.mubr.f32.gmra.mxu0 %v634
        %v1545 = vpop.f32.mrf.mxu0
        %v1546 = vadd.f32 0.0, %v1545
        %v1547 = vpop.f32.mrf.mxu0
        %1548 = vmatprep.mubr.f32.mxu0 0.0
        %1549 = vmatmul.mubr.f32.gmra.mxu0 %v637
        %v1550 = vpop.f32.mrf.mxu0
        %v1551 = vadd.f32 0.0, %v1550
        %v1552 = vpop.f32.mrf.mxu0
        %1553 = vmatprep.mubr.f32.mxu0 0.0
        %1554 = vmatmul.mubr.f32.gmra.mxu0 %v640
        %v1555 = vpop.f32.mrf.mxu0
        %v1556 = vadd.f32 0.0, %v1555
        %v1557 = vpop.f32.mrf.mxu0
        %1558 = vmatprep.mubr.f32.mxu0 0.0
        %1559 = vmatmul.mubr.f32.gmra.mxu0 %v643
        %v1560 = vpop.f32.mrf.mxu0
        %v1561 = vadd.f32 0.0, %v1560
        %v1562 = vpop.f32.mrf.mxu0
        %1563 = vmatprep.mubr.f32.mxu0 0.0
        %1564 = vmatmul.mubr.f32.gmra.mxu0 %v1050
        %v1565 = vpop.f32.mrf.mxu0
        %v1566 = vadd.f32 0.0, %v1565
        %v1567 = vpop.f32.mrf.mxu0
        %1568 = vmatprep.mubr.f32.mxu0 0.0
        %1569 = vmatmul.mubr.f32.gmra.mxu0 %v1450
        %v1570 = vpop.f32.mrf.mxu0
        %v1571 = vadd.f32 0.0, %v1570
        %v1572 = vpop.f32.mrf.mxu0
        %1573 = vdwg.mxu0
        %v1574 = vadd.f32 %v1440, %v1536
        %v1575 = vadd.f32 %v1441, %v1541
        %v1576 = vadd.f32 %v1442, %v1546
        %v1577 = vadd.f32 %v1443, %v1551
        %v1578 = vadd.f32 %v1444, %v1556
        %v1579 = vadd.f32 %v1445, %v1561
        %v1580 = vadd.f32 %v1446, %v1566
        %v1581 = vadd.f32 %v1447, %v1571
        %v1582 = vld [vmem:[%s2] sm:$0x1]
        %v1584 = vlaneseq
        %v1585 = vshrl.u32 %v1584, 7
        %v1586 = vsub.s32 0, %v1585
        %v1587 = vrot.slane %v1582, %v1586
        %v1589 = vmul.f32 %v1574, %v1587
        %v1590 = vmul.f32 %v1575, %v1587
        %v1591 = vmul.f32 %v1576, %v1587
        %v1592 = vmul.f32 %v1577, %v1587
        %v1593 = vmul.f32 %v1578, %v1587
        %v1594 = vmul.f32 %v1579, %v1587
        %v1595 = vmul.f32 %v1580, %v1587
        %v1596 = vmul.f32 %v1581, %v1587
        %v1597 = vld [vmem:[%s3] sm:$0x1]
        %v1599 = vlaneseq
        %v1600 = vshrl.u32 %v1599, 7
        %v1601 = vsub.s32 0, %v1600
        %v1602 = vrot.slane %v1597, %v1601
        %v1604 = vadd.f32 %v1589, %v1602
        %v1605 = vadd.f32 %v1590, %v1602
        %v1606 = vadd.f32 %v1591, %v1602
        %v1607 = vadd.f32 %v1592, %v1602
        %v1608 = vadd.f32 %v1593, %v1602
        %v1609 = vadd.f32 %v1594, %v1602
        %v1610 = vadd.f32 %v1595, %v1602
        %v1611 = vadd.f32 %v1596, %v1602
        %v1612 = vmax.f32 %v1604, 0.0
        %v1613 = vmax.f32 %v1605, 0.0
        %v1614 = vmax.f32 %v1606, 0.0
        %v1615 = vmax.f32 %v1607, 0.0
        %v1616 = vmax.f32 %v1608, 0.0
        %v1617 = vmax.f32 %v1609, 0.0
        %v1618 = vmax.f32 %v1610, 0.0
        %v1619 = vmax.f32 %v1611, 0.0
        %1620 = vst [vmem:[#allocation2] sm:$0xff] 0.0
        %1621 = vst [vmem:[#allocation2 + $0x8] sm:$0x3] 0.0
        %1622 = vst [vmem:[#allocation2 + $0x10] sm:$0xff] 0.0
        %1623 = vst [vmem:[#allocation2 + $0x18] sm:$0x3] 0.0
        %1624 = vst [vmem:[#allocation2 + $0x20] sm:$0xff] 0.0
        %1625 = vst [vmem:[#allocation2 + $0x28] sm:$0x3] 0.0
        %1626 = vst [vmem:[#allocation2 + $0x30] sm:$0xff] 0.0
        %1627 = vst [vmem:[#allocation2 + $0x38] sm:$0x3] 0.0
        %1628 = vst [vmem:[#allocation2 + $0x40] sm:$0xff] 0.0
        %1629 = vst [vmem:[#allocation2 + $0x48] sm:$0x3] 0.0
        %1630 = vst [vmem:[#allocation2 + $0x50] sm:$0xff] 0.0
        %1631 = vst [vmem:[#allocation2 + $0x58] sm:$0x3] 0.0
        %1632 = vst [vmem:[#allocation2 + $0x60] sm:$0xff] 0.0
        %1633 = vst [vmem:[#allocation2 + $0x68] sm:$0x3] 0.0
        %1634 = vst [vmem:[#allocation2 + $0x70] sm:$0xff] 0.0
        %1635 = vst [vmem:[#allocation2 + $0x78] sm:$0x3] 0.0
        %1636 = vst [vmem:[#allocation2 + $0x80] sm:$0xff] 0.0
        %1637 = vst [vmem:[#allocation2 + $0x88] sm:$0x3] 0.0
        %1638 = vst [vmem:[#allocation2 + $0x90] sm:$0xff] 0.0
        %1639 = vst [vmem:[#allocation2 + $0x98] sm:$0x3] 0.0
        %s1640 = scalar_lea.vmem [#allocation2], 16
        %1641 = vst [vmem:[%s1640 + $0x1] sm:$0xff] %v1612
        %1642 = vst [vmem:[%s1640 + $0x11] sm:$0xff] %v1613
        %1643 = vst [vmem:[%s1640 + $0x21] sm:$0xff] %v1614
        %1644 = vst [vmem:[%s1640 + $0x31] sm:$0xff] %v1615
        %1645 = vst [vmem:[%s1640 + $0x41] sm:$0xff] %v1616
        %1646 = vst [vmem:[%s1640 + $0x51] sm:$0xff] %v1617
        %1647 = vst [vmem:[%s1640 + $0x61] sm:$0xff] %v1618
        %1648 = vst [vmem:[%s1640 + $0x71] sm:$0xff] %v1619
        %v1649 = vld [vmem:[#allocation2] sm:$0xff]
        %v1650 = vld [vmem:[#allocation2 + $0x8] sm:$0x3]
        %v1651 = vld [vmem:[#allocation2 + $0x10] sm:$0xff]
        %v1652 = vld [vmem:[#allocation2 + $0x18] sm:$0x3]
        %v1653 = vld [vmem:[#allocation2 + $0x20] sm:$0xff]
        %v1654 = vld [vmem:[#allocation2 + $0x28] sm:$0x3]
        %v1655 = vld [vmem:[#allocation2 + $0x30] sm:$0xff]
        %v1656 = vld [vmem:[#allocation2 + $0x38] sm:$0x3]
        %v1657 = vld [vmem:[#allocation2 + $0x40] sm:$0xff]
        %v1658 = vld [vmem:[#allocation2 + $0x48] sm:$0x3]
        %v1659 = vld [vmem:[#allocation2 + $0x50] sm:$0xff]
        %v1660 = vld [vmem:[#allocation2 + $0x58] sm:$0x3]
        %v1661 = vld [vmem:[#allocation2 + $0x60] sm:$0xff]
        %v1662 = vld [vmem:[#allocation2 + $0x68] sm:$0x3]
        %v1663 = vld [vmem:[#allocation2 + $0x70] sm:$0xff]
        %v1664 = vld [vmem:[#allocation2 + $0x78] sm:$0x3]
        %v1665 = vld [vmem:[#allocation2 + $0x80] sm:$0xff]
        %v1666 = vld [vmem:[#allocation2 + $0x88] sm:$0x3]
        %v1667 = vld [vmem:[#allocation2 + $0x90] sm:$0xff]
        %v1668 = vld [vmem:[#allocation2 + $0x98] sm:$0x3]
        %v1669 = vld [vmem:[#allocation6] sm:$0xff]
        %v1670 = vld [vmem:[#allocation6 + $0x8] sm:$0xff]
        %v1671 = vld [vmem:[#allocation6 + $0x10] sm:$0xff]
        %v1672 = vld [vmem:[#allocation6 + $0x18] sm:$0xff]
        %v1673 = vld [vmem:[#allocation6 + $0x20] sm:$0xff]
        %v1674 = vld [vmem:[#allocation6 + $0x28] sm:$0xff]
        %v1675 = vld [vmem:[#allocation6 + $0x30] sm:$0xff]
        %v1676 = vld [vmem:[#allocation6 + $0x38] sm:$0xff]
        %v1677 = vld [vmem:[#allocation6 + $0x40] sm:$0xff]
        %v1678 = vld [vmem:[#allocation6 + $0x48] sm:$0xff]
        %v1679 = vld [vmem:[#allocation6 + $0x50] sm:$0xff]
        %v1680 = vld [vmem:[#allocation6 + $0x58] sm:$0xff]
        %v1681 = vld [vmem:[#allocation6 + $0x60] sm:$0xff]
        %v1682 = vld [vmem:[#allocation6 + $0x68] sm:$0xff]
        %v1683 = vld [vmem:[#allocation6 + $0x70] sm:$0xff]
        %v1684 = vld [vmem:[#allocation6 + $0x78] sm:$0xff]
        %v1701 = vrot.slane %v1649, 1
        %v1702 = vrot.slane %v1650, 1
        %v1703 = vsel %vm359, %v1701, %v1702
        %v1704 = vrot.slane %v1651, 1
        %v1705 = vrot.slane %v1652, 1
        %v1706 = vsel %vm359, %v1704, %v1705
        %v1707 = vrot.slane %v1653, 1
        %v1708 = vrot.slane %v1654, 1
        %v1709 = vsel %vm359, %v1707, %v1708
        %v1710 = vrot.slane %v1655, 1
        %v1711 = vrot.slane %v1656, 1
        %v1712 = vsel %vm359, %v1710, %v1711
        %v1713 = vrot.slane %v1657, 1
        %v1714 = vrot.slane %v1658, 1
        %v1715 = vsel %vm359, %v1713, %v1714
        %v1716 = vrot.slane %v1659, 1
        %v1717 = vrot.slane %v1660, 1
        %v1718 = vsel %vm359, %v1716, %v1717
        %v1719 = vrot.slane %v1661, 1
        %v1720 = vrot.slane %v1662, 1
        %v1721 = vsel %vm359, %v1719, %v1720
        %v1722 = vrot.slane %v1663, 1
        %v1723 = vrot.slane %v1664, 1
        %v1724 = vsel %vm359, %v1722, %v1723
        %s1733 = scalar_lea.vmem [#allocation6], 128
        %v1734 = vld [vmem:[%s1733] sm:$0xff]
        %v1735 = vld [vmem:[%s1733 + $0x8] sm:$0xff]
        %v1736 = vld [vmem:[%s1733 + $0x10] sm:$0xff]
        %v1737 = vld [vmem:[%s1733 + $0x18] sm:$0xff]
        %v1738 = vld [vmem:[%s1733 + $0x20] sm:$0xff]
        %v1739 = vld [vmem:[%s1733 + $0x28] sm:$0xff]
        %v1740 = vld [vmem:[%s1733 + $0x30] sm:$0xff]
        %v1741 = vld [vmem:[%s1733 + $0x38] sm:$0xff]
        %v1742 = vld [vmem:[%s1733 + $0x40] sm:$0xff]
        %v1743 = vld [vmem:[%s1733 + $0x48] sm:$0xff]
        %v1744 = vld [vmem:[%s1733 + $0x50] sm:$0xff]
        %v1745 = vld [vmem:[%s1733 + $0x58] sm:$0xff]
        %v1746 = vld [vmem:[%s1733 + $0x60] sm:$0xff]
        %v1747 = vld [vmem:[%s1733 + $0x68] sm:$0xff]
        %v1748 = vld [vmem:[%s1733 + $0x70] sm:$0xff]
        %v1749 = vld [vmem:[%s1733 + $0x78] sm:$0xff]
        %1750 = vmatprep.subr.mxu0 0.0
        %1751 = vmatpush1.msra.mxu0 %v1749
        %1752 = vmatprep.subr.mxu0 0.0
        %1753 = vmatpush1.msra.mxu0 %v1748
        %1754 = vmatprep.subr.mxu0 0.0
        %1755 = vmatpush1.msra.mxu0 %v1747
        %1756 = vmatprep.subr.mxu0 0.0
        %1757 = vmatpush1.msra.mxu0 %v1746
        %1758 = vmatprep.subr.mxu0 0.0
        %1759 = vmatpush1.msra.mxu0 %v1745
        %1760 = vmatprep.subr.mxu0 0.0
        %1761 = vmatpush1.msra.mxu0 %v1744
        %1762 = vmatprep.subr.mxu0 0.0
        %1763 = vmatpush1.msra.mxu0 %v1743
        %1764 = vmatprep.subr.mxu0 0.0
        %1765 = vmatpush1.msra.mxu0 %v1742
        %1766 = vmatprep.subr.mxu0 0.0
        %1767 = vmatpush1.msra.mxu0 %v1741
        %1768 = vmatprep.subr.mxu0 0.0
        %1769 = vmatpush1.msra.mxu0 %v1740
        %1770 = vmatprep.subr.mxu0 0.0
        %1771 = vmatpush1.msra.mxu0 %v1739
        %1772 = vmatprep.subr.mxu0 0.0
        %1773 = vmatpush1.msra.mxu0 %v1738
        %1774 = vmatprep.subr.mxu0 0.0
        %1775 = vmatpush1.msra.mxu0 %v1737
        %1776 = vmatprep.subr.mxu0 0.0
        %1777 = vmatpush1.msra.mxu0 %v1736
        %1778 = vmatprep.subr.mxu0 0.0
        %1779 = vmatpush1.msra.mxu0 %v1735
        %1780 = vmatprep.subr.mxu0 0.0
        %1781 = vmatpush1.msra.mxu0 %v1734
        %1782 = vmatprep.subr.mxu0 0.0
        %1783 = vmatpush2.msra.mxu0 0.0
        %1784 = vmatprep.subr.mxu0 0.0
        %1785 = vmatpush2.msra.mxu0 0.0
        %1786 = vmatprep.subr.mxu0 0.0
        %1787 = vmatpush2.msra.mxu0 0.0
        %1788 = vmatprep.subr.mxu0 0.0
        %1789 = vmatpush2.msra.mxu0 0.0
        %1790 = vmatprep.subr.mxu0 0.0
        %1791 = vmatpush2.msra.mxu0 0.0
        %1792 = vmatprep.subr.mxu0 0.0
        %1793 = vmatpush2.msra.mxu0 0.0
        %1794 = vmatprep.subr.mxu0 0.0
        %1795 = vmatpush2.msra.mxu0 0.0
        %1796 = vmatprep.subr.mxu0 0.0
        %1797 = vmatpush2.msra.mxu0 0.0
        %1798 = vmatprep.subr.mxu0 0.0
        %1799 = vmatpush2.msra.mxu0 0.0
        %1800 = vmatprep.subr.mxu0 0.0
        %1801 = vmatpush2.msra.mxu0 0.0
        %1802 = vmatprep.subr.mxu0 0.0
        %1803 = vmatpush2.msra.mxu0 0.0
        %1804 = vmatprep.subr.mxu0 0.0
        %1805 = vmatpush2.msra.mxu0 0.0
        %1806 = vmatprep.subr.mxu0 0.0
        %1807 = vmatpush2.msra.mxu0 0.0
        %1808 = vmatprep.subr.mxu0 0.0
        %1809 = vmatpush2.msra.mxu0 0.0
        %1810 = vmatprep.subr.mxu0 0.0
        %1811 = vmatpush2.msra.mxu0 0.0
        %1812 = vmatprep.subr.mxu0 0.0
        %1813 = vmatpush2.msra.mxu0 0.0
        %1814 = vmatprep.mubr.f32.mxu0 0.0
        %1815 = vmatmul.mubr.f32.gmra.mxu0 %v1703
        %v1816 = vpop.f32.mrf.mxu0
        %v1817 = vadd.f32 0.0, %v1816
        %v1818 = vpop.f32.mrf.mxu0
        %1819 = vmatprep.mubr.f32.mxu0 0.0
        %1820 = vmatmul.mubr.f32.gmra.mxu0 %v1706
        %v1821 = vpop.f32.mrf.mxu0
        %v1822 = vadd.f32 0.0, %v1821
        %v1823 = vpop.f32.mrf.mxu0
        %1824 = vmatprep.mubr.f32.mxu0 0.0
        %1825 = vmatmul.mubr.f32.gmra.mxu0 %v1709
        %v1826 = vpop.f32.mrf.mxu0
        %v1827 = vadd.f32 0.0, %v1826
        %v1828 = vpop.f32.mrf.mxu0
        %1829 = vmatprep.mubr.f32.mxu0 0.0
        %1830 = vmatmul.mubr.f32.gmra.mxu0 %v1712
        %v1831 = vpop.f32.mrf.mxu0
        %v1832 = vadd.f32 0.0, %v1831
        %v1833 = vpop.f32.mrf.mxu0
        %1834 = vmatprep.mubr.f32.mxu0 0.0
        %1835 = vmatmul.mubr.f32.gmra.mxu0 %v1715
        %v1836 = vpop.f32.mrf.mxu0
        %v1837 = vadd.f32 0.0, %v1836
        %v1838 = vpop.f32.mrf.mxu0
        %1839 = vmatprep.mubr.f32.mxu0 0.0
        %1840 = vmatmul.mubr.f32.gmra.mxu0 %v1718
        %v1841 = vpop.f32.mrf.mxu0
        %v1842 = vadd.f32 0.0, %v1841
        %v1843 = vpop.f32.mrf.mxu0
        %1844 = vmatprep.mubr.f32.mxu0 0.0
        %1845 = vmatmul.mubr.f32.gmra.mxu0 %v1721
        %v1846 = vpop.f32.mrf.mxu0
        %v1847 = vadd.f32 0.0, %v1846
        %v1848 = vpop.f32.mrf.mxu0
        %1849 = vmatprep.mubr.f32.mxu0 0.0
        %1850 = vmatmul.mubr.f32.gmra.mxu0 %v1724
        %v1851 = vpop.f32.mrf.mxu0
        %v1852 = vadd.f32 0.0, %v1851
        %v1853 = vpop.f32.mrf.mxu0
        %1854 = vdwg.mxu0
        %1855 = vmatprep.subr.mxu0 0.0
        %1856 = vmatpush1.msra.mxu0 %v1684
        %1857 = vmatprep.subr.mxu0 0.0
        %1858 = vmatpush1.msra.mxu0 %v1683
        %1859 = vmatprep.subr.mxu0 0.0
        %1860 = vmatpush1.msra.mxu0 %v1682
        %1861 = vmatprep.subr.mxu0 0.0
        %1862 = vmatpush1.msra.mxu0 %v1681
        %1863 = vmatprep.subr.mxu0 0.0
        %1864 = vmatpush1.msra.mxu0 %v1680
        %1865 = vmatprep.subr.mxu0 0.0
        %1866 = vmatpush1.msra.mxu0 %v1679
        %1867 = vmatprep.subr.mxu0 0.0
        %1868 = vmatpush1.msra.mxu0 %v1678
        %1869 = vmatprep.subr.mxu0 0.0
        %1870 = vmatpush1.msra.mxu0 %v1677
        %1871 = vmatprep.subr.mxu0 0.0
        %1872 = vmatpush1.msra.mxu0 %v1676
        %1873 = vmatprep.subr.mxu0 0.0
        %1874 = vmatpush1.msra.mxu0 %v1675
        %1875 = vmatprep.subr.mxu0 0.0
        %1876 = vmatpush1.msra.mxu0 %v1674
        %1877 = vmatprep.subr.mxu0 0.0
        %1878 = vmatpush1.msra.mxu0 %v1673
        %1879 = vmatprep.subr.mxu0 0.0
        %1880 = vmatpush1.msra.mxu0 %v1672
        %1881 = vmatprep.subr.mxu0 0.0
        %1882 = vmatpush1.msra.mxu0 %v1671
        %1883 = vmatprep.subr.mxu0 0.0
        %1884 = vmatpush1.msra.mxu0 %v1670
        %1885 = vmatprep.subr.mxu0 0.0
        %1886 = vmatpush1.msra.mxu0 %v1669
        %1887 = vmatprep.subr.mxu0 0.0
        %1888 = vmatpush2.msra.mxu0 0.0
        %1889 = vmatprep.subr.mxu0 0.0
        %1890 = vmatpush2.msra.mxu0 0.0
        %1891 = vmatprep.subr.mxu0 0.0
        %1892 = vmatpush2.msra.mxu0 0.0
        %1893 = vmatprep.subr.mxu0 0.0
        %1894 = vmatpush2.msra.mxu0 0.0
        %1895 = vmatprep.subr.mxu0 0.0
        %1896 = vmatpush2.msra.mxu0 0.0
        %1897 = vmatprep.subr.mxu0 0.0
        %1898 = vmatpush2.msra.mxu0 0.0
        %1899 = vmatprep.subr.mxu0 0.0
        %1900 = vmatpush2.msra.mxu0 0.0
        %1901 = vmatprep.subr.mxu0 0.0
        %1902 = vmatpush2.msra.mxu0 0.0
        %1903 = vmatprep.subr.mxu0 0.0
        %1904 = vmatpush2.msra.mxu0 0.0
        %1905 = vmatprep.subr.mxu0 0.0
        %1906 = vmatpush2.msra.mxu0 0.0
        %1907 = vmatprep.subr.mxu0 0.0
        %1908 = vmatpush2.msra.mxu0 0.0
        %1909 = vmatprep.subr.mxu0 0.0
        %1910 = vmatpush2.msra.mxu0 0.0
        %1911 = vmatprep.subr.mxu0 0.0
        %1912 = vmatpush2.msra.mxu0 0.0
        %1913 = vmatprep.subr.mxu0 0.0
        %1914 = vmatpush2.msra.mxu0 0.0
        %1915 = vmatprep.subr.mxu0 0.0
        %1916 = vmatpush2.msra.mxu0 0.0
        %1917 = vmatprep.subr.mxu0 0.0
        %1918 = vmatpush2.msra.mxu0 0.0
        %1919 = vmatprep.mubr.f32.mxu0 0.0
        %1920 = vmatmul.mubr.f32.gmra.mxu0 %v1649
        %v1921 = vpop.f32.mrf.mxu0
        %v1922 = vadd.f32 %v1817, %v1921
        %v1923 = vpop.f32.mrf.mxu0
        %1924 = vmatprep.mubr.f32.mxu0 0.0
        %1925 = vmatmul.mubr.f32.gmra.mxu0 %v1651
        %v1926 = vpop.f32.mrf.mxu0
        %v1927 = vadd.f32 %v1822, %v1926
        %v1928 = vpop.f32.mrf.mxu0
        %1929 = vmatprep.mubr.f32.mxu0 0.0
        %1930 = vmatmul.mubr.f32.gmra.mxu0 %v1653
        %v1931 = vpop.f32.mrf.mxu0
        %v1932 = vadd.f32 %v1827, %v1931
        %v1933 = vpop.f32.mrf.mxu0
        %1934 = vmatprep.mubr.f32.mxu0 0.0
        %1935 = vmatmul.mubr.f32.gmra.mxu0 %v1655
        %v1936 = vpop.f32.mrf.mxu0
        %v1937 = vadd.f32 %v1832, %v1936
        %v1938 = vpop.f32.mrf.mxu0
        %1939 = vmatprep.mubr.f32.mxu0 0.0
        %1940 = vmatmul.mubr.f32.gmra.mxu0 %v1657
        %v1941 = vpop.f32.mrf.mxu0
        %v1942 = vadd.f32 %v1837, %v1941
        %v1943 = vpop.f32.mrf.mxu0
        %1944 = vmatprep.mubr.f32.mxu0 0.0
        %1945 = vmatmul.mubr.f32.gmra.mxu0 %v1659
        %v1946 = vpop.f32.mrf.mxu0
        %v1947 = vadd.f32 %v1842, %v1946
        %v1948 = vpop.f32.mrf.mxu0
        %1949 = vmatprep.mubr.f32.mxu0 0.0
        %1950 = vmatmul.mubr.f32.gmra.mxu0 %v1661
        %v1951 = vpop.f32.mrf.mxu0
        %v1952 = vadd.f32 %v1847, %v1951
        %v1953 = vpop.f32.mrf.mxu0
        %1954 = vmatprep.mubr.f32.mxu0 0.0
        %1955 = vmatmul.mubr.f32.gmra.mxu0 %v1663
        %v1956 = vpop.f32.mrf.mxu0
        %v1957 = vadd.f32 %v1852, %v1956
        %v1958 = vpop.f32.mrf.mxu0
        %1959 = vdwg.mxu0
        %v1960 = vrot.slane %v1649, 2
        %v1961 = vrot.slane %v1650, 2
        %v1962 = vsel %vm619, %v1960, %v1961
        %v1963 = vrot.slane %v1651, 2
        %v1964 = vrot.slane %v1652, 2
        %v1965 = vsel %vm619, %v1963, %v1964
        %v1966 = vrot.slane %v1653, 2
        %v1967 = vrot.slane %v1654, 2
        %v1968 = vsel %vm619, %v1966, %v1967
        %v1969 = vrot.slane %v1655, 2
        %v1970 = vrot.slane %v1656, 2
        %v1971 = vsel %vm619, %v1969, %v1970
        %v1972 = vrot.slane %v1657, 2
        %v1973 = vrot.slane %v1658, 2
        %v1974 = vsel %vm619, %v1972, %v1973
        %v1975 = vrot.slane %v1659, 2
        %v1976 = vrot.slane %v1660, 2
        %v1977 = vsel %vm619, %v1975, %v1976
        %v1978 = vrot.slane %v1661, 2
        %v1979 = vrot.slane %v1662, 2
        %v1980 = vsel %vm619, %v1978, %v1979
        %v1981 = vrot.slane %v1663, 2
        %v1982 = vrot.slane %v1664, 2
        %v1983 = vsel %vm619, %v1981, %v1982
        %s1992 = scalar_lea.vmem [#allocation6], 256
        %v1993 = vld [vmem:[%s1992] sm:$0xff]
        %v1994 = vld [vmem:[%s1992 + $0x8] sm:$0xff]
        %v1995 = vld [vmem:[%s1992 + $0x10] sm:$0xff]
        %v1996 = vld [vmem:[%s1992 + $0x18] sm:$0xff]
        %v1997 = vld [vmem:[%s1992 + $0x20] sm:$0xff]
        %v1998 = vld [vmem:[%s1992 + $0x28] sm:$0xff]
        %v1999 = vld [vmem:[%s1992 + $0x30] sm:$0xff]
        %v2000 = vld [vmem:[%s1992 + $0x38] sm:$0xff]
        %v2001 = vld [vmem:[%s1992 + $0x40] sm:$0xff]
        %v2002 = vld [vmem:[%s1992 + $0x48] sm:$0xff]
        %v2003 = vld [vmem:[%s1992 + $0x50] sm:$0xff]
        %v2004 = vld [vmem:[%s1992 + $0x58] sm:$0xff]
        %v2005 = vld [vmem:[%s1992 + $0x60] sm:$0xff]
        %v2006 = vld [vmem:[%s1992 + $0x68] sm:$0xff]
        %v2007 = vld [vmem:[%s1992 + $0x70] sm:$0xff]
        %v2008 = vld [vmem:[%s1992 + $0x78] sm:$0xff]
        %2009 = vmatprep.subr.mxu0 0.0
        %2010 = vmatpush1.msra.mxu0 %v2008
        %2011 = vmatprep.subr.mxu0 0.0
        %2012 = vmatpush1.msra.mxu0 %v2007
        %2013 = vmatprep.subr.mxu0 0.0
        %2014 = vmatpush1.msra.mxu0 %v2006
        %2015 = vmatprep.subr.mxu0 0.0
        %2016 = vmatpush1.msra.mxu0 %v2005
        %2017 = vmatprep.subr.mxu0 0.0
        %2018 = vmatpush1.msra.mxu0 %v2004
        %2019 = vmatprep.subr.mxu0 0.0
        %2020 = vmatpush1.msra.mxu0 %v2003
        %2021 = vmatprep.subr.mxu0 0.0
        %2022 = vmatpush1.msra.mxu0 %v2002
        %2023 = vmatprep.subr.mxu0 0.0
        %2024 = vmatpush1.msra.mxu0 %v2001
        %2025 = vmatprep.subr.mxu0 0.0
        %2026 = vmatpush1.msra.mxu0 %v2000
        %2027 = vmatprep.subr.mxu0 0.0
        %2028 = vmatpush1.msra.mxu0 %v1999
        %2029 = vmatprep.subr.mxu0 0.0
        %2030 = vmatpush1.msra.mxu0 %v1998
        %2031 = vmatprep.subr.mxu0 0.0
        %2032 = vmatpush1.msra.mxu0 %v1997
        %2033 = vmatprep.subr.mxu0 0.0
        %2034 = vmatpush1.msra.mxu0 %v1996
        %2035 = vmatprep.subr.mxu0 0.0
        %2036 = vmatpush1.msra.mxu0 %v1995
        %2037 = vmatprep.subr.mxu0 0.0
        %2038 = vmatpush1.msra.mxu0 %v1994
        %2039 = vmatprep.subr.mxu0 0.0
        %2040 = vmatpush1.msra.mxu0 %v1993
        %2041 = vmatprep.subr.mxu0 0.0
        %2042 = vmatpush2.msra.mxu0 0.0
        %2043 = vmatprep.subr.mxu0 0.0
        %2044 = vmatpush2.msra.mxu0 0.0
        %2045 = vmatprep.subr.mxu0 0.0
        %2046 = vmatpush2.msra.mxu0 0.0
        %2047 = vmatprep.subr.mxu0 0.0
        %2048 = vmatpush2.msra.mxu0 0.0
        %2049 = vmatprep.subr.mxu0 0.0
        %2050 = vmatpush2.msra.mxu0 0.0
        %2051 = vmatprep.subr.mxu0 0.0
        %2052 = vmatpush2.msra.mxu0 0.0
        %2053 = vmatprep.subr.mxu0 0.0
        %2054 = vmatpush2.msra.mxu0 0.0
        %2055 = vmatprep.subr.mxu0 0.0
        %2056 = vmatpush2.msra.mxu0 0.0
        %2057 = vmatprep.subr.mxu0 0.0
        %2058 = vmatpush2.msra.mxu0 0.0
        %2059 = vmatprep.subr.mxu0 0.0
        %2060 = vmatpush2.msra.mxu0 0.0
        %2061 = vmatprep.subr.mxu0 0.0
        %2062 = vmatpush2.msra.mxu0 0.0
        %2063 = vmatprep.subr.mxu0 0.0
        %2064 = vmatpush2.msra.mxu0 0.0
        %2065 = vmatprep.subr.mxu0 0.0
        %2066 = vmatpush2.msra.mxu0 0.0
        %2067 = vmatprep.subr.mxu0 0.0
        %2068 = vmatpush2.msra.mxu0 0.0
        %2069 = vmatprep.subr.mxu0 0.0
        %2070 = vmatpush2.msra.mxu0 0.0
        %2071 = vmatprep.subr.mxu0 0.0
        %2072 = vmatpush2.msra.mxu0 0.0
        %2073 = vmatprep.mubr.f32.mxu0 0.0
        %2074 = vmatmul.mubr.f32.gmra.mxu0 %v1962
        %v2075 = vpop.f32.mrf.mxu0
        %v2076 = vadd.f32 0.0, %v2075
        %v2077 = vpop.f32.mrf.mxu0
        %2078 = vmatprep.mubr.f32.mxu0 0.0
        %2079 = vmatmul.mubr.f32.gmra.mxu0 %v1965
        %v2080 = vpop.f32.mrf.mxu0
        %v2081 = vadd.f32 0.0, %v2080
        %v2082 = vpop.f32.mrf.mxu0
        %2083 = vmatprep.mubr.f32.mxu0 0.0
        %2084 = vmatmul.mubr.f32.gmra.mxu0 %v1968
        %v2085 = vpop.f32.mrf.mxu0
        %v2086 = vadd.f32 0.0, %v2085
        %v2087 = vpop.f32.mrf.mxu0
        %2088 = vmatprep.mubr.f32.mxu0 0.0
        %2089 = vmatmul.mubr.f32.gmra.mxu0 %v1971
        %v2090 = vpop.f32.mrf.mxu0
        %v2091 = vadd.f32 0.0, %v2090
        %v2092 = vpop.f32.mrf.mxu0
        %2093 = vmatprep.mubr.f32.mxu0 0.0
        %2094 = vmatmul.mubr.f32.gmra.mxu0 %v1974
        %v2095 = vpop.f32.mrf.mxu0
        %v2096 = vadd.f32 0.0, %v2095
        %v2097 = vpop.f32.mrf.mxu0
        %2098 = vmatprep.mubr.f32.mxu0 0.0
        %2099 = vmatmul.mubr.f32.gmra.mxu0 %v1977
        %v2100 = vpop.f32.mrf.mxu0
        %v2101 = vadd.f32 0.0, %v2100
        %v2102 = vpop.f32.mrf.mxu0
        %2103 = vmatprep.mubr.f32.mxu0 0.0
        %2104 = vmatmul.mubr.f32.gmra.mxu0 %v1980
        %v2105 = vpop.f32.mrf.mxu0
        %v2106 = vadd.f32 0.0, %v2105
        %v2107 = vpop.f32.mrf.mxu0
        %2108 = vmatprep.mubr.f32.mxu0 0.0
        %2109 = vmatmul.mubr.f32.gmra.mxu0 %v1983
        %v2110 = vpop.f32.mrf.mxu0
        %v2111 = vadd.f32 0.0, %v2110
        %v2112 = vpop.f32.mrf.mxu0
        %2113 = vdwg.mxu0
        %v2114 = vadd.f32 %v1922, %v2076
        %v2115 = vadd.f32 %v1927, %v2081
        %v2116 = vadd.f32 %v1932, %v2086
        %v2117 = vadd.f32 %v1937, %v2091
        %v2118 = vadd.f32 %v1942, %v2096
        %v2119 = vadd.f32 %v1947, %v2101
        %v2120 = vadd.f32 %v1952, %v2106
        %v2121 = vadd.f32 %v1957, %v2111
        %s2122 = scalar_lea.vmem [#allocation6], 384
        %v2123 = vld [vmem:[%s2122] sm:$0xff]
        %v2124 = vld [vmem:[%s2122 + $0x8] sm:$0xff]
        %v2125 = vld [vmem:[%s2122 + $0x10] sm:$0xff]
        %v2126 = vld [vmem:[%s2122 + $0x18] sm:$0xff]
        %v2127 = vld [vmem:[%s2122 + $0x20] sm:$0xff]
        %v2128 = vld [vmem:[%s2122 + $0x28] sm:$0xff]
        %v2129 = vld [vmem:[%s2122 + $0x30] sm:$0xff]
        %v2130 = vld [vmem:[%s2122 + $0x38] sm:$0xff]
        %v2131 = vld [vmem:[%s2122 + $0x40] sm:$0xff]
        %v2132 = vld [vmem:[%s2122 + $0x48] sm:$0xff]
        %v2133 = vld [vmem:[%s2122 + $0x50] sm:$0xff]
        %v2134 = vld [vmem:[%s2122 + $0x58] sm:$0xff]
        %v2135 = vld [vmem:[%s2122 + $0x60] sm:$0xff]
        %v2136 = vld [vmem:[%s2122 + $0x68] sm:$0xff]
        %v2137 = vld [vmem:[%s2122 + $0x70] sm:$0xff]
        %v2138 = vld [vmem:[%s2122 + $0x78] sm:$0xff]
        %2139 = vmatprep.subr.mxu0 0.0
        %2140 = vmatpush1.msra.mxu0 %v2138
        %2141 = vmatprep.subr.mxu0 0.0
        %2142 = vmatpush1.msra.mxu0 %v2137
        %2143 = vmatprep.subr.mxu0 0.0
        %2144 = vmatpush1.msra.mxu0 %v2136
        %2145 = vmatprep.subr.mxu0 0.0
        %2146 = vmatpush1.msra.mxu0 %v2135
        %2147 = vmatprep.subr.mxu0 0.0
        %2148 = vmatpush1.msra.mxu0 %v2134
        %2149 = vmatprep.subr.mxu0 0.0
        %2150 = vmatpush1.msra.mxu0 %v2133
        %2151 = vmatprep.subr.mxu0 0.0
        %2152 = vmatpush1.msra.mxu0 %v2132
        %2153 = vmatprep.subr.mxu0 0.0
        %2154 = vmatpush1.msra.mxu0 %v2131
        %2155 = vmatprep.subr.mxu0 0.0
        %2156 = vmatpush1.msra.mxu0 %v2130
        %2157 = vmatprep.subr.mxu0 0.0
        %2158 = vmatpush1.msra.mxu0 %v2129
        %2159 = vmatprep.subr.mxu0 0.0
        %2160 = vmatpush1.msra.mxu0 %v2128
        %2161 = vmatprep.subr.mxu0 0.0
        %2162 = vmatpush1.msra.mxu0 %v2127
        %2163 = vmatprep.subr.mxu0 0.0
        %2164 = vmatpush1.msra.mxu0 %v2126
        %2165 = vmatprep.subr.mxu0 0.0
        %2166 = vmatpush1.msra.mxu0 %v2125
        %2167 = vmatprep.subr.mxu0 0.0
        %2168 = vmatpush1.msra.mxu0 %v2124
        %2169 = vmatprep.subr.mxu0 0.0
        %2170 = vmatpush1.msra.mxu0 %v2123
        %2171 = vmatprep.subr.mxu0 0.0
        %2172 = vmatpush2.msra.mxu0 0.0
        %2173 = vmatprep.subr.mxu0 0.0
        %2174 = vmatpush2.msra.mxu0 0.0
        %2175 = vmatprep.subr.mxu0 0.0
        %2176 = vmatpush2.msra.mxu0 0.0
        %2177 = vmatprep.subr.mxu0 0.0
        %2178 = vmatpush2.msra.mxu0 0.0
        %2179 = vmatprep.subr.mxu0 0.0
        %2180 = vmatpush2.msra.mxu0 0.0
        %2181 = vmatprep.subr.mxu0 0.0
        %2182 = vmatpush2.msra.mxu0 0.0
        %2183 = vmatprep.subr.mxu0 0.0
        %2184 = vmatpush2.msra.mxu0 0.0
        %2185 = vmatprep.subr.mxu0 0.0
        %2186 = vmatpush2.msra.mxu0 0.0
        %2187 = vmatprep.subr.mxu0 0.0
        %2188 = vmatpush2.msra.mxu0 0.0
        %2189 = vmatprep.subr.mxu0 0.0
        %2190 = vmatpush2.msra.mxu0 0.0
        %2191 = vmatprep.subr.mxu0 0.0
        %2192 = vmatpush2.msra.mxu0 0.0
        %2193 = vmatprep.subr.mxu0 0.0
        %2194 = vmatpush2.msra.mxu0 0.0
        %2195 = vmatprep.subr.mxu0 0.0
        %2196 = vmatpush2.msra.mxu0 0.0
        %2197 = vmatprep.subr.mxu0 0.0
        %2198 = vmatpush2.msra.mxu0 0.0
        %2199 = vmatprep.subr.mxu0 0.0
        %2200 = vmatpush2.msra.mxu0 0.0
        %2201 = vmatprep.subr.mxu0 0.0
        %2202 = vmatpush2.msra.mxu0 0.0
        %2203 = vmatprep.mubr.f32.mxu0 0.0
        %2204 = vmatmul.mubr.f32.gmra.mxu0 %v1651
        %v2205 = vpop.f32.mrf.mxu0
        %v2206 = vadd.f32 0.0, %v2205
        %v2207 = vpop.f32.mrf.mxu0
        %2208 = vmatprep.mubr.f32.mxu0 0.0
        %2209 = vmatmul.mubr.f32.gmra.mxu0 %v1653
        %v2210 = vpop.f32.mrf.mxu0
        %v2211 = vadd.f32 0.0, %v2210
        %v2212 = vpop.f32.mrf.mxu0
        %2213 = vmatprep.mubr.f32.mxu0 0.0
        %2214 = vmatmul.mubr.f32.gmra.mxu0 %v1655
        %v2215 = vpop.f32.mrf.mxu0
        %v2216 = vadd.f32 0.0, %v2215
        %v2217 = vpop.f32.mrf.mxu0
        %2218 = vmatprep.mubr.f32.mxu0 0.0
        %2219 = vmatmul.mubr.f32.gmra.mxu0 %v1657
        %v2220 = vpop.f32.mrf.mxu0
        %v2221 = vadd.f32 0.0, %v2220
        %v2222 = vpop.f32.mrf.mxu0
        %2223 = vmatprep.mubr.f32.mxu0 0.0
        %2224 = vmatmul.mubr.f32.gmra.mxu0 %v1659
        %v2225 = vpop.f32.mrf.mxu0
        %v2226 = vadd.f32 0.0, %v2225
        %v2227 = vpop.f32.mrf.mxu0
        %2228 = vmatprep.mubr.f32.mxu0 0.0
        %2229 = vmatmul.mubr.f32.gmra.mxu0 %v1661
        %v2230 = vpop.f32.mrf.mxu0
        %v2231 = vadd.f32 0.0, %v2230
        %v2232 = vpop.f32.mrf.mxu0
        %2233 = vmatprep.mubr.f32.mxu0 0.0
        %2234 = vmatmul.mubr.f32.gmra.mxu0 %v1663
        %v2235 = vpop.f32.mrf.mxu0
        %v2236 = vadd.f32 0.0, %v2235
        %v2237 = vpop.f32.mrf.mxu0
        %2238 = vmatprep.mubr.f32.mxu0 0.0
        %2239 = vmatmul.mubr.f32.gmra.mxu0 %v1665
        %v2240 = vpop.f32.mrf.mxu0
        %v2241 = vadd.f32 0.0, %v2240
        %v2242 = vpop.f32.mrf.mxu0
        %2243 = vdwg.mxu0
        %v2244 = vadd.f32 %v2114, %v2206
        %v2245 = vadd.f32 %v2115, %v2211
        %v2246 = vadd.f32 %v2116, %v2216
        %v2247 = vadd.f32 %v2117, %v2221
        %v2248 = vadd.f32 %v2118, %v2226
        %v2249 = vadd.f32 %v2119, %v2231
        %v2250 = vadd.f32 %v2120, %v2236
        %v2251 = vadd.f32 %v2121, %v2241
        %v2254 = vrot.slane %v1665, 1
        %v2255 = vrot.slane %v1666, 1
        %v2256 = vsel %vm359, %v2254, %v2255
        %s2258 = scalar_lea.vmem [#allocation6], 512
        %v2259 = vld [vmem:[%s2258] sm:$0xff]
        %v2260 = vld [vmem:[%s2258 + $0x8] sm:$0xff]
        %v2261 = vld [vmem:[%s2258 + $0x10] sm:$0xff]
        %v2262 = vld [vmem:[%s2258 + $0x18] sm:$0xff]
        %v2263 = vld [vmem:[%s2258 + $0x20] sm:$0xff]
        %v2264 = vld [vmem:[%s2258 + $0x28] sm:$0xff]
        %v2265 = vld [vmem:[%s2258 + $0x30] sm:$0xff]
        %v2266 = vld [vmem:[%s2258 + $0x38] sm:$0xff]
        %v2267 = vld [vmem:[%s2258 + $0x40] sm:$0xff]
        %v2268 = vld [vmem:[%s2258 + $0x48] sm:$0xff]
        %v2269 = vld [vmem:[%s2258 + $0x50] sm:$0xff]
        %v2270 = vld [vmem:[%s2258 + $0x58] sm:$0xff]
        %v2271 = vld [vmem:[%s2258 + $0x60] sm:$0xff]
        %v2272 = vld [vmem:[%s2258 + $0x68] sm:$0xff]
        %v2273 = vld [vmem:[%s2258 + $0x70] sm:$0xff]
        %v2274 = vld [vmem:[%s2258 + $0x78] sm:$0xff]
        %2275 = vmatprep.subr.mxu0 0.0
        %2276 = vmatpush1.msra.mxu0 %v2274
        %2277 = vmatprep.subr.mxu0 0.0
        %2278 = vmatpush1.msra.mxu0 %v2273
        %2279 = vmatprep.subr.mxu0 0.0
        %2280 = vmatpush1.msra.mxu0 %v2272
        %2281 = vmatprep.subr.mxu0 0.0
        %2282 = vmatpush1.msra.mxu0 %v2271
        %2283 = vmatprep.subr.mxu0 0.0
        %2284 = vmatpush1.msra.mxu0 %v2270
        %2285 = vmatprep.subr.mxu0 0.0
        %2286 = vmatpush1.msra.mxu0 %v2269
        %2287 = vmatprep.subr.mxu0 0.0
        %2288 = vmatpush1.msra.mxu0 %v2268
        %2289 = vmatprep.subr.mxu0 0.0
        %2290 = vmatpush1.msra.mxu0 %v2267
        %2291 = vmatprep.subr.mxu0 0.0
        %2292 = vmatpush1.msra.mxu0 %v2266
        %2293 = vmatprep.subr.mxu0 0.0
        %2294 = vmatpush1.msra.mxu0 %v2265
        %2295 = vmatprep.subr.mxu0 0.0
        %2296 = vmatpush1.msra.mxu0 %v2264
        %2297 = vmatprep.subr.mxu0 0.0
        %2298 = vmatpush1.msra.mxu0 %v2263
        %2299 = vmatprep.subr.mxu0 0.0
        %2300 = vmatpush1.msra.mxu0 %v2262
        %2301 = vmatprep.subr.mxu0 0.0
        %2302 = vmatpush1.msra.mxu0 %v2261
        %2303 = vmatprep.subr.mxu0 0.0
        %2304 = vmatpush1.msra.mxu0 %v2260
        %2305 = vmatprep.subr.mxu0 0.0
        %2306 = vmatpush1.msra.mxu0 %v2259
        %2307 = vmatprep.subr.mxu0 0.0
        %2308 = vmatpush2.msra.mxu0 0.0
        %2309 = vmatprep.subr.mxu0 0.0
        %2310 = vmatpush2.msra.mxu0 0.0
        %2311 = vmatprep.subr.mxu0 0.0
        %2312 = vmatpush2.msra.mxu0 0.0
        %2313 = vmatprep.subr.mxu0 0.0
        %2314 = vmatpush2.msra.mxu0 0.0
        %2315 = vmatprep.subr.mxu0 0.0
        %2316 = vmatpush2.msra.mxu0 0.0
        %2317 = vmatprep.subr.mxu0 0.0
        %2318 = vmatpush2.msra.mxu0 0.0
        %2319 = vmatprep.subr.mxu0 0.0
        %2320 = vmatpush2.msra.mxu0 0.0
        %2321 = vmatprep.subr.mxu0 0.0
        %2322 = vmatpush2.msra.mxu0 0.0
        %2323 = vmatprep.subr.mxu0 0.0
        %2324 = vmatpush2.msra.mxu0 0.0
        %2325 = vmatprep.subr.mxu0 0.0
        %2326 = vmatpush2.msra.mxu0 0.0
        %2327 = vmatprep.subr.mxu0 0.0
        %2328 = vmatpush2.msra.mxu0 0.0
        %2329 = vmatprep.subr.mxu0 0.0
        %2330 = vmatpush2.msra.mxu0 0.0
        %2331 = vmatprep.subr.mxu0 0.0
        %2332 = vmatpush2.msra.mxu0 0.0
        %2333 = vmatprep.subr.mxu0 0.0
        %2334 = vmatpush2.msra.mxu0 0.0
        %2335 = vmatprep.subr.mxu0 0.0
        %2336 = vmatpush2.msra.mxu0 0.0
        %2337 = vmatprep.subr.mxu0 0.0
        %2338 = vmatpush2.msra.mxu0 0.0
        %2339 = vmatprep.mubr.f32.mxu0 0.0
        %2340 = vmatmul.mubr.f32.gmra.mxu0 %v1706
        %v2341 = vpop.f32.mrf.mxu0
        %v2342 = vadd.f32 0.0, %v2341
        %v2343 = vpop.f32.mrf.mxu0
        %2344 = vmatprep.mubr.f32.mxu0 0.0
        %2345 = vmatmul.mubr.f32.gmra.mxu0 %v1709
        %v2346 = vpop.f32.mrf.mxu0
        %v2347 = vadd.f32 0.0, %v2346
        %v2348 = vpop.f32.mrf.mxu0
        %2349 = vmatprep.mubr.f32.mxu0 0.0
        %2350 = vmatmul.mubr.f32.gmra.mxu0 %v1712
        %v2351 = vpop.f32.mrf.mxu0
        %v2352 = vadd.f32 0.0, %v2351
        %v2353 = vpop.f32.mrf.mxu0
        %2354 = vmatprep.mubr.f32.mxu0 0.0
        %2355 = vmatmul.mubr.f32.gmra.mxu0 %v1715
        %v2356 = vpop.f32.mrf.mxu0
        %v2357 = vadd.f32 0.0, %v2356
        %v2358 = vpop.f32.mrf.mxu0
        %2359 = vmatprep.mubr.f32.mxu0 0.0
        %2360 = vmatmul.mubr.f32.gmra.mxu0 %v1718
        %v2361 = vpop.f32.mrf.mxu0
        %v2362 = vadd.f32 0.0, %v2361
        %v2363 = vpop.f32.mrf.mxu0
        %2364 = vmatprep.mubr.f32.mxu0 0.0
        %2365 = vmatmul.mubr.f32.gmra.mxu0 %v1721
        %v2366 = vpop.f32.mrf.mxu0
        %v2367 = vadd.f32 0.0, %v2366
        %v2368 = vpop.f32.mrf.mxu0
        %2369 = vmatprep.mubr.f32.mxu0 0.0
        %2370 = vmatmul.mubr.f32.gmra.mxu0 %v1724
        %v2371 = vpop.f32.mrf.mxu0
        %v2372 = vadd.f32 0.0, %v2371
        %v2373 = vpop.f32.mrf.mxu0
        %2374 = vmatprep.mubr.f32.mxu0 0.0
        %2375 = vmatmul.mubr.f32.gmra.mxu0 %v2256
        %v2376 = vpop.f32.mrf.mxu0
        %v2377 = vadd.f32 0.0, %v2376
        %v2378 = vpop.f32.mrf.mxu0
        %2379 = vdwg.mxu0
        %v2380 = vadd.f32 %v2244, %v2342
        %v2381 = vadd.f32 %v2245, %v2347
        %v2382 = vadd.f32 %v2246, %v2352
        %v2383 = vadd.f32 %v2247, %v2357
        %v2384 = vadd.f32 %v2248, %v2362
        %v2385 = vadd.f32 %v2249, %v2367
        %v2386 = vadd.f32 %v2250, %v2372
        %v2387 = vadd.f32 %v2251, %v2377
        %v2388 = vrot.slane %v1665, 2
        %v2389 = vrot.slane %v1666, 2
        %v2390 = vsel %vm619, %v2388, %v2389
        %s2392 = scalar_lea.vmem [#allocation6], 640
        %v2393 = vld [vmem:[%s2392] sm:$0xff]
        %v2394 = vld [vmem:[%s2392 + $0x8] sm:$0xff]
        %v2395 = vld [vmem:[%s2392 + $0x10] sm:$0xff]
        %v2396 = vld [vmem:[%s2392 + $0x18] sm:$0xff]
        %v2397 = vld [vmem:[%s2392 + $0x20] sm:$0xff]
        %v2398 = vld [vmem:[%s2392 + $0x28] sm:$0xff]
        %v2399 = vld [vmem:[%s2392 + $0x30] sm:$0xff]
        %v2400 = vld [vmem:[%s2392 + $0x38] sm:$0xff]
        %v2401 = vld [vmem:[%s2392 + $0x40] sm:$0xff]
        %v2402 = vld [vmem:[%s2392 + $0x48] sm:$0xff]
        %v2403 = vld [vmem:[%s2392 + $0x50] sm:$0xff]
        %v2404 = vld [vmem:[%s2392 + $0x58] sm:$0xff]
        %v2405 = vld [vmem:[%s2392 + $0x60] sm:$0xff]
        %v2406 = vld [vmem:[%s2392 + $0x68] sm:$0xff]
        %v2407 = vld [vmem:[%s2392 + $0x70] sm:$0xff]
        %v2408 = vld [vmem:[%s2392 + $0x78] sm:$0xff]
        %2409 = vmatprep.subr.mxu0 0.0
        %2410 = vmatpush1.msra.mxu0 %v2408
        %2411 = vmatprep.subr.mxu0 0.0
        %2412 = vmatpush1.msra.mxu0 %v2407
        %2413 = vmatprep.subr.mxu0 0.0
        %2414 = vmatpush1.msra.mxu0 %v2406
        %2415 = vmatprep.subr.mxu0 0.0
        %2416 = vmatpush1.msra.mxu0 %v2405
        %2417 = vmatprep.subr.mxu0 0.0
        %2418 = vmatpush1.msra.mxu0 %v2404
        %2419 = vmatprep.subr.mxu0 0.0
        %2420 = vmatpush1.msra.mxu0 %v2403
        %2421 = vmatprep.subr.mxu0 0.0
        %2422 = vmatpush1.msra.mxu0 %v2402
        %2423 = vmatprep.subr.mxu0 0.0
        %2424 = vmatpush1.msra.mxu0 %v2401
        %2425 = vmatprep.subr.mxu0 0.0
        %2426 = vmatpush1.msra.mxu0 %v2400
        %2427 = vmatprep.subr.mxu0 0.0
        %2428 = vmatpush1.msra.mxu0 %v2399
        %2429 = vmatprep.subr.mxu0 0.0
        %2430 = vmatpush1.msra.mxu0 %v2398
        %2431 = vmatprep.subr.mxu0 0.0
        %2432 = vmatpush1.msra.mxu0 %v2397
        %2433 = vmatprep.subr.mxu0 0.0
        %2434 = vmatpush1.msra.mxu0 %v2396
        %2435 = vmatprep.subr.mxu0 0.0
        %2436 = vmatpush1.msra.mxu0 %v2395
        %2437 = vmatprep.subr.mxu0 0.0
        %2438 = vmatpush1.msra.mxu0 %v2394
        %2439 = vmatprep.subr.mxu0 0.0
        %2440 = vmatpush1.msra.mxu0 %v2393
        %2441 = vmatprep.subr.mxu0 0.0
        %2442 = vmatpush2.msra.mxu0 0.0
        %2443 = vmatprep.subr.mxu0 0.0
        %2444 = vmatpush2.msra.mxu0 0.0
        %2445 = vmatprep.subr.mxu0 0.0
        %2446 = vmatpush2.msra.mxu0 0.0
        %2447 = vmatprep.subr.mxu0 0.0
        %2448 = vmatpush2.msra.mxu0 0.0
        %2449 = vmatprep.subr.mxu0 0.0
        %2450 = vmatpush2.msra.mxu0 0.0
        %2451 = vmatprep.subr.mxu0 0.0
        %2452 = vmatpush2.msra.mxu0 0.0
        %2453 = vmatprep.subr.mxu0 0.0
        %2454 = vmatpush2.msra.mxu0 0.0
        %2455 = vmatprep.subr.mxu0 0.0
        %2456 = vmatpush2.msra.mxu0 0.0
        %2457 = vmatprep.subr.mxu0 0.0
        %2458 = vmatpush2.msra.mxu0 0.0
        %2459 = vmatprep.subr.mxu0 0.0
        %2460 = vmatpush2.msra.mxu0 0.0
        %2461 = vmatprep.subr.mxu0 0.0
        %2462 = vmatpush2.msra.mxu0 0.0
        %2463 = vmatprep.subr.mxu0 0.0
        %2464 = vmatpush2.msra.mxu0 0.0
        %2465 = vmatprep.subr.mxu0 0.0
        %2466 = vmatpush2.msra.mxu0 0.0
        %2467 = vmatprep.subr.mxu0 0.0
        %2468 = vmatpush2.msra.mxu0 0.0
        %2469 = vmatprep.subr.mxu0 0.0
        %2470 = vmatpush2.msra.mxu0 0.0
        %2471 = vmatprep.subr.mxu0 0.0
        %2472 = vmatpush2.msra.mxu0 0.0
        %2473 = vmatprep.mubr.f32.mxu0 0.0
        %2474 = vmatmul.mubr.f32.gmra.mxu0 %v1965
        %v2475 = vpop.f32.mrf.mxu0
        %v2476 = vadd.f32 0.0, %v2475
        %v2477 = vpop.f32.mrf.mxu0
        %2478 = vmatprep.mubr.f32.mxu0 0.0
        %2479 = vmatmul.mubr.f32.gmra.mxu0 %v1968
        %v2480 = vpop.f32.mrf.mxu0
        %v2481 = vadd.f32 0.0, %v2480
        %v2482 = vpop.f32.mrf.mxu0
        %2483 = vmatprep.mubr.f32.mxu0 0.0
        %2484 = vmatmul.mubr.f32.gmra.mxu0 %v1971
        %v2485 = vpop.f32.mrf.mxu0
        %v2486 = vadd.f32 0.0, %v2485
        %v2487 = vpop.f32.mrf.mxu0
        %2488 = vmatprep.mubr.f32.mxu0 0.0
        %2489 = vmatmul.mubr.f32.gmra.mxu0 %v1974
        %v2490 = vpop.f32.mrf.mxu0
        %v2491 = vadd.f32 0.0, %v2490
        %v2492 = vpop.f32.mrf.mxu0
        %2493 = vmatprep.mubr.f32.mxu0 0.0
        %2494 = vmatmul.mubr.f32.gmra.mxu0 %v1977
        %v2495 = vpop.f32.mrf.mxu0
        %v2496 = vadd.f32 0.0, %v2495
        %v2497 = vpop.f32.mrf.mxu0
        %2498 = vmatprep.mubr.f32.mxu0 0.0
        %2499 = vmatmul.mubr.f32.gmra.mxu0 %v1980
        %v2500 = vpop.f32.mrf.mxu0
        %v2501 = vadd.f32 0.0, %v2500
        %v2502 = vpop.f32.mrf.mxu0
        %2503 = vmatprep.mubr.f32.mxu0 0.0
        %2504 = vmatmul.mubr.f32.gmra.mxu0 %v1983
        %v2505 = vpop.f32.mrf.mxu0
        %v2506 = vadd.f32 0.0, %v2505
        %v2507 = vpop.f32.mrf.mxu0
        %2508 = vmatprep.mubr.f32.mxu0 0.0
        %2509 = vmatmul.mubr.f32.gmra.mxu0 %v2390
        %v2510 = vpop.f32.mrf.mxu0
        %v2511 = vadd.f32 0.0, %v2510
        %v2512 = vpop.f32.mrf.mxu0
        %2513 = vdwg.mxu0
        %v2514 = vadd.f32 %v2380, %v2476
        %v2515 = vadd.f32 %v2381, %v2481
        %v2516 = vadd.f32 %v2382, %v2486
        %v2517 = vadd.f32 %v2383, %v2491
        %v2518 = vadd.f32 %v2384, %v2496
        %v2519 = vadd.f32 %v2385, %v2501
        %v2520 = vadd.f32 %v2386, %v2506
        %v2521 = vadd.f32 %v2387, %v2511
        %s2522 = scalar_lea.vmem [#allocation6], 768
        %v2523 = vld [vmem:[%s2522] sm:$0xff]
        %v2524 = vld [vmem:[%s2522 + $0x8] sm:$0xff]
        %v2525 = vld [vmem:[%s2522 + $0x10] sm:$0xff]
        %v2526 = vld [vmem:[%s2522 + $0x18] sm:$0xff]
        %v2527 = vld [vmem:[%s2522 + $0x20] sm:$0xff]
        %v2528 = vld [vmem:[%s2522 + $0x28] sm:$0xff]
        %v2529 = vld [vmem:[%s2522 + $0x30] sm:$0xff]
        %v2530 = vld [vmem:[%s2522 + $0x38] sm:$0xff]
        %v2531 = vld [vmem:[%s2522 + $0x40] sm:$0xff]
        %v2532 = vld [vmem:[%s2522 + $0x48] sm:$0xff]
        %v2533 = vld [vmem:[%s2522 + $0x50] sm:$0xff]
        %v2534 = vld [vmem:[%s2522 + $0x58] sm:$0xff]
        %v2535 = vld [vmem:[%s2522 + $0x60] sm:$0xff]
        %v2536 = vld [vmem:[%s2522 + $0x68] sm:$0xff]
        %v2537 = vld [vmem:[%s2522 + $0x70] sm:$0xff]
        %v2538 = vld [vmem:[%s2522 + $0x78] sm:$0xff]
        %2539 = vmatprep.subr.mxu0 0.0
        %2540 = vmatpush1.msra.mxu0 %v2538
        %2541 = vmatprep.subr.mxu0 0.0
        %2542 = vmatpush1.msra.mxu0 %v2537
        %2543 = vmatprep.subr.mxu0 0.0
        %2544 = vmatpush1.msra.mxu0 %v2536
        %2545 = vmatprep.subr.mxu0 0.0
        %2546 = vmatpush1.msra.mxu0 %v2535
        %2547 = vmatprep.subr.mxu0 0.0
        %2548 = vmatpush1.msra.mxu0 %v2534
        %2549 = vmatprep.subr.mxu0 0.0
        %2550 = vmatpush1.msra.mxu0 %v2533
        %2551 = vmatprep.subr.mxu0 0.0
        %2552 = vmatpush1.msra.mxu0 %v2532
        %2553 = vmatprep.subr.mxu0 0.0
        %2554 = vmatpush1.msra.mxu0 %v2531
        %2555 = vmatprep.subr.mxu0 0.0
        %2556 = vmatpush1.msra.mxu0 %v2530
        %2557 = vmatprep.subr.mxu0 0.0
        %2558 = vmatpush1.msra.mxu0 %v2529
        %2559 = vmatprep.subr.mxu0 0.0
        %2560 = vmatpush1.msra.mxu0 %v2528
        %2561 = vmatprep.subr.mxu0 0.0
        %2562 = vmatpush1.msra.mxu0 %v2527
        %2563 = vmatprep.subr.mxu0 0.0
        %2564 = vmatpush1.msra.mxu0 %v2526
        %2565 = vmatprep.subr.mxu0 0.0
        %2566 = vmatpush1.msra.mxu0 %v2525
        %2567 = vmatprep.subr.mxu0 0.0
        %2568 = vmatpush1.msra.mxu0 %v2524
        %2569 = vmatprep.subr.mxu0 0.0
        %2570 = vmatpush1.msra.mxu0 %v2523
        %2571 = vmatprep.subr.mxu0 0.0
        %2572 = vmatpush2.msra.mxu0 0.0
        %2573 = vmatprep.subr.mxu0 0.0
        %2574 = vmatpush2.msra.mxu0 0.0
        %2575 = vmatprep.subr.mxu0 0.0
        %2576 = vmatpush2.msra.mxu0 0.0
        %2577 = vmatprep.subr.mxu0 0.0
        %2578 = vmatpush2.msra.mxu0 0.0
        %2579 = vmatprep.subr.mxu0 0.0
        %2580 = vmatpush2.msra.mxu0 0.0
        %2581 = vmatprep.subr.mxu0 0.0
        %2582 = vmatpush2.msra.mxu0 0.0
        %2583 = vmatprep.subr.mxu0 0.0
        %2584 = vmatpush2.msra.mxu0 0.0
        %2585 = vmatprep.subr.mxu0 0.0
        %2586 = vmatpush2.msra.mxu0 0.0
        %2587 = vmatprep.subr.mxu0 0.0
        %2588 = vmatpush2.msra.mxu0 0.0
        %2589 = vmatprep.subr.mxu0 0.0
        %2590 = vmatpush2.msra.mxu0 0.0
        %2591 = vmatprep.subr.mxu0 0.0
        %2592 = vmatpush2.msra.mxu0 0.0
        %2593 = vmatprep.subr.mxu0 0.0
        %2594 = vmatpush2.msra.mxu0 0.0
        %2595 = vmatprep.subr.mxu0 0.0
        %2596 = vmatpush2.msra.mxu0 0.0
        %2597 = vmatprep.subr.mxu0 0.0
        %2598 = vmatpush2.msra.mxu0 0.0
        %2599 = vmatprep.subr.mxu0 0.0
        %2600 = vmatpush2.msra.mxu0 0.0
        %2601 = vmatprep.subr.mxu0 0.0
        %2602 = vmatpush2.msra.mxu0 0.0
        %2603 = vmatprep.mubr.f32.mxu0 0.0
        %2604 = vmatmul.mubr.f32.gmra.mxu0 %v1653
        %v2605 = vpop.f32.mrf.mxu0
        %v2606 = vadd.f32 0.0, %v2605
        %v2607 = vpop.f32.mrf.mxu0
        %2608 = vmatprep.mubr.f32.mxu0 0.0
        %2609 = vmatmul.mubr.f32.gmra.mxu0 %v1655
        %v2610 = vpop.f32.mrf.mxu0
        %v2611 = vadd.f32 0.0, %v2610
        %v2612 = vpop.f32.mrf.mxu0
        %2613 = vmatprep.mubr.f32.mxu0 0.0
        %2614 = vmatmul.mubr.f32.gmra.mxu0 %v1657
        %v2615 = vpop.f32.mrf.mxu0
        %v2616 = vadd.f32 0.0, %v2615
        %v2617 = vpop.f32.mrf.mxu0
        %2618 = vmatprep.mubr.f32.mxu0 0.0
        %2619 = vmatmul.mubr.f32.gmra.mxu0 %v1659
        %v2620 = vpop.f32.mrf.mxu0
        %v2621 = vadd.f32 0.0, %v2620
        %v2622 = vpop.f32.mrf.mxu0
        %2623 = vmatprep.mubr.f32.mxu0 0.0
        %2624 = vmatmul.mubr.f32.gmra.mxu0 %v1661
        %v2625 = vpop.f32.mrf.mxu0
        %v2626 = vadd.f32 0.0, %v2625
        %v2627 = vpop.f32.mrf.mxu0
        %2628 = vmatprep.mubr.f32.mxu0 0.0
        %2629 = vmatmul.mubr.f32.gmra.mxu0 %v1663
        %v2630 = vpop.f32.mrf.mxu0
        %v2631 = vadd.f32 0.0, %v2630
        %v2632 = vpop.f32.mrf.mxu0
        %2633 = vmatprep.mubr.f32.mxu0 0.0
        %2634 = vmatmul.mubr.f32.gmra.mxu0 %v1665
        %v2635 = vpop.f32.mrf.mxu0
        %v2636 = vadd.f32 0.0, %v2635
        %v2637 = vpop.f32.mrf.mxu0
        %2638 = vmatprep.mubr.f32.mxu0 0.0
        %2639 = vmatmul.mubr.f32.gmra.mxu0 %v1667
        %v2640 = vpop.f32.mrf.mxu0
        %v2641 = vadd.f32 0.0, %v2640
        %v2642 = vpop.f32.mrf.mxu0
        %2643 = vdwg.mxu0
        %v2644 = vadd.f32 %v2514, %v2606
        %v2645 = vadd.f32 %v2515, %v2611
        %v2646 = vadd.f32 %v2516, %v2616
        %v2647 = vadd.f32 %v2517, %v2621
        %v2648 = vadd.f32 %v2518, %v2626
        %v2649 = vadd.f32 %v2519, %v2631
        %v2650 = vadd.f32 %v2520, %v2636
        %v2651 = vadd.f32 %v2521, %v2641
        %v2654 = vrot.slane %v1667, 1
        %v2655 = vrot.slane %v1668, 1
        %v2656 = vsel %vm359, %v2654, %v2655
        %s2658 = scalar_lea.vmem [#allocation6], 896
        %v2659 = vld [vmem:[%s2658] sm:$0xff]
        %v2660 = vld [vmem:[%s2658 + $0x8] sm:$0xff]
        %v2661 = vld [vmem:[%s2658 + $0x10] sm:$0xff]
        %v2662 = vld [vmem:[%s2658 + $0x18] sm:$0xff]
        %v2663 = vld [vmem:[%s2658 + $0x20] sm:$0xff]
        %v2664 = vld [vmem:[%s2658 + $0x28] sm:$0xff]
        %v2665 = vld [vmem:[%s2658 + $0x30] sm:$0xff]
        %v2666 = vld [vmem:[%s2658 + $0x38] sm:$0xff]
        %v2667 = vld [vmem:[%s2658 + $0x40] sm:$0xff]
        %v2668 = vld [vmem:[%s2658 + $0x48] sm:$0xff]
        %v2669 = vld [vmem:[%s2658 + $0x50] sm:$0xff]
        %v2670 = vld [vmem:[%s2658 + $0x58] sm:$0xff]
        %v2671 = vld [vmem:[%s2658 + $0x60] sm:$0xff]
        %v2672 = vld [vmem:[%s2658 + $0x68] sm:$0xff]
        %v2673 = vld [vmem:[%s2658 + $0x70] sm:$0xff]
        %v2674 = vld [vmem:[%s2658 + $0x78] sm:$0xff]
        %2675 = vmatprep.subr.mxu0 0.0
        %2676 = vmatpush1.msra.mxu0 %v2674
        %2677 = vmatprep.subr.mxu0 0.0
        %2678 = vmatpush1.msra.mxu0 %v2673
        %2679 = vmatprep.subr.mxu0 0.0
        %2680 = vmatpush1.msra.mxu0 %v2672
        %2681 = vmatprep.subr.mxu0 0.0
        %2682 = vmatpush1.msra.mxu0 %v2671
        %2683 = vmatprep.subr.mxu0 0.0
        %2684 = vmatpush1.msra.mxu0 %v2670
        %2685 = vmatprep.subr.mxu0 0.0
        %2686 = vmatpush1.msra.mxu0 %v2669
        %2687 = vmatprep.subr.mxu0 0.0
        %2688 = vmatpush1.msra.mxu0 %v2668
        %2689 = vmatprep.subr.mxu0 0.0
        %2690 = vmatpush1.msra.mxu0 %v2667
        %2691 = vmatprep.subr.mxu0 0.0
        %2692 = vmatpush1.msra.mxu0 %v2666
        %2693 = vmatprep.subr.mxu0 0.0
        %2694 = vmatpush1.msra.mxu0 %v2665
        %2695 = vmatprep.subr.mxu0 0.0
        %2696 = vmatpush1.msra.mxu0 %v2664
        %2697 = vmatprep.subr.mxu0 0.0
        %2698 = vmatpush1.msra.mxu0 %v2663
        %2699 = vmatprep.subr.mxu0 0.0
        %2700 = vmatpush1.msra.mxu0 %v2662
        %2701 = vmatprep.subr.mxu0 0.0
        %2702 = vmatpush1.msra.mxu0 %v2661
        %2703 = vmatprep.subr.mxu0 0.0
        %2704 = vmatpush1.msra.mxu0 %v2660
        %2705 = vmatprep.subr.mxu0 0.0
        %2706 = vmatpush1.msra.mxu0 %v2659
        %2707 = vmatprep.subr.mxu0 0.0
        %2708 = vmatpush2.msra.mxu0 0.0
        %2709 = vmatprep.subr.mxu0 0.0
        %2710 = vmatpush2.msra.mxu0 0.0
        %2711 = vmatprep.subr.mxu0 0.0
        %2712 = vmatpush2.msra.mxu0 0.0
        %2713 = vmatprep.subr.mxu0 0.0
        %2714 = vmatpush2.msra.mxu0 0.0
        %2715 = vmatprep.subr.mxu0 0.0
        %2716 = vmatpush2.msra.mxu0 0.0
        %2717 = vmatprep.subr.mxu0 0.0
        %2718 = vmatpush2.msra.mxu0 0.0
        %2719 = vmatprep.subr.mxu0 0.0
        %2720 = vmatpush2.msra.mxu0 0.0
        %2721 = vmatprep.subr.mxu0 0.0
        %2722 = vmatpush2.msra.mxu0 0.0
        %2723 = vmatprep.subr.mxu0 0.0
        %2724 = vmatpush2.msra.mxu0 0.0
        %2725 = vmatprep.subr.mxu0 0.0
        %2726 = vmatpush2.msra.mxu0 0.0
        %2727 = vmatprep.subr.mxu0 0.0
        %2728 = vmatpush2.msra.mxu0 0.0
        %2729 = vmatprep.subr.mxu0 0.0
        %2730 = vmatpush2.msra.mxu0 0.0
        %2731 = vmatprep.subr.mxu0 0.0
        %2732 = vmatpush2.msra.mxu0 0.0
        %2733 = vmatprep.subr.mxu0 0.0
        %2734 = vmatpush2.msra.mxu0 0.0
        %2735 = vmatprep.subr.mxu0 0.0
        %2736 = vmatpush2.msra.mxu0 0.0
        %2737 = vmatprep.subr.mxu0 0.0
        %2738 = vmatpush2.msra.mxu0 0.0
        %2739 = vmatprep.mubr.f32.mxu0 0.0
        %2740 = vmatmul.mubr.f32.gmra.mxu0 %v1709
        %v2741 = vpop.f32.mrf.mxu0
        %v2742 = vadd.f32 0.0, %v2741
        %v2743 = vpop.f32.mrf.mxu0
        %2744 = vmatprep.mubr.f32.mxu0 0.0
        %2745 = vmatmul.mubr.f32.gmra.mxu0 %v1712
        %v2746 = vpop.f32.mrf.mxu0
        %v2747 = vadd.f32 0.0, %v2746
        %v2748 = vpop.f32.mrf.mxu0
        %2749 = vmatprep.mubr.f32.mxu0 0.0
        %2750 = vmatmul.mubr.f32.gmra.mxu0 %v1715
        %v2751 = vpop.f32.mrf.mxu0
        %v2752 = vadd.f32 0.0, %v2751
        %v2753 = vpop.f32.mrf.mxu0
        %2754 = vmatprep.mubr.f32.mxu0 0.0
        %2755 = vmatmul.mubr.f32.gmra.mxu0 %v1718
        %v2756 = vpop.f32.mrf.mxu0
        %v2757 = vadd.f32 0.0, %v2756
        %v2758 = vpop.f32.mrf.mxu0
        %2759 = vmatprep.mubr.f32.mxu0 0.0
        %2760 = vmatmul.mubr.f32.gmra.mxu0 %v1721
        %v2761 = vpop.f32.mrf.mxu0
        %v2762 = vadd.f32 0.0, %v2761
        %v2763 = vpop.f32.mrf.mxu0
        %2764 = vmatprep.mubr.f32.mxu0 0.0
        %2765 = vmatmul.mubr.f32.gmra.mxu0 %v1724
        %v2766 = vpop.f32.mrf.mxu0
        %v2767 = vadd.f32 0.0, %v2766
        %v2768 = vpop.f32.mrf.mxu0
        %2769 = vmatprep.mubr.f32.mxu0 0.0
        %2770 = vmatmul.mubr.f32.gmra.mxu0 %v2256
        %v2771 = vpop.f32.mrf.mxu0
        %v2772 = vadd.f32 0.0, %v2771
        %v2773 = vpop.f32.mrf.mxu0
        %2774 = vmatprep.mubr.f32.mxu0 0.0
        %2775 = vmatmul.mubr.f32.gmra.mxu0 %v2656
        %v2776 = vpop.f32.mrf.mxu0
        %v2777 = vadd.f32 0.0, %v2776
        %v2778 = vpop.f32.mrf.mxu0
        %2779 = vdwg.mxu0
        %v2780 = vadd.f32 %v2644, %v2742
        %v2781 = vadd.f32 %v2645, %v2747
        %v2782 = vadd.f32 %v2646, %v2752
        %v2783 = vadd.f32 %v2647, %v2757
        %v2784 = vadd.f32 %v2648, %v2762
        %v2785 = vadd.f32 %v2649, %v2767
        %v2786 = vadd.f32 %v2650, %v2772
        %v2787 = vadd.f32 %v2651, %v2777
        %v2788 = vrot.slane %v1667, 2
        %v2789 = vrot.slane %v1668, 2
        %v2790 = vsel %vm619, %v2788, %v2789
        %s2792 = scalar_lea.vmem [#allocation6], 1024
        %v2793 = vld [vmem:[%s2792] sm:$0xff]
        %v2794 = vld [vmem:[%s2792 + $0x8] sm:$0xff]
        %v2795 = vld [vmem:[%s2792 + $0x10] sm:$0xff]
        %v2796 = vld [vmem:[%s2792 + $0x18] sm:$0xff]
        %v2797 = vld [vmem:[%s2792 + $0x20] sm:$0xff]
        %v2798 = vld [vmem:[%s2792 + $0x28] sm:$0xff]
        %v2799 = vld [vmem:[%s2792 + $0x30] sm:$0xff]
        %v2800 = vld [vmem:[%s2792 + $0x38] sm:$0xff]
        %v2801 = vld [vmem:[%s2792 + $0x40] sm:$0xff]
        %v2802 = vld [vmem:[%s2792 + $0x48] sm:$0xff]
        %v2803 = vld [vmem:[%s2792 + $0x50] sm:$0xff]
        %v2804 = vld [vmem:[%s2792 + $0x58] sm:$0xff]
        %v2805 = vld [vmem:[%s2792 + $0x60] sm:$0xff]
        %v2806 = vld [vmem:[%s2792 + $0x68] sm:$0xff]
        %v2807 = vld [vmem:[%s2792 + $0x70] sm:$0xff]
        %v2808 = vld [vmem:[%s2792 + $0x78] sm:$0xff]
        %2809 = vmatprep.subr.mxu0 0.0
        %2810 = vmatpush1.msra.mxu0 %v2808
        %2811 = vmatprep.subr.mxu0 0.0
        %2812 = vmatpush1.msra.mxu0 %v2807
        %2813 = vmatprep.subr.mxu0 0.0
        %2814 = vmatpush1.msra.mxu0 %v2806
        %2815 = vmatprep.subr.mxu0 0.0
        %2816 = vmatpush1.msra.mxu0 %v2805
        %2817 = vmatprep.subr.mxu0 0.0
        %2818 = vmatpush1.msra.mxu0 %v2804
        %2819 = vmatprep.subr.mxu0 0.0
        %2820 = vmatpush1.msra.mxu0 %v2803
        %2821 = vmatprep.subr.mxu0 0.0
        %2822 = vmatpush1.msra.mxu0 %v2802
        %2823 = vmatprep.subr.mxu0 0.0
        %2824 = vmatpush1.msra.mxu0 %v2801
        %2825 = vmatprep.subr.mxu0 0.0
        %2826 = vmatpush1.msra.mxu0 %v2800
        %2827 = vmatprep.subr.mxu0 0.0
        %2828 = vmatpush1.msra.mxu0 %v2799
        %2829 = vmatprep.subr.mxu0 0.0
        %2830 = vmatpush1.msra.mxu0 %v2798
        %2831 = vmatprep.subr.mxu0 0.0
        %2832 = vmatpush1.msra.mxu0 %v2797
        %2833 = vmatprep.subr.mxu0 0.0
        %2834 = vmatpush1.msra.mxu0 %v2796
        %2835 = vmatprep.subr.mxu0 0.0
        %2836 = vmatpush1.msra.mxu0 %v2795
        %2837 = vmatprep.subr.mxu0 0.0
        %2838 = vmatpush1.msra.mxu0 %v2794
        %2839 = vmatprep.subr.mxu0 0.0
        %2840 = vmatpush1.msra.mxu0 %v2793
        %2841 = vmatprep.subr.mxu0 0.0
        %2842 = vmatpush2.msra.mxu0 0.0
        %2843 = vmatprep.subr.mxu0 0.0
        %2844 = vmatpush2.msra.mxu0 0.0
        %2845 = vmatprep.subr.mxu0 0.0
        %2846 = vmatpush2.msra.mxu0 0.0
        %2847 = vmatprep.subr.mxu0 0.0
        %2848 = vmatpush2.msra.mxu0 0.0
        %2849 = vmatprep.subr.mxu0 0.0
        %2850 = vmatpush2.msra.mxu0 0.0
        %2851 = vmatprep.subr.mxu0 0.0
        %2852 = vmatpush2.msra.mxu0 0.0
        %2853 = vmatprep.subr.mxu0 0.0
        %2854 = vmatpush2.msra.mxu0 0.0
        %2855 = vmatprep.subr.mxu0 0.0
        %2856 = vmatpush2.msra.mxu0 0.0
        %2857 = vmatprep.subr.mxu0 0.0
        %2858 = vmatpush2.msra.mxu0 0.0
        %2859 = vmatprep.subr.mxu0 0.0
        %2860 = vmatpush2.msra.mxu0 0.0
        %2861 = vmatprep.subr.mxu0 0.0
        %2862 = vmatpush2.msra.mxu0 0.0
        %2863 = vmatprep.subr.mxu0 0.0
        %2864 = vmatpush2.msra.mxu0 0.0
        %2865 = vmatprep.subr.mxu0 0.0
        %2866 = vmatpush2.msra.mxu0 0.0
        %2867 = vmatprep.subr.mxu0 0.0
        %2868 = vmatpush2.msra.mxu0 0.0
        %2869 = vmatprep.subr.mxu0 0.0
        %2870 = vmatpush2.msra.mxu0 0.0
        %2871 = vmatprep.subr.mxu0 0.0
        %2872 = vmatpush2.msra.mxu0 0.0
        %2873 = vmatprep.mubr.f32.mxu0 0.0
        %2874 = vmatmul.mubr.f32.gmra.mxu0 %v1968
        %v2875 = vpop.f32.mrf.mxu0
        %v2876 = vadd.f32 0.0, %v2875
        %v2877 = vpop.f32.mrf.mxu0
        %2878 = vmatprep.mubr.f32.mxu0 0.0
        %2879 = vmatmul.mubr.f32.gmra.mxu0 %v1971
        %v2880 = vpop.f32.mrf.mxu0
        %v2881 = vadd.f32 0.0, %v2880
        %v2882 = vpop.f32.mrf.mxu0
        %2883 = vmatprep.mubr.f32.mxu0 0.0
        %2884 = vmatmul.mubr.f32.gmra.mxu0 %v1974
        %v2885 = vpop.f32.mrf.mxu0
        %v2886 = vadd.f32 0.0, %v2885
        %v2887 = vpop.f32.mrf.mxu0
        %2888 = vmatprep.mubr.f32.mxu0 0.0
        %2889 = vmatmul.mubr.f32.gmra.mxu0 %v1977
        %v2890 = vpop.f32.mrf.mxu0
        %v2891 = vadd.f32 0.0, %v2890
        %v2892 = vpop.f32.mrf.mxu0
        %2893 = vmatprep.mubr.f32.mxu0 0.0
        %2894 = vmatmul.mubr.f32.gmra.mxu0 %v1980
        %v2895 = vpop.f32.mrf.mxu0
        %v2896 = vadd.f32 0.0, %v2895
        %v2897 = vpop.f32.mrf.mxu0
        %2898 = vmatprep.mubr.f32.mxu0 0.0
        %2899 = vmatmul.mubr.f32.gmra.mxu0 %v1983
        %v2900 = vpop.f32.mrf.mxu0
        %v2901 = vadd.f32 0.0, %v2900
        %v2902 = vpop.f32.mrf.mxu0
        %2903 = vmatprep.mubr.f32.mxu0 0.0
        %2904 = vmatmul.mubr.f32.gmra.mxu0 %v2390
        %v2905 = vpop.f32.mrf.mxu0
        %v2906 = vadd.f32 0.0, %v2905
        %v2907 = vpop.f32.mrf.mxu0
        %2908 = vmatprep.mubr.f32.mxu0 0.0
        %2909 = vmatmul.mubr.f32.gmra.mxu0 %v2790
        %v2910 = vpop.f32.mrf.mxu0
        %v2911 = vadd.f32 0.0, %v2910
        %v2912 = vpop.f32.mrf.mxu0
        %2913 = vdwg.mxu0
        %v2914 = vadd.f32 %v2780, %v2876
        %v2915 = vadd.f32 %v2781, %v2881
        %v2916 = vadd.f32 %v2782, %v2886
        %v2917 = vadd.f32 %v2783, %v2891
        %v2918 = vadd.f32 %v2784, %v2896
        %v2919 = vadd.f32 %v2785, %v2901
        %v2920 = vadd.f32 %v2786, %v2906
        %v2921 = vadd.f32 %v2787, %v2911
        %v2922 = vld [vmem:[%s5] sm:$0x1]
        %v2924 = vlaneseq
        %v2925 = vshrl.u32 %v2924, 7
        %v2926 = vsub.s32 0, %v2925
        %v2927 = vrot.slane %v2922, %v2926
        %v2929 = vmul.f32 %v2914, %v2927
        %v2930 = vmul.f32 %v2915, %v2927
        %v2931 = vmul.f32 %v2916, %v2927
        %v2932 = vmul.f32 %v2917, %v2927
        %v2933 = vmul.f32 %v2918, %v2927
        %v2934 = vmul.f32 %v2919, %v2927
        %v2935 = vmul.f32 %v2920, %v2927
        %v2936 = vmul.f32 %v2921, %v2927
        %v2937 = vld [vmem:[%s6] sm:$0x1]
        %v2939 = vlaneseq
        %v2940 = vshrl.u32 %v2939, 7
        %v2941 = vsub.s32 0, %v2940
        %v2942 = vrot.slane %v2937, %v2941
        %v2944 = vadd.f32 %v2929, %v2942
        %v2945 = vadd.f32 %v2930, %v2942
        %v2946 = vadd.f32 %v2931, %v2942
        %v2947 = vadd.f32 %v2932, %v2942
        %v2948 = vadd.f32 %v2933, %v2942
        %v2949 = vadd.f32 %v2934, %v2942
        %v2950 = vadd.f32 %v2935, %v2942
        %v2951 = vadd.f32 %v2936, %v2942
        %v2952 = vadd.f32 %v2944, %v365
        %v2953 = vadd.f32 %v2945, %v368
        %v2954 = vadd.f32 %v2946, %v371
        %v2955 = vadd.f32 %v2947, %v374
        %v2956 = vadd.f32 %v2948, %v377
        %v2957 = vadd.f32 %v2949, %v380
        %v2958 = vadd.f32 %v2950, %v383
        %v2959 = vadd.f32 %v2951, %v916
        %v2960 = vmax.f32 %v2952, 0.0
        %v2961 = vmax.f32 %v2953, 0.0
        %v2962 = vmax.f32 %v2954, 0.0
        %v2963 = vmax.f32 %v2955, 0.0
        %v2964 = vmax.f32 %v2956, 0.0
        %v2965 = vmax.f32 %v2957, 0.0
        %v2966 = vmax.f32 %v2958, 0.0
        %v2967 = vmax.f32 %v2959, 0.0
        %2968 = vst [vmem:[%s301] sm:$0xff] %v2960
        %2969 = vst [vmem:[%s301 + $0x8] sm:$0xff] %v2961
        %2970 = vst [vmem:[%s301 + $0x10] sm:$0xff] %v2962
        %2971 = vst [vmem:[%s301 + $0x18] sm:$0xff] %v2963
        %2972 = vst [vmem:[%s301 + $0x20] sm:$0xff] %v2964
        %2973 = vst [vmem:[%s301 + $0x28] sm:$0xff] %v2965
        %2974 = vst [vmem:[%s301 + $0x30] sm:$0xff] %v2966
        %2975 = vst [vmem:[%s301 + $0x38] sm:$0xff] %v2967
        %s2976 = sand.u32 %s183, 1
        %s2977 = scalar_lea.sflag [#allocation5], %s2976
        %s2978 = sand.u32 %s183, 1
        %s2979 = smul.addr %s2978, 64
        %s2980 = scalar_lea.vmem [#allocation8], %s2979
        // Predicated region
        $region57: #{tpu_custom_call.1} parent=47 // pred_check
          %p2981 = pneg %p193
        $region58: #{tpu_custom_call.1} parent=47 // pred_check_branch
          %2983 = sbr.rel (%p2981) target = $region60
        $region59: #{tpu_custom_call.1} parent=47 // pred_region
          %s2985 = ssub.s32 1024, 1024
          %2986 = vsyncadd %s2977, %s2985
          %s2987 = smul.addr %s23, 8
          %s2988 = smul.addr %s2987, 128
          %s2989 = scalar_lea.hbm %s7, %s2988
          %s2990 = sshll.u32 %s2980, 4
          %s2991 = int_to_ptr.vmem [resolvable:$true] %s2990
          %2996 = dma.vmem_to_hbm [thread:$0]  %s2991, 1024, %s2989, %s2977, 128, 128, 8
        $region60: #{tpu_custom_call.1} parent=47 // pred_fallthru
          _
      $region48: #{tpu_custom_call.1} parent=5 // pred_fallthru
        _
      %p2997 = scmp.le.s32.totalorder 2, %s18
      // Predicated region
      $region61: #{tpu_custom_call.1} parent=5 // pred_check
        %p2998 = pneg %p2997
      $region62: #{tpu_custom_call.1} parent=5 // pred_check_branch
        %3000 = sbr.rel (%p2998) target = $region64
      $region63: #{tpu_custom_call.1} parent=5 // pred_region
        %s3001 = ssub.s32 %s18, 2
        // Predicated region
        $region65: #{tpu_custom_call.1} parent=63 // pred_check
          %p3002 = pneg %p199
        $region66: #{tpu_custom_call.1} parent=63 // pred_check_branch
          %3004 = sbr.rel (%p3002) target = $region68
        $region67: #{tpu_custom_call.1} parent=63 // pred_region
          %s3005 = sand.u32 %s184, 1
          %s3006 = scalar_lea.sflag [#allocation5], %s3005
          %s3007 = sand.u32 %s184, 1
          %s3008 = smul.addr %s3007, 64
          %s3009 = scalar_lea.vmem [#allocation8], %s3008
          %3010 = dma.done %s3006, 1024
        $region68: #{tpu_custom_call.1} parent=63 // pred_fallthru
          _
      $region64: #{tpu_custom_call.1} parent=5 // pred_fallthru
        _
    $region6: #{tpu_custom_call.1} parent=1 // loop_footer
      %s22 = sadd.s32 1, %s18
    $region7: #{tpu_custom_call.1} parent=1 // loop_footer_branch
      %17 = sbr.rel target = $region3
    $region8: #{tpu_custom_call.1} parent=1 // loop_exit
      _
    %3011 = vsyncpa [#allocation4], 1
    %s3012 = scalar_lea.sflag [#allocation4], 1
    %3013 = vsyncpa %s3012, 1
    %3014 = vsyncpa [#allocation7], 1
    %3015 = vsyncpa [#allocation5], 1
    %s3016 = scalar_lea.sflag [#allocation5], 1
    %3017 = vsyncpa %s3016, 1

</llo_original>
